<compile_context>
chip_gen: v7x
topology: tpu7x:2x2x1
jax: 0.10.0
libtpu: 0.0.40
codegen_flags: <defaults>
</compile_context>

<pallas_src>
import math
import numpy as np
import jax
import jax.numpy as jnp
from jax import lax
from jax.experimental import pallas as pl
from jax.experimental.pallas import tpu as pltpu

# --- module "hyper-parameters" (deterministic, set in-script) -----------------
GLOSSY_SLOPE = 0.5
MIN_ROUGHNESS = 0.04
MAX_ROUGHNESS = 1.0
INV_PI = 1.0 / math.pi
NORM_EPS = 1e-12          # F.normalize eps
NORM_EPS_SQ = NORM_EPS * NORM_EPS
NOL_EPS = 1e-5
# 0.5 (Smith vis) * 1/pi (GGX) * glossy_slope folded into one per-ray constant
GD_CONST = 0.5 * INV_PI * GLOSSY_SLOPE


def _fast_recip(x):
    """EUP approximate reciprocal + one Newton-Raphson step (~f32 accuracy).

    Offloads the long VALU divide sequence to the (otherwise idle) EUP slot;
    the Newton step squares the approximation error, keeping numerics tight.
    """
    r = pl.reciprocal(x, approx=True)
    return r * (2.0 - x * r)


def _microfacet_kernel(light_ref, par_ref, diff_ref, glos_ref):
    # light_ref: (3, tn, tl) channel planes of light directions
    lx = light_ref[0]
    ly = light_ref[1]
    lz = light_ref[2]

    # par_ref: (tn, 16) packed per-ray data
    #   cols 0-2 view dir, 3-5 normal, 6 roughness, 7-9 f0, 10-12 lambert
    p = par_ref[...]
    vx, vy, vz = p[:, 0:1], p[:, 1:2], p[:, 2:3]
    nx, ny, nz = p[:, 3:4], p[:, 4:5], p[:, 5:6]
    rough = p[:, 6:7]

    # --- normalize directions (F.normalize: x / max(||x||, eps)) -------------
    l_inv = lax.rsqrt(jnp.maximum(lx * lx + ly * ly + lz * lz, NORM_EPS_SQ))
    lx, ly, lz = lx * l_inv, ly * l_inv, lz * l_inv

    v_inv = lax.rsqrt(jnp.maximum(vx * vx + vy * vy + vz * vz, NORM_EPS_SQ))
    vx, vy, vz = vx * v_inv, vy * v_inv, vz * v_inv

    n_inv = lax.rsqrt(jnp.maximum(nx * nx + ny * ny + nz * nz, NORM_EPS_SQ))
    nx, ny, nz = nx * n_inv, ny * n_inv, nz * n_inv

    # half vector h = normalize(l + v)
    hx, hy, hz = lx + vx, ly + vy, lz + vz
    h_inv = lax.rsqrt(jnp.maximum(hx * hx + hy * hy + hz * hz, NORM_EPS_SQ))
    hx, hy, hz = hx * h_inv, hy * h_inv, hz * h_inv

    # --- dot products ---------------------------------------------------------
    NoL = jnp.abs(lx * nx + ly * ny + lz * nz) + NOL_EPS          # (tn, tl)
    NoV = jnp.maximum(vx * nx + vy * ny + vz * nz, 0.0)           # (tn, 1)
    NoH = jnp.maximum(hx * nx + hy * ny + hz * nz, 0.0)           # (tn, tl)
    LoH = jnp.maximum(lx * hx + ly * hy + lz * hz, 0.0)           # (tn, tl)

    # --- roughness -> alpha (perceptual roughness squared), per-ray constants -
    alpha = jnp.clip(rough, MIN_ROUGHNESS, MAX_ROUGHNESS)
    alpha = alpha * alpha                                          # (tn, 1)
    a2 = alpha * alpha
    one_m_a2 = 1.0 - a2
    c_ray = GD_CONST * a2                                          # (tn, 1)

    # --- GGX dist * Smith vis * glossy_slope, merged into ONE reciprocal ------
    # slope_gd = glossy_slope * geom * dist
    #          = (0.5/pi * glossy_slope * alpha^2) / (denom_d^2 * (ggx_v+ggx_l))
    a = NoH * alpha
    denom_d = 1.0 - NoH * NoH + a * a                              # (tn, tl)
    ggx_v = NoL * jnp.sqrt(NoV * NoV * one_m_a2 + a2)
    ggx_l = NoV * jnp.sqrt(NoL * NoL * one_m_a2 + a2)
    slope_gd = c_ray * _fast_recip(denom_d * denom_d * (ggx_v + ggx_l))

    # --- Schlick Fresnel, split via the identity 1-fres = (1-f0)*(1-fpow) -----
    x = 1.0 - LoH
    x2 = x * x
    fpow = x2 * x2 * x                                             # (1-LoH)^5
    one_m_fpow = 1.0 - fpow                                        # (tn, tl)
    t = fpow * slope_gd                                            # (tn, tl)
    for c in range(3):
        f0c = p[:, 7 + c:8 + c]                                    # (tn, 1)
        omf0c = 1.0 - f0c                                          # (tn, 1)
        ldc = p[:, 10 + c:11 + c] * omf0c                          # lam*(1-f0)
        # glossy = fres * slope_gd = f0*slope_gd + (1-f0)*fpow*slope_gd
        glos_ref[c, :, :] = (f0c * slope_gd + omf0c * t).astype(glos_ref.dtype)
        # diffuse = (1-fres) * lam = (1-f0)*(1-fpow) * lam
        diff_ref[c, :, :] = (ldc * one_m_fpow).astype(diff_ref.dtype)


def _round_up(x, m):
    return ((x + m - 1) // m) * m


def _choose_tiles(N, L, tn_req, tl_req, row_align=8, target_steps=8,
                  vmem_budget=12 * 1024 * 1024):
    """Row tile: multiple of row_align, sized for ~target_steps row-grid steps
    (v7x megacore sharding + DMA/compute overlap, no ragged-N over-padding).
    L tile: multiple of 128 (lane-dense stores), shrunk so the double-buffered
    footprint (~72*tn*tl bytes) stays well under every generation's scoped
    VMEM default — so vmem_limit_bytes never needs touching."""
    tn = min(_round_up(max(tn_req, row_align), row_align),
             _round_up(max(-(-N // target_steps), 1), row_align))
    tn = max(tn, row_align)
    if L % 128 == 0:
        tl = min(L, max(128, (min(tl_req, L) // 128) * 128))
    else:
        # TODO(synk): pad L to a multiple of 128 upstream so stores stay
        # lane-dense; falling back to the full (possibly lane-sparse) L here.
        tl = L
    while 72 * tn * tl > vmem_budget and tl % 256 == 0:
        tl //= 2
    while 72 * tn * tl > vmem_budget and tn > row_align:
        tn = max(row_align, _round_up(tn // 2, row_align))
    return tn, tl


def microfacet_forward(light_dir, view_dir, normals, albedo, roughness,
                       specular, metallic, *, tn=256, tl=512,
                       channel_major=True, light_channel_major=False,
                       out_dtype=jnp.float32):
    """Returns (diffuse_term, glossy_term).

    channel_major=True  -> (3, N, L) planes each (default; no post-kernel
                           transpose / extra HBM pass).
    channel_major=False -> (N, L, 3) each, matching the PyTorch module layout.
    light_channel_major -> light_dir is already (3, N, L); skips the
                           wrapper-side moveaxis (one fewer HBM layout pass).
    out_dtype           -> keep f32 math, optionally cast outputs to bf16
                           (halves the dominant output write traffic on v5e/v6e).
    """
    f32 = jnp.float32
    if light_channel_major:
        light = light_dir.astype(f32)                               # (3, N, L)
        _, N, L = light.shape
    else:
        N, L, _ = light_dir.shape
        light = jnp.moveaxis(light_dir.astype(f32), -1, 0)          # (3, N, L)

    # --- glue (parameter combination, layout plumbing) ------------------------
    lam = (albedo / np.pi).astype(f32)                                  # (N, 3)
    f0 = (specular * (1.0 - metallic) + albedo * metallic).astype(f32)  # (N, 3)

    # one packed per-ray array -> a single small DMA per grid step
    params = jnp.concatenate(
        [view_dir.astype(f32), normals.astype(f32), roughness.astype(f32),
         f0, lam, jnp.zeros((N, 3), f32)], axis=-1)                     # (N, 16)

    out_itemsize = np.dtype(out_dtype).itemsize
    row_align = 8 if out_itemsize >= 4 else 16       # sub-32-bit packs sublanes
    tn, tl = _choose_tiles(N, L, tn, tl, row_align=row_align)

    # No padding: the row grid may not divide N; Pallas handles the partial
    # last block (padded input rows are garbage but their outputs are dropped).
    grid = (pl.cdiv(N, tn), pl.cdiv(L, tl))

    light_spec = pl.BlockSpec((3, tn, tl), lambda i, j: (0, i, j))
    par_spec = pl.BlockSpec((tn, 16), lambda i, j: (i, 0))
    out_spec = pl.BlockSpec((3, tn, tl), lambda i, j: (0, i, j))

    cost = pl.CostEstimate(
        flops=int(64 * N * L),
        transcendentals=int(5 * N * L),
        bytes_accessed=int(4 * 3 * N * L + 2 * 3 * out_itemsize * N * L + 64 * N),
    )

    diff, glos = pl.pallas_call(
        _microfacet_kernel,
        grid=grid,
        in_specs=[light_spec, par_spec],
        out_specs=[out_spec, out_spec],
        out_shape=[jax.ShapeDtypeStruct((3, N, L), out_dtype),
                   jax.ShapeDtypeStruct((3, N, L), out_dtype)],
        compiler_params=pltpu.CompilerParams(
            dimension_semantics=("parallel", "parallel")),
        cost_estimate=cost,
    )(light, params)

    if channel_major:
        # zero extra HBM traffic: consumer takes channel-major planes directly
        return diff, glos

    # TODO(synk): an in-kernel channel interleave into a lane-dense (tn, 3*tl)
    # block would remove this XLA transpose, but the required lane-merge
    # reshape is not reliably supported by Mosaic; prefer channel_major=True.
    return jnp.transpose(diff, (1, 2, 0)), jnp.transpose(glos, (1, 2, 0))


# --- pure-JAX reference (mirrors the PyTorch forward) -------------------------
def microfacet_reference(light_dir, view_dir, normals, albedo, roughness,
                         specular, metallic):
    def normalize(x):
        return x / jnp.maximum(jnp.linalg.norm(x, axis=-1, keepdims=True), NORM_EPS)

    lam = albedo / np.pi
    l = normalize(light_dir)
    v = normalize(view_dir)
    n = normalize(normals)
    h = normalize(l + v[..., None, :])
    NoL = jnp.abs((l * n[..., None, :]).sum(-1)) + NOL_EPS
    NoV = jnp.maximum((v * n).sum(-1), 0.0)[..., None]
    NoH = jnp.maximum((h * n[..., None, :]).sum(-1), 0.0)
    LoH = jnp.maximum((l * h).sum(-1), 0.0)
    alpha = jnp.clip(roughness, MIN_ROUGHNESS, MAX_ROUGHNESS) ** 2
    a = NoH * alpha
    k = alpha / (1.0 - NoH * NoH + a * a)
    dist = k * k * INV_PI
    a2 = alpha * alpha
    ggx_v = NoL * jnp.sqrt(NoV * NoV * (1.0 - a2) + a2)
    ggx_l = NoV * jnp.sqrt(NoL * NoL * (1.0 - a2) + a2)
    geom = 0.5 / (ggx_v + ggx_l)
    f0 = specular * (1.0 - metallic) + albedo * metallic
    f0 = f0[..., None, :]
    fres = f0 + (1.0 - f0) * (1.0 - LoH[..., None]) ** 5
    micro = fres * geom[..., None] * dist[..., None]
    kD = 1.0 - fres
    diffuse = kD * jnp.broadcast_to(lam[..., None, :], micro.shape)
    glossy = GLOSSY_SLOPE * micro
    return diffuse, glossy


def _random_inputs(keys, N, L):
    light_dir = jax.random.normal(keys[0], (N, L, 3), dtype=jnp.float32)
    view_dir = jax.random.normal(keys[1], (N, 3), dtype=jnp.float32)
    normals = jax.random.normal(keys[2], (N, 3), dtype=jnp.float32)
    albedo = jax.random.uniform(keys[3], (N, 3), dtype=jnp.float32)
    roughness = jax.random.uniform(keys[4], (N, 1), dtype=jnp.float32)
    specular = 0.1 * jax.random.uniform(keys[5], (N, 1), dtype=jnp.float32)
    metallic = jax.random.uniform(keys[6], (N, 1), dtype=jnp.float32)
    return light_dir, view_dir, normals, albedo, roughness, specular, metallic


if __name__ == "__main__":
    key = jax.random.PRNGKey(0)
    keys = jax.random.split(key, 21)

    # Tolerance note: a handful of (ray,light) samples have NoH ~ 1 with alpha
    # at the 0.04 clamp, where 1 - NoH^2 cancels catastrophically; a 1-ulp
    # difference in normalization (rsqrt vs sqrt+divide) is amplified there to
    # a few 0.1% relative.  rtol=1e-2/atol=2e-5 bounds that conditioning
    # artifact with margin while still catching any real algebra error.
    RTOL, ATOL = 1e-2, 2e-5

    # --- case 1: default channel-major output, (N, L, 3) light input ----------
    N, L = 512, 256
    args = _random_inputs(keys[:7], N, L)
    diffuse, glossy = microfacet_forward(*args)                    # (3, N, L)
    jax.block_until_ready((diffuse, glossy))
    d_ref, g_ref = microfacet_reference(*args)
    assert diffuse.shape == (3, N, L) and glossy.shape == (3, N, L)
    np.testing.assert_allclose(np.asarray(diffuse),
                               np.moveaxis(np.asarray(d_ref), -1, 0),
                               rtol=RTOL, atol=ATOL)
    np.testing.assert_allclose(np.asarray(glossy),
                               np.moveaxis(np.asarray(g_ref), -1, 0),
                               rtol=RTOL, atol=ATOL)

    # --- case 2: ragged N (partial last row-block), PyTorch-layout output,
    #             producer-supplied channel-major light (no wrapper moveaxis) --
    N2, L2 = 100, 128
    args2 = _random_inputs(keys[7:14], N2, L2)
    light_cm = jnp.moveaxis(args2[0], -1, 0)                       # (3, N2, L2)
    d2, g2 = microfacet_forward(light_cm, *args2[1:],
                                channel_major=False, light_channel_major=True)
    jax.block_until_ready((d2, g2))
    d2_ref, g2_ref = microfacet_reference(*args2)
    assert d2.shape == (N2, L2, 3) and g2.shape == (N2, L2, 3)
    np.testing.assert_allclose(np.asarray(d2), np.asarray(d2_ref),
                               rtol=RTOL, atol=ATOL)
    np.testing.assert_allclose(np.asarray(g2), np.asarray(g2_ref),
                               rtol=RTOL, atol=ATOL)

    # --- case 3: bf16 output planes (math stays f32) ---------------------------
    N3, L3 = 96, 128
    args3 = _random_inputs(keys[14:21], N3, L3)
    d3, g3 = microfacet_forward(*args3, out_dtype=jnp.bfloat16)
    jax.block_until_ready((d3, g3))
    d3_ref, g3_ref = microfacet_reference(*args3)
    assert d3.shape == (3, N3, L3) and d3.dtype == jnp.bfloat16
    np.testing.assert_allclose(np.asarray(d3, dtype=np.float32),
                               np.moveaxis(np.asarray(d3_ref), -1, 0),
                               rtol=4e-2, atol=1e-3)
    np.testing.assert_allclose(np.asarray(g3, dtype=np.float32),
                               np.moveaxis(np.asarray(g3_ref), -1, 0),
                               rtol=4e-2, atol=1e-3)

    print("KERNEL_OK")
</pallas_src>

<mosaic_0001>
module attributes {stable_mosaic.version = 11 : i64} {
  func.func @_microfacet_kernel(%arg0: i32, %arg1: i32, %arg2: memref<3x64x256xf32, #tpu.memory_space<vmem>>, %arg3: memref<64x16xf32, #tpu.memory_space<vmem>>, %arg4: memref<3x64x256xf32, #tpu.memory_space<vmem>>, %arg5: memref<3x64x256xf32, #tpu.memory_space<vmem>>) attributes {dimension_semantics = [#tpu.dimension_semantics<parallel>, #tpu.dimension_semantics<parallel>], iteration_bounds = array<i64: 8, 1>, scalar_prefetch = 0 : i64, scratch_operands = 0 : i64, tpu.core_type = #tpu.core_type<tc>, window_params = [{transform_indices = @transform_0, window_bounds = array<i64: 3, 64, 256>}, {transform_indices = @transform_1, window_bounds = array<i64: 64, 16>}, {transform_indices = @transform_2, window_bounds = array<i64: 3, 64, 256>}, {transform_indices = @transform_3, window_bounds = array<i64: 3, 64, 256>}]} {
    %c0 = arith.constant 0 : index
    %c0_0 = arith.constant 0 : index
    %c0_1 = arith.constant 0 : index
    %0 = vector.load %arg2[%c0, %c0_0, %c0_1] : memref<3x64x256xf32, #tpu.memory_space<vmem>>, vector<1x64x256xf32>
    %1 = vector.shape_cast %0 : vector<1x64x256xf32> to vector<64x256xf32>
    %c1 = arith.constant 1 : index
    %c0_2 = arith.constant 0 : index
    %c0_3 = arith.constant 0 : index
    %2 = vector.load %arg2[%c1, %c0_2, %c0_3] : memref<3x64x256xf32, #tpu.memory_space<vmem>>, vector<1x64x256xf32>
    %3 = vector.shape_cast %2 : vector<1x64x256xf32> to vector<64x256xf32>
    %c2 = arith.constant 2 : index
    %c0_4 = arith.constant 0 : index
    %c0_5 = arith.constant 0 : index
    %4 = vector.load %arg2[%c2, %c0_4, %c0_5] : memref<3x64x256xf32, #tpu.memory_space<vmem>>, vector<1x64x256xf32>
    %5 = vector.shape_cast %4 : vector<1x64x256xf32> to vector<64x256xf32>
    %c0_6 = arith.constant 0 : index
    %c0_7 = arith.constant 0 : index
    %6 = vector.load %arg3[%c0_6, %c0_7] : memref<64x16xf32, #tpu.memory_space<vmem>>, vector<64x16xf32>
    %7 = vector.extract_strided_slice %6 {offsets = [0, 0], sizes = [64, 1], strides = [1, 1]} : vector<64x16xf32> to vector<64x1xf32>
    %8 = vector.extract_strided_slice %6 {offsets = [0, 1], sizes = [64, 1], strides = [1, 1]} : vector<64x16xf32> to vector<64x1xf32>
    %9 = vector.extract_strided_slice %6 {offsets = [0, 2], sizes = [64, 1], strides = [1, 1]} : vector<64x16xf32> to vector<64x1xf32>
    %10 = vector.extract_strided_slice %6 {offsets = [0, 3], sizes = [64, 1], strides = [1, 1]} : vector<64x16xf32> to vector<64x1xf32>
    %11 = vector.extract_strided_slice %6 {offsets = [0, 4], sizes = [64, 1], strides = [1, 1]} : vector<64x16xf32> to vector<64x1xf32>
    %12 = vector.extract_strided_slice %6 {offsets = [0, 5], sizes = [64, 1], strides = [1, 1]} : vector<64x16xf32> to vector<64x1xf32>
    %13 = vector.extract_strided_slice %6 {offsets = [0, 6], sizes = [64, 1], strides = [1, 1]} : vector<64x16xf32> to vector<64x1xf32>
    %14 = arith.mulf %1, %1 : vector<64x256xf32>
    %15 = arith.mulf %3, %3 : vector<64x256xf32>
    %16 = arith.addf %14, %15 : vector<64x256xf32>
    %17 = arith.mulf %5, %5 : vector<64x256xf32>
    %18 = arith.addf %16, %17 : vector<64x256xf32>
    %cst = arith.constant 1.000000e-24 : f32
    %19 = vector.broadcast %cst : f32 to vector<64x256xf32>
    %20 = arith.maximumf %18, %19 : vector<64x256xf32>
    %21 = math.rsqrt %20 : vector<64x256xf32>
    %22 = arith.mulf %1, %21 : vector<64x256xf32>
    %23 = arith.mulf %3, %21 : vector<64x256xf32>
    %24 = arith.mulf %5, %21 : vector<64x256xf32>
    %25 = arith.mulf %7, %7 : vector<64x1xf32>
    %26 = arith.mulf %8, %8 : vector<64x1xf32>
    %27 = arith.addf %25, %26 : vector<64x1xf32>
    %28 = arith.mulf %9, %9 : vector<64x1xf32>
    %29 = arith.addf %27, %28 : vector<64x1xf32>
    %cst_8 = arith.constant 1.000000e-24 : f32
    %30 = vector.broadcast %cst_8 : f32 to vector<64x1xf32>
    %31 = arith.maximumf %29, %30 : vector<64x1xf32>
    %32 = math.rsqrt %31 : vector<64x1xf32>
    %33 = arith.mulf %7, %32 : vector<64x1xf32>
    %34 = arith.mulf %8, %32 : vector<64x1xf32>
    %35 = arith.mulf %9, %32 : vector<64x1xf32>
    %36 = arith.mulf %10, %10 : vector<64x1xf32>
    %37 = arith.mulf %11, %11 : vector<64x1xf32>
    %38 = arith.addf %36, %37 : vector<64x1xf32>
    %39 = arith.mulf %12, %12 : vector<64x1xf32>
    %40 = arith.addf %38, %39 : vector<64x1xf32>
    %cst_9 = arith.constant 1.000000e-24 : f32
    %41 = vector.broadcast %cst_9 : f32 to vector<64x1xf32>
    %42 = arith.maximumf %40, %41 : vector<64x1xf32>
    %43 = math.rsqrt %42 : vector<64x1xf32>
    %44 = arith.mulf %10, %43 : vector<64x1xf32>
    %45 = arith.mulf %11, %43 : vector<64x1xf32>
    %46 = arith.mulf %12, %43 : vector<64x1xf32>
    %47 = vector.broadcast %33 : vector<64x1xf32> to vector<64x256xf32>
    %48 = arith.addf %22, %47 : vector<64x256xf32>
    %49 = vector.broadcast %34 : vector<64x1xf32> to vector<64x256xf32>
    %50 = arith.addf %23, %49 : vector<64x256xf32>
    %51 = vector.broadcast %35 : vector<64x1xf32> to vector<64x256xf32>
    %52 = arith.addf %24, %51 : vector<64x256xf32>
    %53 = arith.mulf %48, %48 : vector<64x256xf32>
    %54 = arith.mulf %50, %50 : vector<64x256xf32>
    %55 = arith.addf %53, %54 : vector<64x256xf32>
    %56 = arith.mulf %52, %52 : vector<64x256xf32>
    %57 = arith.addf %55, %56 : vector<64x256xf32>
    %cst_10 = arith.constant 1.000000e-24 : f32
    %58 = vector.broadcast %cst_10 : f32 to vector<64x256xf32>
    %59 = arith.maximumf %57, %58 : vector<64x256xf32>
    %60 = math.rsqrt %59 : vector<64x256xf32>
    %61 = arith.mulf %48, %60 : vector<64x256xf32>
    %62 = arith.mulf %50, %60 : vector<64x256xf32>
    %63 = arith.mulf %52, %60 : vector<64x256xf32>
    %64 = vector.broadcast %44 : vector<64x1xf32> to vector<64x256xf32>
    %65 = arith.mulf %22, %64 : vector<64x256xf32>
    %66 = vector.broadcast %45 : vector<64x1xf32> to vector<64x256xf32>
    %67 = arith.mulf %23, %66 : vector<64x256xf32>
    %68 = arith.addf %65, %67 : vector<64x256xf32>
    %69 = vector.broadcast %46 : vector<64x1xf32> to vector<64x256xf32>
    %70 = arith.mulf %24, %69 : vector<64x256xf32>
    %71 = arith.addf %68, %70 : vector<64x256xf32>
    %72 = math.absf %71 : vector<64x256xf32>
    %cst_11 = arith.constant 9.99999974E-6 : f32
    %73 = vector.broadcast %cst_11 : f32 to vector<64x256xf32>
    %74 = arith.addf %72, %73 : vector<64x256xf32>
    %75 = arith.mulf %33, %44 : vector<64x1xf32>
    %76 = arith.mulf %34, %45 : vector<64x1xf32>
    %77 = arith.addf %75, %76 : vector<64x1xf32>
    %78 = arith.mulf %35, %46 : vector<64x1xf32>
    %79 = arith.addf %77, %78 : vector<64x1xf32>
    %cst_12 = arith.constant 0.000000e+00 : f32
    %80 = vector.broadcast %cst_12 : f32 to vector<64x1xf32>
    %81 = arith.maximumf %79, %80 : vector<64x1xf32>
    %82 = vector.broadcast %44 : vector<64x1xf32> to vector<64x256xf32>
    %83 = arith.mulf %61, %82 : vector<64x256xf32>
    %84 = vector.broadcast %45 : vector<64x1xf32> to vector<64x256xf32>
    %85 = arith.mulf %62, %84 : vector<64x256xf32>
    %86 = arith.addf %83, %85 : vector<64x256xf32>
    %87 = vector.broadcast %46 : vector<64x1xf32> to vector<64x256xf32>
    %88 = arith.mulf %63, %87 : vector<64x256xf32>
    %89 = arith.addf %86, %88 : vector<64x256xf32>
    %cst_13 = arith.constant 0.000000e+00 : f32
    %90 = vector.broadcast %cst_13 : f32 to vector<64x256xf32>
    %91 = arith.maximumf %89, %90 : vector<64x256xf32>
    %92 = arith.mulf %22, %61 : vector<64x256xf32>
    %93 = arith.mulf %23, %62 : vector<64x256xf32>
    %94 = arith.addf %92, %93 : vector<64x256xf32>
    %95 = arith.mulf %24, %63 : vector<64x256xf32>
    %96 = arith.addf %94, %95 : vector<64x256xf32>
    %cst_14 = arith.constant 0.000000e+00 : f32
    %97 = vector.broadcast %cst_14 : f32 to vector<64x256xf32>
    %98 = arith.maximumf %96, %97 : vector<64x256xf32>
    %cst_15 = arith.constant 4.000000e-02 : f32
    %cst_16 = arith.constant 1.000000e+00 : f32
    %99 = vector.broadcast %cst_15 : f32 to vector<64x1xf32>
    %100 = arith.maximumf %99, %13 : vector<64x1xf32>
    %101 = vector.broadcast %cst_16 : f32 to vector<64x1xf32>
    %102 = arith.minimumf %101, %100 : vector<64x1xf32>
    %103 = arith.mulf %102, %102 : vector<64x1xf32>
    %104 = arith.mulf %103, %103 : vector<64x1xf32>
    %cst_17 = arith.constant 1.000000e+00 : f32
    %105 = vector.broadcast %cst_17 : f32 to vector<64x1xf32>
    %106 = arith.subf %105, %104 : vector<64x1xf32>
    %cst_18 = arith.constant 0.0795774683 : f32
    %107 = vector.broadcast %cst_18 : f32 to vector<64x1xf32>
    %108 = arith.mulf %107, %104 : vector<64x1xf32>
    %109 = vector.broadcast %103 : vector<64x1xf32> to vector<64x256xf32>
    %110 = arith.mulf %91, %109 : vector<64x256xf32>
    %111 = arith.mulf %91, %91 : vector<64x256xf32>
    %cst_19 = arith.constant 1.000000e+00 : f32
    %112 = vector.broadcast %cst_19 : f32 to vector<64x256xf32>
    %113 = arith.subf %112, %111 : vector<64x256xf32>
    %114 = arith.mulf %110, %110 : vector<64x256xf32>
    %115 = arith.addf %113, %114 : vector<64x256xf32>
    %116 = arith.mulf %81, %81 : vector<64x1xf32>
    %117 = arith.mulf %116, %106 : vector<64x1xf32>
    %118 = arith.addf %117, %104 : vector<64x1xf32>
    %119 = math.sqrt %118 : vector<64x1xf32>
    %120 = vector.broadcast %119 : vector<64x1xf32> to vector<64x256xf32>
    %121 = arith.mulf %74, %120 : vector<64x256xf32>
    %122 = arith.mulf %74, %74 : vector<64x256xf32>
    %123 = vector.broadcast %106 : vector<64x1xf32> to vector<64x256xf32>
    %124 = arith.mulf %122, %123 : vector<64x256xf32>
    %125 = vector.broadcast %104 : vector<64x1xf32> to vector<64x256xf32>
    %126 = arith.addf %124, %125 : vector<64x256xf32>
    %127 = math.sqrt %126 : vector<64x256xf32>
    %128 = vector.broadcast %81 : vector<64x1xf32> to vector<64x256xf32>
    %129 = arith.mulf %128, %127 : vector<64x256xf32>
    %130 = arith.mulf %115, %115 : vector<64x256xf32>
    %131 = arith.addf %121, %129 : vector<64x256xf32>
    %132 = arith.mulf %130, %131 : vector<64x256xf32>
    %133 = tpu.reciprocal %132 {approx = true} : vector<64x256xf32> -> vector<64x256xf32>
    %134 = arith.mulf %132, %133 : vector<64x256xf32>
    %cst_20 = arith.constant 2.000000e+00 : f32
    %135 = vector.broadcast %cst_20 : f32 to vector<64x256xf32>
    %136 = arith.subf %135, %134 : vector<64x256xf32>
    %137 = arith.mulf %133, %136 : vector<64x256xf32>
    %138 = vector.broadcast %108 : vector<64x1xf32> to vector<64x256xf32>
    %139 = arith.mulf %138, %137 : vector<64x256xf32>
    %cst_21 = arith.constant 1.000000e+00 : f32
    %140 = vector.broadcast %cst_21 : f32 to vector<64x256xf32>
    %141 = arith.subf %140, %98 : vector<64x256xf32>
    %142 = arith.mulf %141, %141 : vector<64x256xf32>
    %143 = arith.mulf %142, %142 : vector<64x256xf32>
    %144 = arith.mulf %143, %141 : vector<64x256xf32>
    %cst_22 = arith.constant 1.000000e+00 : f32
    %145 = vector.broadcast %cst_22 : f32 to vector<64x256xf32>
    %146 = arith.subf %145, %144 : vector<64x256xf32>
    %147 = arith.mulf %144, %139 : vector<64x256xf32>
    %148 = vector.extract_strided_slice %6 {offsets = [0, 7], sizes = [64, 1], strides = [1, 1]} : vector<64x16xf32> to vector<64x1xf32>
    %cst_23 = arith.constant 1.000000e+00 : f32
    %149 = vector.broadcast %cst_23 : f32 to vector<64x1xf32>
    %150 = arith.subf %149, %148 : vector<64x1xf32>
    %151 = vector.extract_strided_slice %6 {offsets = [0, 10], sizes = [64, 1], strides = [1, 1]} : vector<64x16xf32> to vector<64x1xf32>
    %152 = arith.mulf %151, %150 : vector<64x1xf32>
    %153 = vector.broadcast %148 : vector<64x1xf32> to vector<64x256xf32>
    %154 = arith.mulf %153, %139 : vector<64x256xf32>
    %155 = vector.broadcast %150 : vector<64x1xf32> to vector<64x256xf32>
    %156 = arith.mulf %155, %147 : vector<64x256xf32>
    %157 = arith.addf %154, %156 : vector<64x256xf32>
    %c0_24 = arith.constant 0 : index
    %c0_25 = arith.constant 0 : index
    %c0_26 = arith.constant 0 : index
    %158 = vector.load %arg5[%c0_24, %c0_25, %c0_26] : memref<3x64x256xf32, #tpu.memory_space<vmem>>, vector<1x64x256xf32>
    %159 = vector.shape_cast %158 : vector<1x64x256xf32> to vector<64x256xf32>
    %160 = vector.shape_cast %157 : vector<64x256xf32> to vector<1x64x256xf32>
    tpu.vector_store %arg5[%c0_24, %c0_25, %c0_26], %160 {strides = array<i32>} : memref<3x64x256xf32, #tpu.memory_space<vmem>>, vector<1x64x256xf32>,
    %161 = vector.broadcast %152 : vector<64x1xf32> to vector<64x256xf32>
    %162 = arith.mulf %161, %146 : vector<64x256xf32>
    %c0_27 = arith.constant 0 : index
    %c0_28 = arith.constant 0 : index
    %c0_29 = arith.constant 0 : index
    %163 = vector.load %arg4[%c0_27, %c0_28, %c0_29] : memref<3x64x256xf32, #tpu.memory_space<vmem>>, vector<1x64x256xf32>
    %164 = vector.shape_cast %163 : vector<1x64x256xf32> to vector<64x256xf32>
    %165 = vector.shape_cast %162 : vector<64x256xf32> to vector<1x64x256xf32>
    tpu.vector_store %arg4[%c0_27, %c0_28, %c0_29], %165 {strides = array<i32>} : memref<3x64x256xf32, #tpu.memory_space<vmem>>, vector<1x64x256xf32>,
    %166 = vector.extract_strided_slice %6 {offsets = [0, 8], sizes = [64, 1], strides = [1, 1]} : vector<64x16xf32> to vector<64x1xf32>
    %cst_30 = arith.constant 1.000000e+00 : f32
    %167 = vector.broadcast %cst_30 : f32 to vector<64x1xf32>
    %168 = arith.subf %167, %166 : vector<64x1xf32>
    %169 = vector.extract_strided_slice %6 {offsets = [0, 11], sizes = [64, 1], strides = [1, 1]} : vector<64x16xf32> to vector<64x1xf32>
    %170 = arith.mulf %169, %168 : vector<64x1xf32>
    %171 = vector.broadcast %166 : vector<64x1xf32> to vector<64x256xf32>
    %172 = arith.mulf %171, %139 : vector<64x256xf32>
    %173 = vector.broadcast %168 : vector<64x1xf32> to vector<64x256xf32>
    %174 = arith.mulf %173, %147 : vector<64x256xf32>
    %175 = arith.addf %172, %174 : vector<64x256xf32>
    %c1_31 = arith.constant 1 : index
    %c0_32 = arith.constant 0 : index
    %c0_33 = arith.constant 0 : index
    %176 = vector.load %arg5[%c1_31, %c0_32, %c0_33] : memref<3x64x256xf32, #tpu.memory_space<vmem>>, vector<1x64x256xf32>
    %177 = vector.shape_cast %176 : vector<1x64x256xf32> to vector<64x256xf32>
    %178 = vector.shape_cast %175 : vector<64x256xf32> to vector<1x64x256xf32>
    tpu.vector_store %arg5[%c1_31, %c0_32, %c0_33], %178 {strides = array<i32>} : memref<3x64x256xf32, #tpu.memory_space<vmem>>, vector<1x64x256xf32>,
    %179 = vector.broadcast %170 : vector<64x1xf32> to vector<64x256xf32>
    %180 = arith.mulf %179, %146 : vector<64x256xf32>
    %c1_34 = arith.constant 1 : index
    %c0_35 = arith.constant 0 : index
    %c0_36 = arith.constant 0 : index
    %181 = vector.load %arg4[%c1_34, %c0_35, %c0_36] : memref<3x64x256xf32, #tpu.memory_space<vmem>>, vector<1x64x256xf32>
    %182 = vector.shape_cast %181 : vector<1x64x256xf32> to vector<64x256xf32>
    %183 = vector.shape_cast %180 : vector<64x256xf32> to vector<1x64x256xf32>
    tpu.vector_store %arg4[%c1_34, %c0_35, %c0_36], %183 {strides = array<i32>} : memref<3x64x256xf32, #tpu.memory_space<vmem>>, vector<1x64x256xf32>,
    %184 = vector.extract_strided_slice %6 {offsets = [0, 9], sizes = [64, 1], strides = [1, 1]} : vector<64x16xf32> to vector<64x1xf32>
    %cst_37 = arith.constant 1.000000e+00 : f32
    %185 = vector.broadcast %cst_37 : f32 to vector<64x1xf32>
    %186 = arith.subf %185, %184 : vector<64x1xf32>
    %187 = vector.extract_strided_slice %6 {offsets = [0, 12], sizes = [64, 1], strides = [1, 1]} : vector<64x16xf32> to vector<64x1xf32>
    %188 = arith.mulf %187, %186 : vector<64x1xf32>
    %189 = vector.broadcast %184 : vector<64x1xf32> to vector<64x256xf32>
    %190 = arith.mulf %189, %139 : vector<64x256xf32>
    %191 = vector.broadcast %186 : vector<64x1xf32> to vector<64x256xf32>
    %192 = arith.mulf %191, %147 : vector<64x256xf32>
    %193 = arith.addf %190, %192 : vector<64x256xf32>
    %c2_38 = arith.constant 2 : index
    %c0_39 = arith.constant 0 : index
    %c0_40 = arith.constant 0 : index
    %194 = vector.load %arg5[%c2_38, %c0_39, %c0_40] : memref<3x64x256xf32, #tpu.memory_space<vmem>>, vector<1x64x256xf32>
    %195 = vector.shape_cast %194 : vector<1x64x256xf32> to vector<64x256xf32>
    %196 = vector.shape_cast %193 : vector<64x256xf32> to vector<1x64x256xf32>
    tpu.vector_store %arg5[%c2_38, %c0_39, %c0_40], %196 {strides = array<i32>} : memref<3x64x256xf32, #tpu.memory_space<vmem>>, vector<1x64x256xf32>,
    %197 = vector.broadcast %188 : vector<64x1xf32> to vector<64x256xf32>
    %198 = arith.mulf %197, %146 : vector<64x256xf32>
    %c2_41 = arith.constant 2 : index
    %c0_42 = arith.constant 0 : index
    %c0_43 = arith.constant 0 : index
    %199 = vector.load %arg4[%c2_41, %c0_42, %c0_43] : memref<3x64x256xf32, #tpu.memory_space<vmem>>, vector<1x64x256xf32>
    %200 = vector.shape_cast %199 : vector<1x64x256xf32> to vector<64x256xf32>
    %201 = vector.shape_cast %198 : vector<64x256xf32> to vector<1x64x256xf32>
    tpu.vector_store %arg4[%c2_41, %c0_42, %c0_43], %201 {strides = array<i32>} : memref<3x64x256xf32, #tpu.memory_space<vmem>>, vector<1x64x256xf32>,
    return
  }
  func.func @transform_0(%arg0: i32, %arg1: i32) -> (i32, i32, i32) {
    %c0_i32 = arith.constant 0 : i32
    %c0_i32_0 = arith.constant 0 : i32
    return %c0_i32, %arg0, %arg1 : i32, i32, i32
  }
  func.func @transform_1(%arg0: i32, %arg1: i32) -> (i32, i32) {
    %c0_i32 = arith.constant 0 : i32
    %c0_i32_0 = arith.constant 0 : i32
    return %arg0, %c0_i32 : i32, i32
  }
  func.func @transform_2(%arg0: i32, %arg1: i32) -> (i32, i32, i32) {
    %c0_i32 = arith.constant 0 : i32
    %c0_i32_0 = arith.constant 0 : i32
    return %c0_i32, %arg0, %arg1 : i32, i32, i32
  }
  func.func @transform_3(%arg0: i32, %arg1: i32) -> (i32, i32, i32) {
    %c0_i32 = arith.constant 0 : i32
    %c0_i32_0 = arith.constant 0 : i32
    return %c0_i32, %arg0, %arg1 : i32, i32, i32
  }
}

</mosaic_0001>

<llo_original>
// kernel: tpu_custom_call.1
$region0: #{tpu_custom_call.1}
  #allocation0 [shape = 'u32[]', space=smem, size = 0x4, offset = 0x4, fixed_abs, tag = 'smem constant byte address 0x4 - core index']
  #allocation1 [shape = 'u32[144,128]{1,0:T(1,128)}', space=vmem, size = 0x12000, scoped, tag = 'internal scratch']
  #allocation8 [shape = 's32[]', space=sflag, size = 0x4, offset = 0, fixed_abs, tag = 'sflag constant byte address 0x0 - dummy sync flag']
  #allocation10 [shape = 's32[]', space=sflag, size = 0x4, offset = 0, fixed_abs, tag = 'sflag constant byte address 0x0 - dummy sync flag']
  #allocation12 [shape = 's32[]', space=sflag, size = 0x4, offset = 0, fixed_abs, tag = 'sflag constant byte address 0x0 - dummy sync flag']
  %s0 = inlined_call_operand.hbm [shape: f32[3,512,256], index: 0, kind: input, shape index: {}]
  %s1 = inlined_call_operand.vmem [shape: f32[512,16], index: 1, kind: input, shape index: {}]
  %s2 = inlined_call_operand.hbm [shape: f32[3,512,256], index: 2, kind: output, shape index: {0}]
  %s3 = inlined_call_operand.hbm [shape: f32[3,512,256], index: 3, kind: output, shape index: {1}]
  %4 = xla_tuple %s2, %s3
  %s5 = sld [smem:[#allocation0]]
  $region53: #{tpu_custom_call.1} parent=0
    _
  %s7 = ssub.s32 1, %s5
  %s8 = scalar_select 0, %s7, %s5
  $region1: #{tpu_custom_call.1} parent=0
    #allocation2 [shape = 'u8[393216]{0}', space=vmem, size = 0x60000, scoped, tag = 'input window, operand 0']
    #allocation3 [shape = 's32[2]{0}', space=sflag, size = 0x8, scoped, tag = 'scoped memory for tpu_custom_call.1']
    #allocation4 [shape = 's32[2]{0}', space=sflag, size = 0x8, scoped, tag = 'scoped memory for tpu_custom_call.1']
    #allocation5 [shape = 'u8[393216]{0}', space=vmem, size = 0x60000, scoped, tag = 'output window, operand 0']
    #allocation6 [shape = 'u8[393216]{0}', space=vmem, size = 0x60000, scoped, tag = 'output window, operand 1']
    #allocation7 [shape = 's32[2]{0}', space=sflag, size = 0x8, scoped, tag = 'scoped memory for tpu_custom_call.1']
    %9 = vsyncpa [#allocation3], 0
    %s10 = scalar_lea.sflag [#allocation3], 1
    %11 = vsyncpa %s10, 0
    %12 = vsyncpa [#allocation4], 0
    %s13 = scalar_lea.sflag [#allocation4], 1
    %14 = vsyncpa %s13, 0
    %15 = vsyncpa [#allocation7], 0
    %s16 = scalar_lea.sflag [#allocation7], 1
    %17 = vsyncpa %s16, 0
    loop: start=0, step=1, limit=10
    $region2: #{tpu_custom_call.1} parent=1 // loop_pre_header
      _
    $region3: #{tpu_custom_call.1} parent=1 // loop_header
      %s19 = sphi 0, %s23
      %p20 = scmp.ge.s32.totalorder %s19, 10
      %s26 = sphi 0, %s38
      %s27 = sphi 0, %s34
      %s28 = sphi 0, %s26
      %s29 = sphi 0, %s27
      %s30 = sphi 0, %s28
      %s31 = sphi 0, %s29
      %s43 = sphi 0, %s45
      %s46 = sphi 0, %s43
      %s47 = sphi 0, %s46
      %s63 = sphi 0, %s47
      %s69 = sphi 0, %s71
      %s72 = sphi 0, %s69
      %s73 = sphi 0, %s72
      %s89 = sphi 0, %s73
      %s97 = sphi 0, %s99
      %s100 = sphi 0, %s97
      %s101 = sphi 0, %s100
      %s117 = sphi 0, %s101
      %s125 = sphi 0, %s127
      %s128 = sphi 0, %s125
      %s129 = sphi 0, %s128
      %s145 = sphi 0, %s129
    $region4: #{tpu_custom_call.1} parent=1 // loop_header_branch
      %22 = sbr.rel (%p20) target = $region8
    $region5: #{tpu_custom_call.1} parent=1 // loop_body
      %s24 = ssub.s32 %s19, 1
      %s25 = ssub.s32 %s19, 2
      %s32 = sadd.s32 1, %s27
      %p33 = scmp.ge.s32.totalorder %s32, 1
      %s34 = scalar_select %p33, 0, %s32
      %s35 = sadd.s32 1, %s26
      %s36 = scalar_select %p33, %s35, %s26
      %p37 = scmp.ge.s32.totalorder %s36, 8
      %s38 = scalar_select %p37, 0, %s36
      %s39 = ssub.s32 %s26, %s38
      %s40 = ssub.s32 %s27, %s34
      %s41 = sor.u32 %s39, %s40
      %p42 = scmp.eq.s32.totalorder %s41, 0
      %s44 = sadd.s32 %s43, 1
      %s45 = scalar_select %p42, %s43, %s44
      %p48 = pneg %p42
      %p49 = scmp.eq.s32.totalorder %s19, 7
      %p50 = por %p48, %p49
      %p51 = scmp.ne.s32.totalorder %s43, %s46
      %p52 = scmp.eq.s32.totalorder %s19, 0
      %p53 = por %p51, %p52
      %p54 = scmp.ne.s32.totalorder %s43, %s46
      %p55 = scmp.eq.s32.totalorder %s24, 7
      %p56 = por %p54, %p55
      %p57 = scmp.ne.s32.totalorder %s46, %s47
      %p58 = scmp.eq.s32.totalorder %s24, 0
      %p59 = por %p57, %p58
      %p60 = scmp.ne.s32.totalorder %s46, %s47
      %p61 = scmp.eq.s32.totalorder %s25, 7
      %p62 = por %p60, %p61
      %p64 = scmp.ne.s32.totalorder %s47, %s63
      %p65 = scmp.eq.s32.totalorder %s25, 0
      %p66 = por %p64, %p65
      %s67 = ssub.s32 %s26, %s38
      %p68 = scmp.eq.s32.totalorder %s67, 0
      %s70 = sadd.s32 %s69, 1
      %s71 = scalar_select %p68, %s69, %s70
      %p74 = pneg %p68
      %p75 = scmp.eq.s32.totalorder %s19, 7
      %p76 = por %p74, %p75
      %p77 = scmp.ne.s32.totalorder %s69, %s72
      %p78 = scmp.eq.s32.totalorder %s19, 0
      %p79 = por %p77, %p78
      %p80 = scmp.ne.s32.totalorder %s69, %s72
      %p81 = scmp.eq.s32.totalorder %s24, 7
      %p82 = por %p80, %p81
      %p83 = scmp.ne.s32.totalorder %s72, %s73
      %p84 = scmp.eq.s32.totalorder %s24, 0
      %p85 = por %p83, %p84
      %p86 = scmp.ne.s32.totalorder %s72, %s73
      %p87 = scmp.eq.s32.totalorder %s25, 7
      %p88 = por %p86, %p87
      %p90 = scmp.ne.s32.totalorder %s73, %s89
      %p91 = scmp.eq.s32.totalorder %s25, 0
      %p92 = por %p90, %p91
      %s93 = ssub.s32 %s26, %s38
      %s94 = ssub.s32 %s27, %s34
      %s95 = sor.u32 %s93, %s94
      %p96 = scmp.eq.s32.totalorder %s95, 0
      %s98 = sadd.s32 %s97, 1
      %s99 = scalar_select %p96, %s97, %s98
      %p102 = pneg %p96
      %p103 = scmp.eq.s32.totalorder %s19, 7
      %p104 = por %p102, %p103
      %p105 = scmp.ne.s32.totalorder %s97, %s100
      %p106 = scmp.eq.s32.totalorder %s19, 0
      %p107 = por %p105, %p106
      %p108 = scmp.ne.s32.totalorder %s97, %s100
      %p109 = scmp.eq.s32.totalorder %s24, 7
      %p110 = por %p108, %p109
      %p111 = scmp.ne.s32.totalorder %s100, %s101
      %p112 = scmp.eq.s32.totalorder %s24, 0
      %p113 = por %p111, %p112
      %p114 = scmp.ne.s32.totalorder %s100, %s101
      %p115 = scmp.eq.s32.totalorder %s25, 7
      %p116 = por %p114, %p115
      %p118 = scmp.ne.s32.totalorder %s101, %s117
      %p119 = scmp.eq.s32.totalorder %s25, 0
      %p120 = por %p118, %p119
      %s121 = ssub.s32 %s26, %s38
      %s122 = ssub.s32 %s27, %s34
      %s123 = sor.u32 %s121, %s122
      %p124 = scmp.eq.s32.totalorder %s123, 0
      %s126 = sadd.s32 %s125, 1
      %s127 = scalar_select %p124, %s125, %s126
      %p130 = pneg %p124
      %p131 = scmp.eq.s32.totalorder %s19, 7
      %p132 = por %p130, %p131
      %p133 = scmp.ne.s32.totalorder %s125, %s128
      %p134 = scmp.eq.s32.totalorder %s19, 0
      %p135 = por %p133, %p134
      %p136 = scmp.ne.s32.totalorder %s125, %s128
      %p137 = scmp.eq.s32.totalorder %s24, 7
      %p138 = por %p136, %p137
      %p139 = scmp.ne.s32.totalorder %s128, %s129
      %p140 = scmp.eq.s32.totalorder %s24, 0
      %p141 = por %p139, %p140
      %p142 = scmp.ne.s32.totalorder %s128, %s129
      %p143 = scmp.eq.s32.totalorder %s25, 7
      %p144 = por %p142, %p143
      %p146 = scmp.ne.s32.totalorder %s129, %s145
      %p147 = scmp.eq.s32.totalorder %s25, 0
      %p148 = por %p146, %p147
      %p149 = scmp.le.s32.totalorder 1, %s19
      %p150 = scmp.lt.s32.totalorder %s19, 9
      %p151 = pnand %p149, %p150
      %p152 = pneg %p151
      // Predicated region
      $region9: #{tpu_custom_call.1} parent=5 // pred_check
        _
      $region10: #{tpu_custom_call.1} parent=5 // pred_check_branch
        %154 = sbr.rel (%p151) target = $region12
      $region11: #{tpu_custom_call.1} parent=5 // pred_region
        %s155 = ssub.s32 %s19, 1
      $region12: #{tpu_custom_call.1} parent=5 // pred_fallthru
        _
      %p156 = scmp.lt.s32.totalorder %s19, 8
      // Predicated region
      $region13: #{tpu_custom_call.1} parent=5 // pred_check
        %p157 = pneg %p156
      $region14: #{tpu_custom_call.1} parent=5 // pred_check_branch
        %159 = sbr.rel (%p157) target = $region16
      $region15: #{tpu_custom_call.1} parent=5 // pred_region
        // Predicated region
        $region17: #{tpu_custom_call.1} parent=15 // pred_check
          %p160 = pneg %p53
        $region18: #{tpu_custom_call.1} parent=15 // pred_check_branch
          %162 = sbr.rel (%p160) target = $region20
        $region19: #{tpu_custom_call.1} parent=15 // pred_region
          #allocation9 [shape = 'u32[6]{0}', space=smem, size = 0x18, scoped, tag = 'DMA stride descriptor']
          %s163 = sand.u32 %s43, 1
          %s164 = scalar_lea.sflag [#allocation3], %s163
          %s165 = sand.u32 %s43, 1
          %s166 = smul.addr %s165, 384
          %s167 = scalar_lea.vmem [#allocation2], %s166
          %s168 = smul.u32 8, %s26
          %s169 = smul.u32 2, %s27
          %s171 = ssub.s32 6144, 6144
          %172 = vsyncadd %s164, %s171
          %s173 = smul.addr %s168, 2
          %s174 = sadd.s32 %s169, %s173
          %s175 = smul.addr %s174, 128
          %s176 = scalar_lea.hbm %s0, %s175
          %s178 = sshll.u32 1, 14
          %s179 = sxor.u32 4294967295, %s178
          %s181 = sld [smem:[#allocation0]]
          %s182 = sadd.s32 2, %s181
          %s184 = sshll.u32 7, 26
          %s185 = sxor.u32 4294967295, %s184
          %s186 = sand.u32 0, %s185
          %s187 = sshll.u32 %s182, 26
          %s188 = sor.u32 %s186, %s187
          %s189 = sshll.u32 %s167, 4
          %s190 = int_to_ptr.vmem [resolvable:$true] %s189
          %196 = sst [smem:[#allocation9]] 16384
          %s197 = scalar_lea.smem [#allocation9], 1
          %198 = sst [smem:[%s197]] 2048
          %s199 = scalar_lea.smem [#allocation9], 2
          %200 = sst [smem:[%s199]] 8
          %s201 = scalar_lea.smem [#allocation9], 3
          %202 = sst [smem:[%s201]] 256
          %s203 = scalar_lea.smem [#allocation9], 4
          %204 = sst [smem:[%s203]] 256
          %s205 = scalar_lea.smem [#allocation9], 5
          %206 = sst [smem:[%s205]] 16
          %208 = dma.general %s176, 6144, %s190, %s164, [#allocation8], [#allocation9], %s188, 0
        $region20: #{tpu_custom_call.1} parent=15 // pred_fallthru
          _
        // Predicated region
        $region21: #{tpu_custom_call.1} parent=15 // pred_check
          %p209 = pneg %p79
        $region22: #{tpu_custom_call.1} parent=15 // pred_check_branch
          %211 = sbr.rel (%p209) target = $region24
        $region23: #{tpu_custom_call.1} parent=15 // pred_region
          %s212 = smul.u32 8, %s26
          %p213 = scmp.lt.s32.totalorder %s212, 63
          %s214 = scalar_select %p213, %s212, 63
          %s215 = smul.addr %s214, 8
          %s216 = scalar_lea.vmem %s1, %s215
          %s217 = smul.u32 8, %s26
        $region24: #{tpu_custom_call.1} parent=15 // pred_fallthru
          _
      $region16: #{tpu_custom_call.1} parent=5 // pred_fallthru
        _
      %p218 = scmp.le.s32.totalorder 1, %s19
      %p219 = scmp.lt.s32.totalorder %s19, 9
      %p220 = pnand %p218, %p219
      %p221 = pneg %p220
      // Predicated region
      $region25: #{tpu_custom_call.1} parent=5 // pred_check
        _
      $region26: #{tpu_custom_call.1} parent=5 // pred_check_branch
        %223 = sbr.rel (%p220) target = $region28
      $region27: #{tpu_custom_call.1} parent=5 // pred_region
        %s224 = ssub.s32 %s19, 1
        %s225 = sand.u32 %s46, 1
        %s226 = scalar_lea.sflag [#allocation3], %s225
        %s227 = sand.u32 %s46, 1
        %s228 = smul.addr %s227, 384
        %s229 = scalar_lea.vmem [#allocation2], %s228
        // Predicated region
        $region29: #{tpu_custom_call.1} parent=27 // pred_check
          %p230 = pneg %p59
        $region30: #{tpu_custom_call.1} parent=27 // pred_check_branch
          %232 = sbr.rel (%p230) target = $region32
        $region31: #{tpu_custom_call.1} parent=27 // pred_region
          %233 = dma.done %s226, 6144
        $region32: #{tpu_custom_call.1} parent=27 // pred_fallthru
          _
        %s234 = sand.u32 %s46, 1
        %s235 = scalar_lea.sflag [#allocation3], %s234
        %s236 = sand.u32 %s46, 1
        %s237 = smul.addr %s236, 384
        %s238 = scalar_lea.vmem [#allocation2], %s237
        %p239 = pneg %p59
        %p240 = pneg %p56
        %s241 = smul.u32 8, %s28
        %p242 = scmp.lt.s32.totalorder %s241, 63
        %s243 = scalar_select %p242, %s241, 63
        %s244 = smul.addr %s243, 8
        %s245 = scalar_lea.vmem %s1, %s244
        %p246 = pneg %p85
        %p247 = pneg %p82
        %p248 = pneg %p113
        %p249 = pneg %p110
        %s250 = sand.u32 %s100, 1
        %s251 = scalar_lea.sflag [#allocation4], %s250
        %s252 = sand.u32 %s100, 1
        %s253 = smul.addr %s252, 384
        %s254 = scalar_lea.vmem [#allocation5], %s253
        %p255 = pneg %p141
        %p256 = pneg %p138
        %s257 = sand.u32 %s128, 1
        %s258 = scalar_lea.sflag [#allocation7], %s257
        %s259 = sand.u32 %s128, 1
        %s260 = smul.addr %s259, 384
        %s261 = scalar_lea.vmem [#allocation6], %s260
        %s262 = smul.u32 8, %s28
        %s263 = smul.u32 2, %s29
        %s264 = smul.u32 8, %s28
        %p265 = scmp.lt.s32.totalorder %s264, 63
        %s266 = scalar_select %p265, %s264, 63
        %s267 = smul.addr %s266, 8
        %s268 = scalar_lea.vmem %s1, %s267
        %s269 = smul.u32 8, %s28
        %s270 = smul.u32 8, %s28
        %s271 = smul.u32 2, %s29
        %s272 = smul.u32 8, %s28
        %s273 = smul.u32 2, %s29
        %v274 = vld [vmem:[%s229] sm:$0xff]
        %v275 = vld [vmem:[%s229 + $0x8] sm:$0xff]
        %v276 = vld [vmem:[%s229 + $0x10] sm:$0xff]
        %v277 = vld [vmem:[%s229 + $0x18] sm:$0xff]
        %v278 = vld [vmem:[%s229 + $0x20] sm:$0xff]
        %v279 = vld [vmem:[%s229 + $0x28] sm:$0xff]
        %v280 = vld [vmem:[%s229 + $0x30] sm:$0xff]
        %v281 = vld [vmem:[%s229 + $0x38] sm:$0xff]
        %v282 = vld [vmem:[%s229 + $0x40] sm:$0xff]
        %v283 = vld [vmem:[%s229 + $0x48] sm:$0xff]
        %v284 = vld [vmem:[%s229 + $0x50] sm:$0xff]
        %v285 = vld [vmem:[%s229 + $0x58] sm:$0xff]
        %v286 = vld [vmem:[%s229 + $0x60] sm:$0xff]
        %v287 = vld [vmem:[%s229 + $0x68] sm:$0xff]
        %v288 = vld [vmem:[%s229 + $0x70] sm:$0xff]
        %v289 = vld [vmem:[%s229 + $0x78] sm:$0xff]
        %s290 = scalar_lea.vmem %s229, 128 [#allocation2]
        %v291 = vld [vmem:[%s290] sm:$0xff]
        %v292 = vld [vmem:[%s290 + $0x8] sm:$0xff]
        %v293 = vld [vmem:[%s290 + $0x10] sm:$0xff]
        %v294 = vld [vmem:[%s290 + $0x18] sm:$0xff]
        %v295 = vld [vmem:[%s290 + $0x20] sm:$0xff]
        %v296 = vld [vmem:[%s290 + $0x28] sm:$0xff]
        %v297 = vld [vmem:[%s290 + $0x30] sm:$0xff]
        %v298 = vld [vmem:[%s290 + $0x38] sm:$0xff]
        %v299 = vld [vmem:[%s290 + $0x40] sm:$0xff]
        %v300 = vld [vmem:[%s290 + $0x48] sm:$0xff]
        %v301 = vld [vmem:[%s290 + $0x50] sm:$0xff]
        %v302 = vld [vmem:[%s290 + $0x58] sm:$0xff]
        %v303 = vld [vmem:[%s290 + $0x60] sm:$0xff]
        %v304 = vld [vmem:[%s290 + $0x68] sm:$0xff]
        %v305 = vld [vmem:[%s290 + $0x70] sm:$0xff]
        %v306 = vld [vmem:[%s290 + $0x78] sm:$0xff]
        %s307 = scalar_lea.vmem %s229, 256 [#allocation2]
        %v308 = vld [vmem:[%s307] sm:$0xff]
        %v309 = vld [vmem:[%s307 + $0x8] sm:$0xff]
        %v310 = vld [vmem:[%s307 + $0x10] sm:$0xff]
        %v311 = vld [vmem:[%s307 + $0x18] sm:$0xff]
        %v312 = vld [vmem:[%s307 + $0x20] sm:$0xff]
        %v313 = vld [vmem:[%s307 + $0x28] sm:$0xff]
        %v314 = vld [vmem:[%s307 + $0x30] sm:$0xff]
        %v315 = vld [vmem:[%s307 + $0x38] sm:$0xff]
        %v316 = vld [vmem:[%s307 + $0x40] sm:$0xff]
        %v317 = vld [vmem:[%s307 + $0x48] sm:$0xff]
        %v318 = vld [vmem:[%s307 + $0x50] sm:$0xff]
        %v319 = vld [vmem:[%s307 + $0x58] sm:$0xff]
        %v320 = vld [vmem:[%s307 + $0x60] sm:$0xff]
        %v321 = vld [vmem:[%s307 + $0x68] sm:$0xff]
        %v322 = vld [vmem:[%s307 + $0x70] sm:$0xff]
        %v323 = vld [vmem:[%s307 + $0x78] sm:$0xff]
        %v324 = vld [vmem:[%s268] sm:$0xff]
        %v325 = vld [vmem:[%s268 + $0x8] sm:$0xff]
        %v326 = vld [vmem:[%s268 + $0x10] sm:$0xff]
        %v327 = vld [vmem:[%s268 + $0x18] sm:$0xff]
        %v328 = vld [vmem:[%s268 + $0x20] sm:$0xff]
        %v329 = vld [vmem:[%s268 + $0x28] sm:$0xff]
        %v330 = vld [vmem:[%s268 + $0x30] sm:$0xff]
        %v331 = vld [vmem:[%s268 + $0x38] sm:$0xff]
        %v332 = vmul.f32 %v274, %v274
        %v333 = vmul.f32 %v275, %v275
        %v334 = vmul.f32 %v276, %v276
        %v335 = vmul.f32 %v277, %v277
        %v336 = vmul.f32 %v278, %v278
        %v337 = vmul.f32 %v279, %v279
        %v338 = vmul.f32 %v280, %v280
        %v339 = vmul.f32 %v281, %v281
        %v340 = vmul.f32 %v282, %v282
        %v341 = vmul.f32 %v283, %v283
        %v342 = vmul.f32 %v284, %v284
        %v343 = vmul.f32 %v285, %v285
        %v344 = vmul.f32 %v286, %v286
        %v345 = vmul.f32 %v287, %v287
        %v346 = vmul.f32 %v288, %v288
        %v347 = vmul.f32 %v289, %v289
        %v348 = vmul.f32 %v291, %v291
        %v349 = vmul.f32 %v292, %v292
        %v350 = vmul.f32 %v293, %v293
        %v351 = vmul.f32 %v294, %v294
        %v352 = vmul.f32 %v295, %v295
        %v353 = vmul.f32 %v296, %v296
        %v354 = vmul.f32 %v297, %v297
        %v355 = vmul.f32 %v298, %v298
        %v356 = vmul.f32 %v299, %v299
        %v357 = vmul.f32 %v300, %v300
        %v358 = vmul.f32 %v301, %v301
        %v359 = vmul.f32 %v302, %v302
        %v360 = vmul.f32 %v303, %v303
        %v361 = vmul.f32 %v304, %v304
        %v362 = vmul.f32 %v305, %v305
        %v363 = vmul.f32 %v306, %v306
        %v364 = vadd.f32 %v332, %v348
        %v365 = vadd.f32 %v333, %v349
        %v366 = vadd.f32 %v334, %v350
        %v367 = vadd.f32 %v335, %v351
        %v368 = vadd.f32 %v336, %v352
        %v369 = vadd.f32 %v337, %v353
        %v370 = vadd.f32 %v338, %v354
        %v371 = vadd.f32 %v339, %v355
        %v372 = vadd.f32 %v340, %v356
        %v373 = vadd.f32 %v341, %v357
        %v374 = vadd.f32 %v342, %v358
        %v375 = vadd.f32 %v343, %v359
        %v376 = vadd.f32 %v344, %v360
        %v377 = vadd.f32 %v345, %v361
        %v378 = vadd.f32 %v346, %v362
        %v379 = vadd.f32 %v347, %v363
        %v380 = vmul.f32 %v308, %v308
        %v381 = vmul.f32 %v309, %v309
        %v382 = vmul.f32 %v310, %v310
        %v383 = vmul.f32 %v311, %v311
        %v384 = vmul.f32 %v312, %v312
        %v385 = vmul.f32 %v313, %v313
        %v386 = vmul.f32 %v314, %v314
        %v387 = vmul.f32 %v315, %v315
        %v388 = vmul.f32 %v316, %v316
        %v389 = vmul.f32 %v317, %v317
        %v390 = vmul.f32 %v318, %v318
        %v391 = vmul.f32 %v319, %v319
        %v392 = vmul.f32 %v320, %v320
        %v393 = vmul.f32 %v321, %v321
        %v394 = vmul.f32 %v322, %v322
        %v395 = vmul.f32 %v323, %v323
        %v396 = vadd.f32 %v364, %v380
        %v397 = vadd.f32 %v365, %v381
        %v398 = vadd.f32 %v366, %v382
        %v399 = vadd.f32 %v367, %v383
        %v400 = vadd.f32 %v368, %v384
        %v401 = vadd.f32 %v369, %v385
        %v402 = vadd.f32 %v370, %v386
        %v403 = vadd.f32 %v371, %v387
        %v404 = vadd.f32 %v372, %v388
        %v405 = vadd.f32 %v373, %v389
        %v406 = vadd.f32 %v374, %v390
        %v407 = vadd.f32 %v375, %v391
        %v408 = vadd.f32 %v376, %v392
        %v409 = vadd.f32 %v377, %v393
        %v410 = vadd.f32 %v378, %v394
        %v411 = vadd.f32 %v379, %v395
        %v412 = vmax.f32 %v396, 1e-24
        %v413 = vmax.f32 %v397, 1e-24
        %v414 = vmax.f32 %v398, 1e-24
        %v415 = vmax.f32 %v399, 1e-24
        %v416 = vmax.f32 %v400, 1e-24
        %v417 = vmax.f32 %v401, 1e-24
        %v418 = vmax.f32 %v402, 1e-24
        %v419 = vmax.f32 %v403, 1e-24
        %v420 = vmax.f32 %v404, 1e-24
        %v421 = vmax.f32 %v405, 1e-24
        %v422 = vmax.f32 %v406, 1e-24
        %v423 = vmax.f32 %v407, 1e-24
        %v424 = vmax.f32 %v408, 1e-24
        %v425 = vmax.f32 %v409, 1e-24
        %v426 = vmax.f32 %v410, 1e-24
        %v427 = vmax.f32 %v411, 1e-24
        %v428 = vrsqrt.pop %v412
        %v429 = vrsqrt.pop %v413
        %v430 = vrsqrt.pop %v414
        %v431 = vrsqrt.pop %v415
        %v432 = vrsqrt.pop %v416
        %v433 = vrsqrt.pop %v417
        %v434 = vrsqrt.pop %v418
        %v435 = vrsqrt.pop %v419
        %v436 = vrsqrt.pop %v420
        %v437 = vrsqrt.pop %v421
        %v438 = vrsqrt.pop %v422
        %v439 = vrsqrt.pop %v423
        %v440 = vrsqrt.pop %v424
        %v441 = vrsqrt.pop %v425
        %v442 = vrsqrt.pop %v426
        %v443 = vrsqrt.pop %v427
        %v444 = vmul.f32 %v274, %v428
        %v445 = vmul.f32 %v275, %v429
        %v446 = vmul.f32 %v276, %v430
        %v447 = vmul.f32 %v277, %v431
        %v448 = vmul.f32 %v278, %v432
        %v449 = vmul.f32 %v279, %v433
        %v450 = vmul.f32 %v280, %v434
        %v451 = vmul.f32 %v281, %v435
        %v452 = vmul.f32 %v282, %v436
        %v453 = vmul.f32 %v283, %v437
        %v454 = vmul.f32 %v284, %v438
        %v455 = vmul.f32 %v285, %v439
        %v456 = vmul.f32 %v286, %v440
        %v457 = vmul.f32 %v287, %v441
        %v458 = vmul.f32 %v288, %v442
        %v459 = vmul.f32 %v289, %v443
        %v460 = vmul.f32 %v291, %v428
        %v461 = vmul.f32 %v292, %v429
        %v462 = vmul.f32 %v293, %v430
        %v463 = vmul.f32 %v294, %v431
        %v464 = vmul.f32 %v295, %v432
        %v465 = vmul.f32 %v296, %v433
        %v466 = vmul.f32 %v297, %v434
        %v467 = vmul.f32 %v298, %v435
        %v468 = vmul.f32 %v299, %v436
        %v469 = vmul.f32 %v300, %v437
        %v470 = vmul.f32 %v301, %v438
        %v471 = vmul.f32 %v302, %v439
        %v472 = vmul.f32 %v303, %v440
        %v473 = vmul.f32 %v304, %v441
        %v474 = vmul.f32 %v305, %v442
        %v475 = vmul.f32 %v306, %v443
        %v476 = vmul.f32 %v308, %v428
        %v477 = vmul.f32 %v309, %v429
        %v478 = vmul.f32 %v310, %v430
        %v479 = vmul.f32 %v311, %v431
        %v480 = vmul.f32 %v312, %v432
        %v481 = vmul.f32 %v313, %v433
        %v482 = vmul.f32 %v314, %v434
        %v483 = vmul.f32 %v315, %v435
        %v484 = vmul.f32 %v316, %v436
        %v485 = vmul.f32 %v317, %v437
        %v486 = vmul.f32 %v318, %v438
        %v487 = vmul.f32 %v319, %v439
        %v488 = vmul.f32 %v320, %v440
        %v489 = vmul.f32 %v321, %v441
        %v490 = vmul.f32 %v322, %v442
        %v491 = vmul.f32 %v323, %v443
        %v492 = vmul.f32 %v324, %v324
        %v493 = vmul.f32 %v325, %v325
        %v494 = vmul.f32 %v326, %v326
        %v495 = vmul.f32 %v327, %v327
        %v496 = vmul.f32 %v328, %v328
        %v497 = vmul.f32 %v329, %v329
        %v498 = vmul.f32 %v330, %v330
        %v499 = vmul.f32 %v331, %v331
        %508 = vrot.lane.b32.xlu0 %v492, 127
        %v509 = vpop.permute.xlu0 %508
        %510 = vrot.lane.b32.xlu0 %v493, 127
        %v511 = vpop.permute.xlu0 %510
        %512 = vrot.lane.b32.xlu0 %v494, 127
        %v513 = vpop.permute.xlu0 %512
        %514 = vrot.lane.b32.xlu0 %v495, 127
        %v515 = vpop.permute.xlu0 %514
        %516 = vrot.lane.b32.xlu0 %v496, 127
        %v517 = vpop.permute.xlu0 %516
        %518 = vrot.lane.b32.xlu0 %v497, 127
        %v519 = vpop.permute.xlu0 %518
        %520 = vrot.lane.b32.xlu0 %v498, 127
        %v521 = vpop.permute.xlu0 %520
        %522 = vrot.lane.b32.xlu0 %v499, 127
        %v523 = vpop.permute.xlu0 %522
        %v532 = vadd.f32 %v492, %v509
        %v533 = vadd.f32 %v493, %v511
        %v534 = vadd.f32 %v494, %v513
        %v535 = vadd.f32 %v495, %v515
        %v536 = vadd.f32 %v496, %v517
        %v537 = vadd.f32 %v497, %v519
        %v538 = vadd.f32 %v498, %v521
        %v539 = vadd.f32 %v499, %v523
        %540 = vrot.lane.b32.xlu0 %v492, 126
        %v541 = vpop.permute.xlu0 %540
        %542 = vrot.lane.b32.xlu0 %v493, 126
        %v543 = vpop.permute.xlu0 %542
        %544 = vrot.lane.b32.xlu0 %v494, 126
        %v545 = vpop.permute.xlu0 %544
        %546 = vrot.lane.b32.xlu0 %v495, 126
        %v547 = vpop.permute.xlu0 %546
        %548 = vrot.lane.b32.xlu0 %v496, 126
        %v549 = vpop.permute.xlu0 %548
        %550 = vrot.lane.b32.xlu0 %v497, 126
        %v551 = vpop.permute.xlu0 %550
        %552 = vrot.lane.b32.xlu0 %v498, 126
        %v553 = vpop.permute.xlu0 %552
        %554 = vrot.lane.b32.xlu0 %v499, 126
        %v555 = vpop.permute.xlu0 %554
        %v564 = vadd.f32 %v532, %v541
        %v565 = vadd.f32 %v533, %v543
        %v566 = vadd.f32 %v534, %v545
        %v567 = vadd.f32 %v535, %v547
        %v568 = vadd.f32 %v536, %v549
        %v569 = vadd.f32 %v537, %v551
        %v570 = vadd.f32 %v538, %v553
        %v571 = vadd.f32 %v539, %v555
        %v572 = vmax.f32 %v564, 1e-24
        %v573 = vmax.f32 %v565, 1e-24
        %v574 = vmax.f32 %v566, 1e-24
        %v575 = vmax.f32 %v567, 1e-24
        %v576 = vmax.f32 %v568, 1e-24
        %v577 = vmax.f32 %v569, 1e-24
        %v578 = vmax.f32 %v570, 1e-24
        %v579 = vmax.f32 %v571, 1e-24
        %v580 = vrsqrt.pop %v572
        %v581 = vrsqrt.pop %v573
        %v582 = vrsqrt.pop %v574
        %v583 = vrsqrt.pop %v575
        %v584 = vrsqrt.pop %v576
        %v585 = vrsqrt.pop %v577
        %v586 = vrsqrt.pop %v578
        %v587 = vrsqrt.pop %v579
        %v588 = vmul.f32 %v324, %v580
        %v589 = vmul.f32 %v325, %v581
        %v590 = vmul.f32 %v326, %v582
        %v591 = vmul.f32 %v327, %v583
        %v592 = vmul.f32 %v328, %v584
        %v593 = vmul.f32 %v329, %v585
        %v594 = vmul.f32 %v330, %v586
        %v595 = vmul.f32 %v331, %v587
        %604 = vrot.lane.b32.xlu0 %v580, 1
        %v605 = vpop.permute.xlu0 %604
        %606 = vrot.lane.b32.xlu0 %v581, 1
        %v607 = vpop.permute.xlu0 %606
        %608 = vrot.lane.b32.xlu0 %v582, 1
        %v609 = vpop.permute.xlu0 %608
        %610 = vrot.lane.b32.xlu0 %v583, 1
        %v611 = vpop.permute.xlu0 %610
        %612 = vrot.lane.b32.xlu0 %v584, 1
        %v613 = vpop.permute.xlu0 %612
        %614 = vrot.lane.b32.xlu0 %v585, 1
        %v615 = vpop.permute.xlu0 %614
        %616 = vrot.lane.b32.xlu0 %v586, 1
        %v617 = vpop.permute.xlu0 %616
        %618 = vrot.lane.b32.xlu0 %v587, 1
        %v619 = vpop.permute.xlu0 %618
        %v628 = vmul.f32 %v324, %v605
        %v629 = vmul.f32 %v325, %v607
        %v630 = vmul.f32 %v326, %v609
        %v631 = vmul.f32 %v327, %v611
        %v632 = vmul.f32 %v328, %v613
        %v633 = vmul.f32 %v329, %v615
        %v634 = vmul.f32 %v330, %v617
        %v635 = vmul.f32 %v331, %v619
        %636 = vrot.lane.b32.xlu0 %v580, 2
        %v637 = vpop.permute.xlu0 %636
        %638 = vrot.lane.b32.xlu0 %v581, 2
        %v639 = vpop.permute.xlu0 %638
        %640 = vrot.lane.b32.xlu0 %v582, 2
        %v641 = vpop.permute.xlu0 %640
        %642 = vrot.lane.b32.xlu0 %v583, 2
        %v643 = vpop.permute.xlu0 %642
        %644 = vrot.lane.b32.xlu0 %v584, 2
        %v645 = vpop.permute.xlu0 %644
        %646 = vrot.lane.b32.xlu0 %v585, 2
        %v647 = vpop.permute.xlu0 %646
        %648 = vrot.lane.b32.xlu0 %v586, 2
        %v649 = vpop.permute.xlu0 %648
        %650 = vrot.lane.b32.xlu0 %v587, 2
        %v651 = vpop.permute.xlu0 %650
        %v660 = vmul.f32 %v324, %v637
        %v661 = vmul.f32 %v325, %v639
        %v662 = vmul.f32 %v326, %v641
        %v663 = vmul.f32 %v327, %v643
        %v664 = vmul.f32 %v328, %v645
        %v665 = vmul.f32 %v329, %v647
        %v666 = vmul.f32 %v330, %v649
        %v667 = vmul.f32 %v331, %v651
        %669 = vset.pattern.permute.xlu0 0
        %670 = vperm.xlu0 %669, %v588
        %v671 = vpop.permute.xlu0 %670
        %674 = vset.pattern.permute.xlu0 0
        %675 = vperm.xlu0 %674, %v589
        %v676 = vpop.permute.xlu0 %675
        %679 = vset.pattern.permute.xlu0 0
        %680 = vperm.xlu0 %679, %v590
        %v681 = vpop.permute.xlu0 %680
        %684 = vset.pattern.permute.xlu0 0
        %685 = vperm.xlu0 %684, %v591
        %v686 = vpop.permute.xlu0 %685
        %689 = vset.pattern.permute.xlu0 0
        %690 = vperm.xlu0 %689, %v592
        %v691 = vpop.permute.xlu0 %690
        %694 = vset.pattern.permute.xlu0 0
        %695 = vperm.xlu0 %694, %v593
        %v696 = vpop.permute.xlu0 %695
        %699 = vset.pattern.permute.xlu0 0
        %700 = vperm.xlu0 %699, %v594
        %v701 = vpop.permute.xlu0 %700
        %704 = vset.pattern.permute.xlu0 0
        %705 = vperm.xlu0 %704, %v595
        %v706 = vpop.permute.xlu0 %705
        %v708 = vadd.f32 %v444, %v671
        %v709 = vadd.f32 %v445, %v671
        %v710 = vadd.f32 %v446, %v676
        %v711 = vadd.f32 %v447, %v676
        %v712 = vadd.f32 %v448, %v681
        %v713 = vadd.f32 %v449, %v681
        %v714 = vadd.f32 %v450, %v686
        %v715 = vadd.f32 %v451, %v686
        %v716 = vadd.f32 %v452, %v691
        %v717 = vadd.f32 %v453, %v691
        %v718 = vadd.f32 %v454, %v696
        %v719 = vadd.f32 %v455, %v696
        %v720 = vadd.f32 %v456, %v701
        %v721 = vadd.f32 %v457, %v701
        %v722 = vadd.f32 %v458, %v706
        %v723 = vadd.f32 %v459, %v706
        %725 = vset.pattern.permute.xlu0 1
        %726 = vperm.xlu0 %725, %v628
        %v727 = vpop.permute.xlu0 %726
        %730 = vset.pattern.permute.xlu0 1
        %731 = vperm.xlu0 %730, %v629
        %v732 = vpop.permute.xlu0 %731
        %735 = vset.pattern.permute.xlu0 1
        %736 = vperm.xlu0 %735, %v630
        %v737 = vpop.permute.xlu0 %736
        %740 = vset.pattern.permute.xlu0 1
        %741 = vperm.xlu0 %740, %v631
        %v742 = vpop.permute.xlu0 %741
        %745 = vset.pattern.permute.xlu0 1
        %746 = vperm.xlu0 %745, %v632
        %v747 = vpop.permute.xlu0 %746
        %750 = vset.pattern.permute.xlu0 1
        %751 = vperm.xlu0 %750, %v633
        %v752 = vpop.permute.xlu0 %751
        %755 = vset.pattern.permute.xlu0 1
        %756 = vperm.xlu0 %755, %v634
        %v757 = vpop.permute.xlu0 %756
        %760 = vset.pattern.permute.xlu0 1
        %761 = vperm.xlu0 %760, %v635
        %v762 = vpop.permute.xlu0 %761
        %v764 = vadd.f32 %v460, %v727
        %v765 = vadd.f32 %v461, %v727
        %v766 = vadd.f32 %v462, %v732
        %v767 = vadd.f32 %v463, %v732
        %v768 = vadd.f32 %v464, %v737
        %v769 = vadd.f32 %v465, %v737
        %v770 = vadd.f32 %v466, %v742
        %v771 = vadd.f32 %v467, %v742
        %v772 = vadd.f32 %v468, %v747
        %v773 = vadd.f32 %v469, %v747
        %v774 = vadd.f32 %v470, %v752
        %v775 = vadd.f32 %v471, %v752
        %v776 = vadd.f32 %v472, %v757
        %v777 = vadd.f32 %v473, %v757
        %v778 = vadd.f32 %v474, %v762
        %v779 = vadd.f32 %v475, %v762
        %781 = vset.pattern.permute.xlu0 2
        %782 = vperm.xlu0 %781, %v660
        %v783 = vpop.permute.xlu0 %782
        %786 = vset.pattern.permute.xlu0 2
        %787 = vperm.xlu0 %786, %v661
        %v788 = vpop.permute.xlu0 %787
        %791 = vset.pattern.permute.xlu0 2
        %792 = vperm.xlu0 %791, %v662
        %v793 = vpop.permute.xlu0 %792
        %796 = vset.pattern.permute.xlu0 2
        %797 = vperm.xlu0 %796, %v663
        %v798 = vpop.permute.xlu0 %797
        %801 = vset.pattern.permute.xlu0 2
        %802 = vperm.xlu0 %801, %v664
        %v803 = vpop.permute.xlu0 %802
        %806 = vset.pattern.permute.xlu0 2
        %807 = vperm.xlu0 %806, %v665
        %v808 = vpop.permute.xlu0 %807
        %811 = vset.pattern.permute.xlu0 2
        %812 = vperm.xlu0 %811, %v666
        %v813 = vpop.permute.xlu0 %812
        %816 = vset.pattern.permute.xlu0 2
        %817 = vperm.xlu0 %816, %v667
        %v818 = vpop.permute.xlu0 %817
        %v820 = vadd.f32 %v476, %v783
        %v821 = vadd.f32 %v477, %v783
        %v822 = vadd.f32 %v478, %v788
        %v823 = vadd.f32 %v479, %v788
        %v824 = vadd.f32 %v480, %v793
        %v825 = vadd.f32 %v481, %v793
        %v826 = vadd.f32 %v482, %v798
        %v827 = vadd.f32 %v483, %v798
        %v828 = vadd.f32 %v484, %v803
        %v829 = vadd.f32 %v485, %v803
        %v830 = vadd.f32 %v486, %v808
        %v831 = vadd.f32 %v487, %v808
        %v832 = vadd.f32 %v488, %v813
        %v833 = vadd.f32 %v489, %v813
        %v834 = vadd.f32 %v490, %v818
        %v835 = vadd.f32 %v491, %v818
        %v836 = vmul.f32 %v708, %v708
        %v837 = vmul.f32 %v709, %v709
        %v838 = vmul.f32 %v710, %v710
        %v839 = vmul.f32 %v711, %v711
        %v840 = vmul.f32 %v712, %v712
        %v841 = vmul.f32 %v713, %v713
        %v842 = vmul.f32 %v714, %v714
        %v843 = vmul.f32 %v715, %v715
        %v844 = vmul.f32 %v716, %v716
        %v845 = vmul.f32 %v717, %v717
        %v846 = vmul.f32 %v718, %v718
        %v847 = vmul.f32 %v719, %v719
        %v848 = vmul.f32 %v720, %v720
        %v849 = vmul.f32 %v721, %v721
        %v850 = vmul.f32 %v722, %v722
        %v851 = vmul.f32 %v723, %v723
        %v852 = vmul.f32 %v764, %v764
        %v853 = vmul.f32 %v765, %v765
        %v854 = vmul.f32 %v766, %v766
        %v855 = vmul.f32 %v767, %v767
        %v856 = vmul.f32 %v768, %v768
        %v857 = vmul.f32 %v769, %v769
        %v858 = vmul.f32 %v770, %v770
        %v859 = vmul.f32 %v771, %v771
        %v860 = vmul.f32 %v772, %v772
        %v861 = vmul.f32 %v773, %v773
        %v862 = vmul.f32 %v774, %v774
        %v863 = vmul.f32 %v775, %v775
        %v864 = vmul.f32 %v776, %v776
        %v865 = vmul.f32 %v777, %v777
        %v866 = vmul.f32 %v778, %v778
        %v867 = vmul.f32 %v779, %v779
        %v868 = vadd.f32 %v836, %v852
        %v869 = vadd.f32 %v837, %v853
        %v870 = vadd.f32 %v838, %v854
        %v871 = vadd.f32 %v839, %v855
        %v872 = vadd.f32 %v840, %v856
        %v873 = vadd.f32 %v841, %v857
        %v874 = vadd.f32 %v842, %v858
        %v875 = vadd.f32 %v843, %v859
        %v876 = vadd.f32 %v844, %v860
        %v877 = vadd.f32 %v845, %v861
        %v878 = vadd.f32 %v846, %v862
        %v879 = vadd.f32 %v847, %v863
        %v880 = vadd.f32 %v848, %v864
        %v881 = vadd.f32 %v849, %v865
        %v882 = vadd.f32 %v850, %v866
        %v883 = vadd.f32 %v851, %v867
        %v884 = vmul.f32 %v820, %v820
        %v885 = vmul.f32 %v821, %v821
        %v886 = vmul.f32 %v822, %v822
        %v887 = vmul.f32 %v823, %v823
        %v888 = vmul.f32 %v824, %v824
        %v889 = vmul.f32 %v825, %v825
        %v890 = vmul.f32 %v826, %v826
        %v891 = vmul.f32 %v827, %v827
        %v892 = vmul.f32 %v828, %v828
        %v893 = vmul.f32 %v829, %v829
        %v894 = vmul.f32 %v830, %v830
        %v895 = vmul.f32 %v831, %v831
        %v896 = vmul.f32 %v832, %v832
        %v897 = vmul.f32 %v833, %v833
        %v898 = vmul.f32 %v834, %v834
        %v899 = vmul.f32 %v835, %v835
        %v900 = vadd.f32 %v868, %v884
        %v901 = vadd.f32 %v869, %v885
        %v902 = vadd.f32 %v870, %v886
        %v903 = vadd.f32 %v871, %v887
        %v904 = vadd.f32 %v872, %v888
        %v905 = vadd.f32 %v873, %v889
        %v906 = vadd.f32 %v874, %v890
        %v907 = vadd.f32 %v875, %v891
        %v908 = vadd.f32 %v876, %v892
        %v909 = vadd.f32 %v877, %v893
        %v910 = vadd.f32 %v878, %v894
        %v911 = vadd.f32 %v879, %v895
        %v912 = vadd.f32 %v880, %v896
        %v913 = vadd.f32 %v881, %v897
        %v914 = vadd.f32 %v882, %v898
        %v915 = vadd.f32 %v883, %v899
        %v916 = vmax.f32 %v900, 1e-24
        %v917 = vmax.f32 %v901, 1e-24
        %v918 = vmax.f32 %v902, 1e-24
        %v919 = vmax.f32 %v903, 1e-24
        %v920 = vmax.f32 %v904, 1e-24
        %v921 = vmax.f32 %v905, 1e-24
        %v922 = vmax.f32 %v906, 1e-24
        %v923 = vmax.f32 %v907, 1e-24
        %v924 = vmax.f32 %v908, 1e-24
        %v925 = vmax.f32 %v909, 1e-24
        %v926 = vmax.f32 %v910, 1e-24
        %v927 = vmax.f32 %v911, 1e-24
        %v928 = vmax.f32 %v912, 1e-24
        %v929 = vmax.f32 %v913, 1e-24
        %v930 = vmax.f32 %v914, 1e-24
        %v931 = vmax.f32 %v915, 1e-24
        %v932 = vrsqrt.pop %v916
        %v933 = vrsqrt.pop %v917
        %v934 = vrsqrt.pop %v918
        %v935 = vrsqrt.pop %v919
        %v936 = vrsqrt.pop %v920
        %v937 = vrsqrt.pop %v921
        %v938 = vrsqrt.pop %v922
        %v939 = vrsqrt.pop %v923
        %v940 = vrsqrt.pop %v924
        %v941 = vrsqrt.pop %v925
        %v942 = vrsqrt.pop %v926
        %v943 = vrsqrt.pop %v927
        %v944 = vrsqrt.pop %v928
        %v945 = vrsqrt.pop %v929
        %v946 = vrsqrt.pop %v930
        %v947 = vrsqrt.pop %v931
        %v948 = vmul.f32 %v708, %v932
        %v949 = vmul.f32 %v709, %v933
        %v950 = vmul.f32 %v710, %v934
        %v951 = vmul.f32 %v711, %v935
        %v952 = vmul.f32 %v712, %v936
        %v953 = vmul.f32 %v713, %v937
        %v954 = vmul.f32 %v714, %v938
        %v955 = vmul.f32 %v715, %v939
        %v956 = vmul.f32 %v716, %v940
        %v957 = vmul.f32 %v717, %v941
        %v958 = vmul.f32 %v718, %v942
        %v959 = vmul.f32 %v719, %v943
        %v960 = vmul.f32 %v720, %v944
        %v961 = vmul.f32 %v721, %v945
        %v962 = vmul.f32 %v722, %v946
        %v963 = vmul.f32 %v723, %v947
        %v964 = vmul.f32 %v764, %v932
        %v965 = vmul.f32 %v765, %v933
        %v966 = vmul.f32 %v766, %v934
        %v967 = vmul.f32 %v767, %v935
        %v968 = vmul.f32 %v768, %v936
        %v969 = vmul.f32 %v769, %v937
        %v970 = vmul.f32 %v770, %v938
        %v971 = vmul.f32 %v771, %v939
        %v972 = vmul.f32 %v772, %v940
        %v973 = vmul.f32 %v773, %v941
        %v974 = vmul.f32 %v774, %v942
        %v975 = vmul.f32 %v775, %v943
        %v976 = vmul.f32 %v776, %v944
        %v977 = vmul.f32 %v777, %v945
        %v978 = vmul.f32 %v778, %v946
        %v979 = vmul.f32 %v779, %v947
        %v980 = vmul.f32 %v820, %v932
        %v981 = vmul.f32 %v821, %v933
        %v982 = vmul.f32 %v822, %v934
        %v983 = vmul.f32 %v823, %v935
        %v984 = vmul.f32 %v824, %v936
        %v985 = vmul.f32 %v825, %v937
        %v986 = vmul.f32 %v826, %v938
        %v987 = vmul.f32 %v827, %v939
        %v988 = vmul.f32 %v828, %v940
        %v989 = vmul.f32 %v829, %v941
        %v990 = vmul.f32 %v830, %v942
        %v991 = vmul.f32 %v831, %v943
        %v992 = vmul.f32 %v832, %v944
        %v993 = vmul.f32 %v833, %v945
        %v994 = vmul.f32 %v834, %v946
        %v995 = vmul.f32 %v835, %v947
        %996 = vset.pattern.permute.xlu0 3
        %997 = vperm.xlu0 %996, %v588
        %v998 = vpop.permute.xlu0 %997
        %1000 = vset.pattern.permute.xlu0 3
        %1001 = vperm.xlu0 %1000, %v589
        %v1002 = vpop.permute.xlu0 %1001
        %1004 = vset.pattern.permute.xlu0 3
        %1005 = vperm.xlu0 %1004, %v590
        %v1006 = vpop.permute.xlu0 %1005
        %1008 = vset.pattern.permute.xlu0 3
        %1009 = vperm.xlu0 %1008, %v591
        %v1010 = vpop.permute.xlu0 %1009
        %1012 = vset.pattern.permute.xlu0 3
        %1013 = vperm.xlu0 %1012, %v592
        %v1014 = vpop.permute.xlu0 %1013
        %1016 = vset.pattern.permute.xlu0 3
        %1017 = vperm.xlu0 %1016, %v593
        %v1018 = vpop.permute.xlu0 %1017
        %1020 = vset.pattern.permute.xlu0 3
        %1021 = vperm.xlu0 %1020, %v594
        %v1022 = vpop.permute.xlu0 %1021
        %1024 = vset.pattern.permute.xlu0 3
        %1025 = vperm.xlu0 %1024, %v595
        %v1026 = vpop.permute.xlu0 %1025
        %v1028 = vmul.f32 %v444, %v998
        %v1029 = vmul.f32 %v445, %v998
        %v1030 = vmul.f32 %v446, %v1002
        %v1031 = vmul.f32 %v447, %v1002
        %v1032 = vmul.f32 %v448, %v1006
        %v1033 = vmul.f32 %v449, %v1006
        %v1034 = vmul.f32 %v450, %v1010
        %v1035 = vmul.f32 %v451, %v1010
        %v1036 = vmul.f32 %v452, %v1014
        %v1037 = vmul.f32 %v453, %v1014
        %v1038 = vmul.f32 %v454, %v1018
        %v1039 = vmul.f32 %v455, %v1018
        %v1040 = vmul.f32 %v456, %v1022
        %v1041 = vmul.f32 %v457, %v1022
        %v1042 = vmul.f32 %v458, %v1026
        %v1043 = vmul.f32 %v459, %v1026
        %1044 = vset.pattern.permute.xlu0 4
        %1045 = vperm.xlu0 %1044, %v628
        %v1046 = vpop.permute.xlu0 %1045
        %1048 = vset.pattern.permute.xlu0 4
        %1049 = vperm.xlu0 %1048, %v629
        %v1050 = vpop.permute.xlu0 %1049
        %1052 = vset.pattern.permute.xlu0 4
        %1053 = vperm.xlu0 %1052, %v630
        %v1054 = vpop.permute.xlu0 %1053
        %1056 = vset.pattern.permute.xlu0 4
        %1057 = vperm.xlu0 %1056, %v631
        %v1058 = vpop.permute.xlu0 %1057
        %1060 = vset.pattern.permute.xlu0 4
        %1061 = vperm.xlu0 %1060, %v632
        %v1062 = vpop.permute.xlu0 %1061
        %1064 = vset.pattern.permute.xlu0 4
        %1065 = vperm.xlu0 %1064, %v633
        %v1066 = vpop.permute.xlu0 %1065
        %1068 = vset.pattern.permute.xlu0 4
        %1069 = vperm.xlu0 %1068, %v634
        %v1070 = vpop.permute.xlu0 %1069
        %1072 = vset.pattern.permute.xlu0 4
        %1073 = vperm.xlu0 %1072, %v635
        %v1074 = vpop.permute.xlu0 %1073
        %v1076 = vmul.f32 %v460, %v1046
        %v1077 = vmul.f32 %v461, %v1046
        %v1078 = vmul.f32 %v462, %v1050
        %v1079 = vmul.f32 %v463, %v1050
        %v1080 = vmul.f32 %v464, %v1054
        %v1081 = vmul.f32 %v465, %v1054
        %v1082 = vmul.f32 %v466, %v1058
        %v1083 = vmul.f32 %v467, %v1058
        %v1084 = vmul.f32 %v468, %v1062
        %v1085 = vmul.f32 %v469, %v1062
        %v1086 = vmul.f32 %v470, %v1066
        %v1087 = vmul.f32 %v471, %v1066
        %v1088 = vmul.f32 %v472, %v1070
        %v1089 = vmul.f32 %v473, %v1070
        %v1090 = vmul.f32 %v474, %v1074
        %v1091 = vmul.f32 %v475, %v1074
        %v1092 = vadd.f32 %v1028, %v1076
        %v1093 = vadd.f32 %v1029, %v1077
        %v1094 = vadd.f32 %v1030, %v1078
        %v1095 = vadd.f32 %v1031, %v1079
        %v1096 = vadd.f32 %v1032, %v1080
        %v1097 = vadd.f32 %v1033, %v1081
        %v1098 = vadd.f32 %v1034, %v1082
        %v1099 = vadd.f32 %v1035, %v1083
        %v1100 = vadd.f32 %v1036, %v1084
        %v1101 = vadd.f32 %v1037, %v1085
        %v1102 = vadd.f32 %v1038, %v1086
        %v1103 = vadd.f32 %v1039, %v1087
        %v1104 = vadd.f32 %v1040, %v1088
        %v1105 = vadd.f32 %v1041, %v1089
        %v1106 = vadd.f32 %v1042, %v1090
        %v1107 = vadd.f32 %v1043, %v1091
        %1108 = vset.pattern.permute.xlu0 5
        %1109 = vperm.xlu0 %1108, %v660
        %v1110 = vpop.permute.xlu0 %1109
        %1112 = vset.pattern.permute.xlu0 5
        %1113 = vperm.xlu0 %1112, %v661
        %v1114 = vpop.permute.xlu0 %1113
        %1116 = vset.pattern.permute.xlu0 5
        %1117 = vperm.xlu0 %1116, %v662
        %v1118 = vpop.permute.xlu0 %1117
        %1120 = vset.pattern.permute.xlu0 5
        %1121 = vperm.xlu0 %1120, %v663
        %v1122 = vpop.permute.xlu0 %1121
        %1124 = vset.pattern.permute.xlu0 5
        %1125 = vperm.xlu0 %1124, %v664
        %v1126 = vpop.permute.xlu0 %1125
        %1128 = vset.pattern.permute.xlu0 5
        %1129 = vperm.xlu0 %1128, %v665
        %v1130 = vpop.permute.xlu0 %1129
        %1132 = vset.pattern.permute.xlu0 5
        %1133 = vperm.xlu0 %1132, %v666
        %v1134 = vpop.permute.xlu0 %1133
        %1136 = vset.pattern.permute.xlu0 5
        %1137 = vperm.xlu0 %1136, %v667
        %v1138 = vpop.permute.xlu0 %1137
        %v1140 = vmul.f32 %v476, %v1110
        %v1141 = vmul.f32 %v477, %v1110
        %v1142 = vmul.f32 %v478, %v1114
        %v1143 = vmul.f32 %v479, %v1114
        %v1144 = vmul.f32 %v480, %v1118
        %v1145 = vmul.f32 %v481, %v1118
        %v1146 = vmul.f32 %v482, %v1122
        %v1147 = vmul.f32 %v483, %v1122
        %v1148 = vmul.f32 %v484, %v1126
        %v1149 = vmul.f32 %v485, %v1126
        %v1150 = vmul.f32 %v486, %v1130
        %v1151 = vmul.f32 %v487, %v1130
        %v1152 = vmul.f32 %v488, %v1134
        %v1153 = vmul.f32 %v489, %v1134
        %v1154 = vmul.f32 %v490, %v1138
        %v1155 = vmul.f32 %v491, %v1138
        %v1156 = vadd.f32 %v1092, %v1140
        %v1157 = vadd.f32 %v1093, %v1141
        %v1158 = vadd.f32 %v1094, %v1142
        %v1159 = vadd.f32 %v1095, %v1143
        %v1160 = vadd.f32 %v1096, %v1144
        %v1161 = vadd.f32 %v1097, %v1145
        %v1162 = vadd.f32 %v1098, %v1146
        %v1163 = vadd.f32 %v1099, %v1147
        %v1164 = vadd.f32 %v1100, %v1148
        %v1165 = vadd.f32 %v1101, %v1149
        %v1166 = vadd.f32 %v1102, %v1150
        %v1167 = vadd.f32 %v1103, %v1151
        %v1168 = vadd.f32 %v1104, %v1152
        %v1169 = vadd.f32 %v1105, %v1153
        %v1170 = vadd.f32 %v1106, %v1154
        %v1171 = vadd.f32 %v1107, %v1155
        %v1172 = vand.u32 2147483647, %v1156
        %v1173 = vand.u32 2147483647, %v1157
        %v1174 = vand.u32 2147483647, %v1158
        %v1175 = vand.u32 2147483647, %v1159
        %v1176 = vand.u32 2147483647, %v1160
        %v1177 = vand.u32 2147483647, %v1161
        %v1178 = vand.u32 2147483647, %v1162
        %v1179 = vand.u32 2147483647, %v1163
        %v1180 = vand.u32 2147483647, %v1164
        %v1181 = vand.u32 2147483647, %v1165
        %v1182 = vand.u32 2147483647, %v1166
        %v1183 = vand.u32 2147483647, %v1167
        %v1184 = vand.u32 2147483647, %v1168
        %v1185 = vand.u32 2147483647, %v1169
        %v1186 = vand.u32 2147483647, %v1170
        %v1187 = vand.u32 2147483647, %v1171
        %v1188 = vadd.f32 %v1172, 1e-05
        %v1189 = vadd.f32 %v1173, 1e-05
        %v1190 = vadd.f32 %v1174, 1e-05
        %v1191 = vadd.f32 %v1175, 1e-05
        %v1192 = vadd.f32 %v1176, 1e-05
        %v1193 = vadd.f32 %v1177, 1e-05
        %v1194 = vadd.f32 %v1178, 1e-05
        %v1195 = vadd.f32 %v1179, 1e-05
        %v1196 = vadd.f32 %v1180, 1e-05
        %v1197 = vadd.f32 %v1181, 1e-05
        %v1198 = vadd.f32 %v1182, 1e-05
        %v1199 = vadd.f32 %v1183, 1e-05
        %v1200 = vadd.f32 %v1184, 1e-05
        %v1201 = vadd.f32 %v1185, 1e-05
        %v1202 = vadd.f32 %v1186, 1e-05
        %v1203 = vadd.f32 %v1187, 1e-05
        %1204 = vrot.lane.b32.xlu0 %v588, 125
        %v1205 = vpop.permute.xlu0 %1204
        %1206 = vrot.lane.b32.xlu0 %v589, 125
        %v1207 = vpop.permute.xlu0 %1206
        %1208 = vrot.lane.b32.xlu0 %v590, 125
        %v1209 = vpop.permute.xlu0 %1208
        %1210 = vrot.lane.b32.xlu0 %v591, 125
        %v1211 = vpop.permute.xlu0 %1210
        %1212 = vrot.lane.b32.xlu0 %v592, 125
        %v1213 = vpop.permute.xlu0 %1212
        %1214 = vrot.lane.b32.xlu0 %v593, 125
        %v1215 = vpop.permute.xlu0 %1214
        %1216 = vrot.lane.b32.xlu0 %v594, 125
        %v1217 = vpop.permute.xlu0 %1216
        %1218 = vrot.lane.b32.xlu0 %v595, 125
        %v1219 = vpop.permute.xlu0 %1218
        %v1228 = vmul.f32 %v588, %v1205
        %v1229 = vmul.f32 %v589, %v1207
        %v1230 = vmul.f32 %v590, %v1209
        %v1231 = vmul.f32 %v591, %v1211
        %v1232 = vmul.f32 %v592, %v1213
        %v1233 = vmul.f32 %v593, %v1215
        %v1234 = vmul.f32 %v594, %v1217
        %v1235 = vmul.f32 %v595, %v1219
        %1236 = vrot.lane.b32.xlu0 %v628, 125
        %v1237 = vpop.permute.xlu0 %1236
        %1238 = vrot.lane.b32.xlu0 %v629, 125
        %v1239 = vpop.permute.xlu0 %1238
        %1240 = vrot.lane.b32.xlu0 %v630, 125
        %v1241 = vpop.permute.xlu0 %1240
        %1242 = vrot.lane.b32.xlu0 %v631, 125
        %v1243 = vpop.permute.xlu0 %1242
        %1244 = vrot.lane.b32.xlu0 %v632, 125
        %v1245 = vpop.permute.xlu0 %1244
        %1246 = vrot.lane.b32.xlu0 %v633, 125
        %v1247 = vpop.permute.xlu0 %1246
        %1248 = vrot.lane.b32.xlu0 %v634, 125
        %v1249 = vpop.permute.xlu0 %1248
        %1250 = vrot.lane.b32.xlu0 %v635, 125
        %v1251 = vpop.permute.xlu0 %1250
        %v1260 = vmul.f32 %v628, %v1237
        %v1261 = vmul.f32 %v629, %v1239
        %v1262 = vmul.f32 %v630, %v1241
        %v1263 = vmul.f32 %v631, %v1243
        %v1264 = vmul.f32 %v632, %v1245
        %v1265 = vmul.f32 %v633, %v1247
        %v1266 = vmul.f32 %v634, %v1249
        %v1267 = vmul.f32 %v635, %v1251
        %1276 = vrot.lane.b32.xlu0 %v1260, 127
        %v1277 = vpop.permute.xlu0 %1276
        %1278 = vrot.lane.b32.xlu0 %v1261, 127
        %v1279 = vpop.permute.xlu0 %1278
        %1280 = vrot.lane.b32.xlu0 %v1262, 127
        %v1281 = vpop.permute.xlu0 %1280
        %1282 = vrot.lane.b32.xlu0 %v1263, 127
        %v1283 = vpop.permute.xlu0 %1282
        %1284 = vrot.lane.b32.xlu0 %v1264, 127
        %v1285 = vpop.permute.xlu0 %1284
        %1286 = vrot.lane.b32.xlu0 %v1265, 127
        %v1287 = vpop.permute.xlu0 %1286
        %1288 = vrot.lane.b32.xlu0 %v1266, 127
        %v1289 = vpop.permute.xlu0 %1288
        %1290 = vrot.lane.b32.xlu0 %v1267, 127
        %v1291 = vpop.permute.xlu0 %1290
        %v1300 = vadd.f32 %v1228, %v1277
        %v1301 = vadd.f32 %v1229, %v1279
        %v1302 = vadd.f32 %v1230, %v1281
        %v1303 = vadd.f32 %v1231, %v1283
        %v1304 = vadd.f32 %v1232, %v1285
        %v1305 = vadd.f32 %v1233, %v1287
        %v1306 = vadd.f32 %v1234, %v1289
        %v1307 = vadd.f32 %v1235, %v1291
        %1308 = vrot.lane.b32.xlu0 %v660, 125
        %v1309 = vpop.permute.xlu0 %1308
        %1310 = vrot.lane.b32.xlu0 %v661, 125
        %v1311 = vpop.permute.xlu0 %1310
        %1312 = vrot.lane.b32.xlu0 %v662, 125
        %v1313 = vpop.permute.xlu0 %1312
        %1314 = vrot.lane.b32.xlu0 %v663, 125
        %v1315 = vpop.permute.xlu0 %1314
        %1316 = vrot.lane.b32.xlu0 %v664, 125
        %v1317 = vpop.permute.xlu0 %1316
        %1318 = vrot.lane.b32.xlu0 %v665, 125
        %v1319 = vpop.permute.xlu0 %1318
        %1320 = vrot.lane.b32.xlu0 %v666, 125
        %v1321 = vpop.permute.xlu0 %1320
        %1322 = vrot.lane.b32.xlu0 %v667, 125
        %v1323 = vpop.permute.xlu0 %1322
        %v1332 = vmul.f32 %v660, %v1309
        %v1333 = vmul.f32 %v661, %v1311
        %v1334 = vmul.f32 %v662, %v1313
        %v1335 = vmul.f32 %v663, %v1315
        %v1336 = vmul.f32 %v664, %v1317
        %v1337 = vmul.f32 %v665, %v1319
        %v1338 = vmul.f32 %v666, %v1321
        %v1339 = vmul.f32 %v667, %v1323
        %1348 = vrot.lane.b32.xlu0 %v1332, 126
        %v1349 = vpop.permute.xlu0 %1348
        %1350 = vrot.lane.b32.xlu0 %v1333, 126
        %v1351 = vpop.permute.xlu0 %1350
        %1352 = vrot.lane.b32.xlu0 %v1334, 126
        %v1353 = vpop.permute.xlu0 %1352
        %1354 = vrot.lane.b32.xlu0 %v1335, 126
        %v1355 = vpop.permute.xlu0 %1354
        %1356 = vrot.lane.b32.xlu0 %v1336, 126
        %v1357 = vpop.permute.xlu0 %1356
        %1358 = vrot.lane.b32.xlu0 %v1337, 126
        %v1359 = vpop.permute.xlu0 %1358
        %1360 = vrot.lane.b32.xlu0 %v1338, 126
        %v1361 = vpop.permute.xlu0 %1360
        %1362 = vrot.lane.b32.xlu0 %v1339, 126
        %v1363 = vpop.permute.xlu0 %1362
        %v1372 = vadd.f32 %v1300, %v1349
        %v1373 = vadd.f32 %v1301, %v1351
        %v1374 = vadd.f32 %v1302, %v1353
        %v1375 = vadd.f32 %v1303, %v1355
        %v1376 = vadd.f32 %v1304, %v1357
        %v1377 = vadd.f32 %v1305, %v1359
        %v1378 = vadd.f32 %v1306, %v1361
        %v1379 = vadd.f32 %v1307, %v1363
        %v1380 = vmax.f32 %v1372, 0.0
        %v1381 = vmax.f32 %v1373, 0.0
        %v1382 = vmax.f32 %v1374, 0.0
        %v1383 = vmax.f32 %v1375, 0.0
        %v1384 = vmax.f32 %v1376, 0.0
        %v1385 = vmax.f32 %v1377, 0.0
        %v1386 = vmax.f32 %v1378, 0.0
        %v1387 = vmax.f32 %v1379, 0.0
        %v1388 = vmul.f32 %v948, %v998
        %v1389 = vmul.f32 %v949, %v998
        %v1390 = vmul.f32 %v950, %v1002
        %v1391 = vmul.f32 %v951, %v1002
        %v1392 = vmul.f32 %v952, %v1006
        %v1393 = vmul.f32 %v953, %v1006
        %v1394 = vmul.f32 %v954, %v1010
        %v1395 = vmul.f32 %v955, %v1010
        %v1396 = vmul.f32 %v956, %v1014
        %v1397 = vmul.f32 %v957, %v1014
        %v1398 = vmul.f32 %v958, %v1018
        %v1399 = vmul.f32 %v959, %v1018
        %v1400 = vmul.f32 %v960, %v1022
        %v1401 = vmul.f32 %v961, %v1022
        %v1402 = vmul.f32 %v962, %v1026
        %v1403 = vmul.f32 %v963, %v1026
        %v1404 = vmul.f32 %v964, %v1046
        %v1405 = vmul.f32 %v965, %v1046
        %v1406 = vmul.f32 %v966, %v1050
        %v1407 = vmul.f32 %v967, %v1050
        %v1408 = vmul.f32 %v968, %v1054
        %v1409 = vmul.f32 %v969, %v1054
        %v1410 = vmul.f32 %v970, %v1058
        %v1411 = vmul.f32 %v971, %v1058
        %v1412 = vmul.f32 %v972, %v1062
        %v1413 = vmul.f32 %v973, %v1062
        %v1414 = vmul.f32 %v974, %v1066
        %v1415 = vmul.f32 %v975, %v1066
        %v1416 = vmul.f32 %v976, %v1070
        %v1417 = vmul.f32 %v977, %v1070
        %v1418 = vmul.f32 %v978, %v1074
        %v1419 = vmul.f32 %v979, %v1074
        %v1420 = vadd.f32 %v1388, %v1404
        %v1421 = vadd.f32 %v1389, %v1405
        %v1422 = vadd.f32 %v1390, %v1406
        %v1423 = vadd.f32 %v1391, %v1407
        %v1424 = vadd.f32 %v1392, %v1408
        %v1425 = vadd.f32 %v1393, %v1409
        %v1426 = vadd.f32 %v1394, %v1410
        %v1427 = vadd.f32 %v1395, %v1411
        %v1428 = vadd.f32 %v1396, %v1412
        %v1429 = vadd.f32 %v1397, %v1413
        %v1430 = vadd.f32 %v1398, %v1414
        %v1431 = vadd.f32 %v1399, %v1415
        %v1432 = vadd.f32 %v1400, %v1416
        %v1433 = vadd.f32 %v1401, %v1417
        %v1434 = vadd.f32 %v1402, %v1418
        %v1435 = vadd.f32 %v1403, %v1419
        %v1436 = vmul.f32 %v980, %v1110
        %v1437 = vmul.f32 %v981, %v1110
        %v1438 = vmul.f32 %v982, %v1114
        %v1439 = vmul.f32 %v983, %v1114
        %v1440 = vmul.f32 %v984, %v1118
        %v1441 = vmul.f32 %v985, %v1118
        %v1442 = vmul.f32 %v986, %v1122
        %v1443 = vmul.f32 %v987, %v1122
        %v1444 = vmul.f32 %v988, %v1126
        %v1445 = vmul.f32 %v989, %v1126
        %v1446 = vmul.f32 %v990, %v1130
        %v1447 = vmul.f32 %v991, %v1130
        %v1448 = vmul.f32 %v992, %v1134
        %v1449 = vmul.f32 %v993, %v1134
        %v1450 = vmul.f32 %v994, %v1138
        %v1451 = vmul.f32 %v995, %v1138
        %v1452 = vadd.f32 %v1420, %v1436
        %v1453 = vadd.f32 %v1421, %v1437
        %v1454 = vadd.f32 %v1422, %v1438
        %v1455 = vadd.f32 %v1423, %v1439
        %v1456 = vadd.f32 %v1424, %v1440
        %v1457 = vadd.f32 %v1425, %v1441
        %v1458 = vadd.f32 %v1426, %v1442
        %v1459 = vadd.f32 %v1427, %v1443
        %v1460 = vadd.f32 %v1428, %v1444
        %v1461 = vadd.f32 %v1429, %v1445
        %v1462 = vadd.f32 %v1430, %v1446
        %v1463 = vadd.f32 %v1431, %v1447
        %v1464 = vadd.f32 %v1432, %v1448
        %v1465 = vadd.f32 %v1433, %v1449
        %v1466 = vadd.f32 %v1434, %v1450
        %v1467 = vadd.f32 %v1435, %v1451
        %v1468 = vmax.f32 %v1452, 0.0
        %v1469 = vmax.f32 %v1453, 0.0
        %v1470 = vmax.f32 %v1454, 0.0
        %v1471 = vmax.f32 %v1455, 0.0
        %v1472 = vmax.f32 %v1456, 0.0
        %v1473 = vmax.f32 %v1457, 0.0
        %v1474 = vmax.f32 %v1458, 0.0
        %v1475 = vmax.f32 %v1459, 0.0
        %v1476 = vmax.f32 %v1460, 0.0
        %v1477 = vmax.f32 %v1461, 0.0
        %v1478 = vmax.f32 %v1462, 0.0
        %v1479 = vmax.f32 %v1463, 0.0
        %v1480 = vmax.f32 %v1464, 0.0
        %v1481 = vmax.f32 %v1465, 0.0
        %v1482 = vmax.f32 %v1466, 0.0
        %v1483 = vmax.f32 %v1467, 0.0
        %v1484 = vmul.f32 %v444, %v948
        %v1485 = vmul.f32 %v445, %v949
        %v1486 = vmul.f32 %v446, %v950
        %v1487 = vmul.f32 %v447, %v951
        %v1488 = vmul.f32 %v448, %v952
        %v1489 = vmul.f32 %v449, %v953
        %v1490 = vmul.f32 %v450, %v954
        %v1491 = vmul.f32 %v451, %v955
        %v1492 = vmul.f32 %v452, %v956
        %v1493 = vmul.f32 %v453, %v957
        %v1494 = vmul.f32 %v454, %v958
        %v1495 = vmul.f32 %v455, %v959
        %v1496 = vmul.f32 %v456, %v960
        %v1497 = vmul.f32 %v457, %v961
        %v1498 = vmul.f32 %v458, %v962
        %v1499 = vmul.f32 %v459, %v963
        %v1500 = vmul.f32 %v460, %v964
        %v1501 = vmul.f32 %v461, %v965
        %v1502 = vmul.f32 %v462, %v966
        %v1503 = vmul.f32 %v463, %v967
        %v1504 = vmul.f32 %v464, %v968
        %v1505 = vmul.f32 %v465, %v969
        %v1506 = vmul.f32 %v466, %v970
        %v1507 = vmul.f32 %v467, %v971
        %v1508 = vmul.f32 %v468, %v972
        %v1509 = vmul.f32 %v469, %v973
        %v1510 = vmul.f32 %v470, %v974
        %v1511 = vmul.f32 %v471, %v975
        %v1512 = vmul.f32 %v472, %v976
        %v1513 = vmul.f32 %v473, %v977
        %v1514 = vmul.f32 %v474, %v978
        %v1515 = vmul.f32 %v475, %v979
        %v1516 = vadd.f32 %v1484, %v1500
        %v1517 = vadd.f32 %v1485, %v1501
        %v1518 = vadd.f32 %v1486, %v1502
        %v1519 = vadd.f32 %v1487, %v1503
        %v1520 = vadd.f32 %v1488, %v1504
        %v1521 = vadd.f32 %v1489, %v1505
        %v1522 = vadd.f32 %v1490, %v1506
        %v1523 = vadd.f32 %v1491, %v1507
        %v1524 = vadd.f32 %v1492, %v1508
        %v1525 = vadd.f32 %v1493, %v1509
        %v1526 = vadd.f32 %v1494, %v1510
        %v1527 = vadd.f32 %v1495, %v1511
        %v1528 = vadd.f32 %v1496, %v1512
        %v1529 = vadd.f32 %v1497, %v1513
        %v1530 = vadd.f32 %v1498, %v1514
        %v1531 = vadd.f32 %v1499, %v1515
        %v1532 = vmul.f32 %v476, %v980
        %v1533 = vmul.f32 %v477, %v981
        %v1534 = vmul.f32 %v478, %v982
        %v1535 = vmul.f32 %v479, %v983
        %v1536 = vmul.f32 %v480, %v984
        %v1537 = vmul.f32 %v481, %v985
        %v1538 = vmul.f32 %v482, %v986
        %v1539 = vmul.f32 %v483, %v987
        %v1540 = vmul.f32 %v484, %v988
        %v1541 = vmul.f32 %v485, %v989
        %v1542 = vmul.f32 %v486, %v990
        %v1543 = vmul.f32 %v487, %v991
        %v1544 = vmul.f32 %v488, %v992
        %v1545 = vmul.f32 %v489, %v993
        %v1546 = vmul.f32 %v490, %v994
        %v1547 = vmul.f32 %v491, %v995
        %v1548 = vadd.f32 %v1516, %v1532
        %v1549 = vadd.f32 %v1517, %v1533
        %v1550 = vadd.f32 %v1518, %v1534
        %v1551 = vadd.f32 %v1519, %v1535
        %v1552 = vadd.f32 %v1520, %v1536
        %v1553 = vadd.f32 %v1521, %v1537
        %v1554 = vadd.f32 %v1522, %v1538
        %v1555 = vadd.f32 %v1523, %v1539
        %v1556 = vadd.f32 %v1524, %v1540
        %v1557 = vadd.f32 %v1525, %v1541
        %v1558 = vadd.f32 %v1526, %v1542
        %v1559 = vadd.f32 %v1527, %v1543
        %v1560 = vadd.f32 %v1528, %v1544
        %v1561 = vadd.f32 %v1529, %v1545
        %v1562 = vadd.f32 %v1530, %v1546
        %v1563 = vadd.f32 %v1531, %v1547
        %v1564 = vmax.f32 %v1548, 0.0
        %v1565 = vmax.f32 %v1549, 0.0
        %v1566 = vmax.f32 %v1550, 0.0
        %v1567 = vmax.f32 %v1551, 0.0
        %v1568 = vmax.f32 %v1552, 0.0
        %v1569 = vmax.f32 %v1553, 0.0
        %v1570 = vmax.f32 %v1554, 0.0
        %v1571 = vmax.f32 %v1555, 0.0
        %v1572 = vmax.f32 %v1556, 0.0
        %v1573 = vmax.f32 %v1557, 0.0
        %v1574 = vmax.f32 %v1558, 0.0
        %v1575 = vmax.f32 %v1559, 0.0
        %v1576 = vmax.f32 %v1560, 0.0
        %v1577 = vmax.f32 %v1561, 0.0
        %v1578 = vmax.f32 %v1562, 0.0
        %v1579 = vmax.f32 %v1563, 0.0
        %v1580 = vmax.f32 %v324, 0.04
        %v1581 = vmax.f32 %v325, 0.04
        %v1582 = vmax.f32 %v326, 0.04
        %v1583 = vmax.f32 %v327, 0.04
        %v1584 = vmax.f32 %v328, 0.04
        %v1585 = vmax.f32 %v329, 0.04
        %v1586 = vmax.f32 %v330, 0.04
        %v1587 = vmax.f32 %v331, 0.04
        %v1588 = vmin.f32 %v1580, 1.0
        %v1589 = vmin.f32 %v1581, 1.0
        %v1590 = vmin.f32 %v1582, 1.0
        %v1591 = vmin.f32 %v1583, 1.0
        %v1592 = vmin.f32 %v1584, 1.0
        %v1593 = vmin.f32 %v1585, 1.0
        %v1594 = vmin.f32 %v1586, 1.0
        %v1595 = vmin.f32 %v1587, 1.0
        %v1596 = vmul.f32 %v1588, %v1588
        %v1597 = vmul.f32 %v1589, %v1589
        %v1598 = vmul.f32 %v1590, %v1590
        %v1599 = vmul.f32 %v1591, %v1591
        %v1600 = vmul.f32 %v1592, %v1592
        %v1601 = vmul.f32 %v1593, %v1593
        %v1602 = vmul.f32 %v1594, %v1594
        %v1603 = vmul.f32 %v1595, %v1595
        %v1604 = vmul.f32 %v1596, %v1596
        %v1605 = vmul.f32 %v1597, %v1597
        %v1606 = vmul.f32 %v1598, %v1598
        %v1607 = vmul.f32 %v1599, %v1599
        %v1608 = vmul.f32 %v1600, %v1600
        %v1609 = vmul.f32 %v1601, %v1601
        %v1610 = vmul.f32 %v1602, %v1602
        %v1611 = vmul.f32 %v1603, %v1603
        %v1612 = vsub.f32 1.0, %v1604
        %v1613 = vsub.f32 1.0, %v1605
        %v1614 = vsub.f32 1.0, %v1606
        %v1615 = vsub.f32 1.0, %v1607
        %v1616 = vsub.f32 1.0, %v1608
        %v1617 = vsub.f32 1.0, %v1609
        %v1618 = vsub.f32 1.0, %v1610
        %v1619 = vsub.f32 1.0, %v1611
        %v1620 = vmul.f32 %v1604, 0.07957747
        %v1621 = vmul.f32 %v1605, 0.07957747
        %v1622 = vmul.f32 %v1606, 0.07957747
        %v1623 = vmul.f32 %v1607, 0.07957747
        %v1624 = vmul.f32 %v1608, 0.07957747
        %v1625 = vmul.f32 %v1609, 0.07957747
        %v1626 = vmul.f32 %v1610, 0.07957747
        %v1627 = vmul.f32 %v1611, 0.07957747
        %1629 = vset.pattern.permute.xlu0 6
        %1630 = vperm.xlu0 %1629, %v1596
        %v1631 = vpop.permute.xlu0 %1630
        %1634 = vset.pattern.permute.xlu0 6
        %1635 = vperm.xlu0 %1634, %v1597
        %v1636 = vpop.permute.xlu0 %1635
        %1639 = vset.pattern.permute.xlu0 6
        %1640 = vperm.xlu0 %1639, %v1598
        %v1641 = vpop.permute.xlu0 %1640
        %1644 = vset.pattern.permute.xlu0 6
        %1645 = vperm.xlu0 %1644, %v1599
        %v1646 = vpop.permute.xlu0 %1645
        %1649 = vset.pattern.permute.xlu0 6
        %1650 = vperm.xlu0 %1649, %v1600
        %v1651 = vpop.permute.xlu0 %1650
        %1654 = vset.pattern.permute.xlu0 6
        %1655 = vperm.xlu0 %1654, %v1601
        %v1656 = vpop.permute.xlu0 %1655
        %1659 = vset.pattern.permute.xlu0 6
        %1660 = vperm.xlu0 %1659, %v1602
        %v1661 = vpop.permute.xlu0 %1660
        %1664 = vset.pattern.permute.xlu0 6
        %1665 = vperm.xlu0 %1664, %v1603
        %v1666 = vpop.permute.xlu0 %1665
        %v1668 = vmul.f32 %v1468, %v1631
        %v1669 = vmul.f32 %v1469, %v1631
        %v1670 = vmul.f32 %v1470, %v1636
        %v1671 = vmul.f32 %v1471, %v1636
        %v1672 = vmul.f32 %v1472, %v1641
        %v1673 = vmul.f32 %v1473, %v1641
        %v1674 = vmul.f32 %v1474, %v1646
        %v1675 = vmul.f32 %v1475, %v1646
        %v1676 = vmul.f32 %v1476, %v1651
        %v1677 = vmul.f32 %v1477, %v1651
        %v1678 = vmul.f32 %v1478, %v1656
        %v1679 = vmul.f32 %v1479, %v1656
        %v1680 = vmul.f32 %v1480, %v1661
        %v1681 = vmul.f32 %v1481, %v1661
        %v1682 = vmul.f32 %v1482, %v1666
        %v1683 = vmul.f32 %v1483, %v1666
        %v1684 = vmul.f32 %v1468, %v1468
        %v1685 = vmul.f32 %v1469, %v1469
        %v1686 = vmul.f32 %v1470, %v1470
        %v1687 = vmul.f32 %v1471, %v1471
        %v1688 = vmul.f32 %v1472, %v1472
        %v1689 = vmul.f32 %v1473, %v1473
        %v1690 = vmul.f32 %v1474, %v1474
        %v1691 = vmul.f32 %v1475, %v1475
        %v1692 = vmul.f32 %v1476, %v1476
        %v1693 = vmul.f32 %v1477, %v1477
        %v1694 = vmul.f32 %v1478, %v1478
        %v1695 = vmul.f32 %v1479, %v1479
        %v1696 = vmul.f32 %v1480, %v1480
        %v1697 = vmul.f32 %v1481, %v1481
        %v1698 = vmul.f32 %v1482, %v1482
        %v1699 = vmul.f32 %v1483, %v1483
        %v1700 = vsub.f32 1.0, %v1684
        %v1701 = vsub.f32 1.0, %v1685
        %v1702 = vsub.f32 1.0, %v1686
        %v1703 = vsub.f32 1.0, %v1687
        %v1704 = vsub.f32 1.0, %v1688
        %v1705 = vsub.f32 1.0, %v1689
        %v1706 = vsub.f32 1.0, %v1690
        %v1707 = vsub.f32 1.0, %v1691
        %v1708 = vsub.f32 1.0, %v1692
        %v1709 = vsub.f32 1.0, %v1693
        %v1710 = vsub.f32 1.0, %v1694
        %v1711 = vsub.f32 1.0, %v1695
        %v1712 = vsub.f32 1.0, %v1696
        %v1713 = vsub.f32 1.0, %v1697
        %v1714 = vsub.f32 1.0, %v1698
        %v1715 = vsub.f32 1.0, %v1699
        %v1716 = vmul.f32 %v1668, %v1668
        %v1717 = vmul.f32 %v1669, %v1669
        %v1718 = vmul.f32 %v1670, %v1670
        %v1719 = vmul.f32 %v1671, %v1671
        %v1720 = vmul.f32 %v1672, %v1672
        %v1721 = vmul.f32 %v1673, %v1673
        %v1722 = vmul.f32 %v1674, %v1674
        %v1723 = vmul.f32 %v1675, %v1675
        %v1724 = vmul.f32 %v1676, %v1676
        %v1725 = vmul.f32 %v1677, %v1677
        %v1726 = vmul.f32 %v1678, %v1678
        %v1727 = vmul.f32 %v1679, %v1679
        %v1728 = vmul.f32 %v1680, %v1680
        %v1729 = vmul.f32 %v1681, %v1681
        %v1730 = vmul.f32 %v1682, %v1682
        %v1731 = vmul.f32 %v1683, %v1683
        %v1732 = vadd.f32 %v1700, %v1716
        %v1733 = vadd.f32 %v1701, %v1717
        %v1734 = vadd.f32 %v1702, %v1718
        %v1735 = vadd.f32 %v1703, %v1719
        %v1736 = vadd.f32 %v1704, %v1720
        %v1737 = vadd.f32 %v1705, %v1721
        %v1738 = vadd.f32 %v1706, %v1722
        %v1739 = vadd.f32 %v1707, %v1723
        %v1740 = vadd.f32 %v1708, %v1724
        %v1741 = vadd.f32 %v1709, %v1725
        %v1742 = vadd.f32 %v1710, %v1726
        %v1743 = vadd.f32 %v1711, %v1727
        %v1744 = vadd.f32 %v1712, %v1728
        %v1745 = vadd.f32 %v1713, %v1729
        %v1746 = vadd.f32 %v1714, %v1730
        %v1747 = vadd.f32 %v1715, %v1731
        %v1748 = vmul.f32 %v1380, %v1380
        %v1749 = vmul.f32 %v1381, %v1381
        %v1750 = vmul.f32 %v1382, %v1382
        %v1751 = vmul.f32 %v1383, %v1383
        %v1752 = vmul.f32 %v1384, %v1384
        %v1753 = vmul.f32 %v1385, %v1385
        %v1754 = vmul.f32 %v1386, %v1386
        %v1755 = vmul.f32 %v1387, %v1387
        %1764 = vrot.lane.b32.xlu0 %v1612, 122
        %v1765 = vpop.permute.xlu0 %1764
        %1766 = vrot.lane.b32.xlu0 %v1613, 122
        %v1767 = vpop.permute.xlu0 %1766
        %1768 = vrot.lane.b32.xlu0 %v1614, 122
        %v1769 = vpop.permute.xlu0 %1768
        %1770 = vrot.lane.b32.xlu0 %v1615, 122
        %v1771 = vpop.permute.xlu0 %1770
        %1772 = vrot.lane.b32.xlu0 %v1616, 122
        %v1773 = vpop.permute.xlu0 %1772
        %1774 = vrot.lane.b32.xlu0 %v1617, 122
        %v1775 = vpop.permute.xlu0 %1774
        %1776 = vrot.lane.b32.xlu0 %v1618, 122
        %v1777 = vpop.permute.xlu0 %1776
        %1778 = vrot.lane.b32.xlu0 %v1619, 122
        %v1779 = vpop.permute.xlu0 %1778
        %v1788 = vmul.f32 %v1748, %v1765
        %v1789 = vmul.f32 %v1749, %v1767
        %v1790 = vmul.f32 %v1750, %v1769
        %v1791 = vmul.f32 %v1751, %v1771
        %v1792 = vmul.f32 %v1752, %v1773
        %v1793 = vmul.f32 %v1753, %v1775
        %v1794 = vmul.f32 %v1754, %v1777
        %v1795 = vmul.f32 %v1755, %v1779
        %1804 = vrot.lane.b32.xlu0 %v1604, 122
        %v1805 = vpop.permute.xlu0 %1804
        %1806 = vrot.lane.b32.xlu0 %v1605, 122
        %v1807 = vpop.permute.xlu0 %1806
        %1808 = vrot.lane.b32.xlu0 %v1606, 122
        %v1809 = vpop.permute.xlu0 %1808
        %1810 = vrot.lane.b32.xlu0 %v1607, 122
        %v1811 = vpop.permute.xlu0 %1810
        %1812 = vrot.lane.b32.xlu0 %v1608, 122
        %v1813 = vpop.permute.xlu0 %1812
        %1814 = vrot.lane.b32.xlu0 %v1609, 122
        %v1815 = vpop.permute.xlu0 %1814
        %1816 = vrot.lane.b32.xlu0 %v1610, 122
        %v1817 = vpop.permute.xlu0 %1816
        %1818 = vrot.lane.b32.xlu0 %v1611, 122
        %v1819 = vpop.permute.xlu0 %1818
        %v1828 = vadd.f32 %v1788, %v1805
        %v1829 = vadd.f32 %v1789, %v1807
        %v1830 = vadd.f32 %v1790, %v1809
        %v1831 = vadd.f32 %v1791, %v1811
        %v1832 = vadd.f32 %v1792, %v1813
        %v1833 = vadd.f32 %v1793, %v1815
        %v1834 = vadd.f32 %v1794, %v1817
        %v1835 = vadd.f32 %v1795, %v1819
        %v1836 = vrsqrt.pop %v1828
        %v1837 = vmul.f32 %v1828, %v1836
        %vm1838 = vcmp.eq.f32.partialorder %v1828, inf
        %v1839 = vsel %vm1838, %v1828, %v1837
        %vm1840 = vcmp.eq.f32.partialorder %v1828, 0.0
        %v1841 = vand.u32 %v1828, 2147483648
        %v1842 = vsel %vm1840, %v1841, %v1839
        %v1843 = vrsqrt.pop %v1829
        %v1844 = vmul.f32 %v1829, %v1843
        %vm1845 = vcmp.eq.f32.partialorder %v1829, inf
        %v1846 = vsel %vm1845, %v1829, %v1844
        %vm1847 = vcmp.eq.f32.partialorder %v1829, 0.0
        %v1848 = vand.u32 %v1829, 2147483648
        %v1849 = vsel %vm1847, %v1848, %v1846
        %v1850 = vrsqrt.pop %v1830
        %v1851 = vmul.f32 %v1830, %v1850
        %vm1852 = vcmp.eq.f32.partialorder %v1830, inf
        %v1853 = vsel %vm1852, %v1830, %v1851
        %vm1854 = vcmp.eq.f32.partialorder %v1830, 0.0
        %v1855 = vand.u32 %v1830, 2147483648
        %v1856 = vsel %vm1854, %v1855, %v1853
        %v1857 = vrsqrt.pop %v1831
        %v1858 = vmul.f32 %v1831, %v1857
        %vm1859 = vcmp.eq.f32.partialorder %v1831, inf
        %v1860 = vsel %vm1859, %v1831, %v1858
        %vm1861 = vcmp.eq.f32.partialorder %v1831, 0.0
        %v1862 = vand.u32 %v1831, 2147483648
        %v1863 = vsel %vm1861, %v1862, %v1860
        %v1864 = vrsqrt.pop %v1832
        %v1865 = vmul.f32 %v1832, %v1864
        %vm1866 = vcmp.eq.f32.partialorder %v1832, inf
        %v1867 = vsel %vm1866, %v1832, %v1865
        %vm1868 = vcmp.eq.f32.partialorder %v1832, 0.0
        %v1869 = vand.u32 %v1832, 2147483648
        %v1870 = vsel %vm1868, %v1869, %v1867
        %v1871 = vrsqrt.pop %v1833
        %v1872 = vmul.f32 %v1833, %v1871
        %vm1873 = vcmp.eq.f32.partialorder %v1833, inf
        %v1874 = vsel %vm1873, %v1833, %v1872
        %vm1875 = vcmp.eq.f32.partialorder %v1833, 0.0
        %v1876 = vand.u32 %v1833, 2147483648
        %v1877 = vsel %vm1875, %v1876, %v1874
        %v1878 = vrsqrt.pop %v1834
        %v1879 = vmul.f32 %v1834, %v1878
        %vm1880 = vcmp.eq.f32.partialorder %v1834, inf
        %v1881 = vsel %vm1880, %v1834, %v1879
        %vm1882 = vcmp.eq.f32.partialorder %v1834, 0.0
        %v1883 = vand.u32 %v1834, 2147483648
        %v1884 = vsel %vm1882, %v1883, %v1881
        %v1885 = vrsqrt.pop %v1835
        %v1886 = vmul.f32 %v1835, %v1885
        %vm1887 = vcmp.eq.f32.partialorder %v1835, inf
        %v1888 = vsel %vm1887, %v1835, %v1886
        %vm1889 = vcmp.eq.f32.partialorder %v1835, 0.0
        %v1890 = vand.u32 %v1835, 2147483648
        %v1891 = vsel %vm1889, %v1890, %v1888
        %1893 = vset.pattern.permute.xlu0 0
        %1894 = vperm.xlu0 %1893, %v1842
        %v1895 = vpop.permute.xlu0 %1894
        %1898 = vset.pattern.permute.xlu0 0
        %1899 = vperm.xlu0 %1898, %v1849
        %v1900 = vpop.permute.xlu0 %1899
        %1903 = vset.pattern.permute.xlu0 0
        %1904 = vperm.xlu0 %1903, %v1856
        %v1905 = vpop.permute.xlu0 %1904
        %1908 = vset.pattern.permute.xlu0 0
        %1909 = vperm.xlu0 %1908, %v1863
        %v1910 = vpop.permute.xlu0 %1909
        %1913 = vset.pattern.permute.xlu0 0
        %1914 = vperm.xlu0 %1913, %v1870
        %v1915 = vpop.permute.xlu0 %1914
        %1918 = vset.pattern.permute.xlu0 0
        %1919 = vperm.xlu0 %1918, %v1877
        %v1920 = vpop.permute.xlu0 %1919
        %1923 = vset.pattern.permute.xlu0 0
        %1924 = vperm.xlu0 %1923, %v1884
        %v1925 = vpop.permute.xlu0 %1924
        %1928 = vset.pattern.permute.xlu0 0
        %1929 = vperm.xlu0 %1928, %v1891
        %v1930 = vpop.permute.xlu0 %1929
        %v1932 = vmul.f32 %v1188, %v1895
        %v1933 = vmul.f32 %v1189, %v1895
        %v1934 = vmul.f32 %v1190, %v1900
        %v1935 = vmul.f32 %v1191, %v1900
        %v1936 = vmul.f32 %v1192, %v1905
        %v1937 = vmul.f32 %v1193, %v1905
        %v1938 = vmul.f32 %v1194, %v1910
        %v1939 = vmul.f32 %v1195, %v1910
        %v1940 = vmul.f32 %v1196, %v1915
        %v1941 = vmul.f32 %v1197, %v1915
        %v1942 = vmul.f32 %v1198, %v1920
        %v1943 = vmul.f32 %v1199, %v1920
        %v1944 = vmul.f32 %v1200, %v1925
        %v1945 = vmul.f32 %v1201, %v1925
        %v1946 = vmul.f32 %v1202, %v1930
        %v1947 = vmul.f32 %v1203, %v1930
        %v1948 = vmul.f32 %v1188, %v1188
        %v1949 = vmul.f32 %v1189, %v1189
        %v1950 = vmul.f32 %v1190, %v1190
        %v1951 = vmul.f32 %v1191, %v1191
        %v1952 = vmul.f32 %v1192, %v1192
        %v1953 = vmul.f32 %v1193, %v1193
        %v1954 = vmul.f32 %v1194, %v1194
        %v1955 = vmul.f32 %v1195, %v1195
        %v1956 = vmul.f32 %v1196, %v1196
        %v1957 = vmul.f32 %v1197, %v1197
        %v1958 = vmul.f32 %v1198, %v1198
        %v1959 = vmul.f32 %v1199, %v1199
        %v1960 = vmul.f32 %v1200, %v1200
        %v1961 = vmul.f32 %v1201, %v1201
        %v1962 = vmul.f32 %v1202, %v1202
        %v1963 = vmul.f32 %v1203, %v1203
        %1964 = vset.pattern.permute.xlu0 6
        %1965 = vperm.xlu0 %1964, %v1612
        %v1966 = vpop.permute.xlu0 %1965
        %1968 = vset.pattern.permute.xlu0 6
        %1969 = vperm.xlu0 %1968, %v1613
        %v1970 = vpop.permute.xlu0 %1969
        %1972 = vset.pattern.permute.xlu0 6
        %1973 = vperm.xlu0 %1972, %v1614
        %v1974 = vpop.permute.xlu0 %1973
        %1976 = vset.pattern.permute.xlu0 6
        %1977 = vperm.xlu0 %1976, %v1615
        %v1978 = vpop.permute.xlu0 %1977
        %1980 = vset.pattern.permute.xlu0 6
        %1981 = vperm.xlu0 %1980, %v1616
        %v1982 = vpop.permute.xlu0 %1981
        %1984 = vset.pattern.permute.xlu0 6
        %1985 = vperm.xlu0 %1984, %v1617
        %v1986 = vpop.permute.xlu0 %1985
        %1988 = vset.pattern.permute.xlu0 6
        %1989 = vperm.xlu0 %1988, %v1618
        %v1990 = vpop.permute.xlu0 %1989
        %1992 = vset.pattern.permute.xlu0 6
        %1993 = vperm.xlu0 %1992, %v1619
        %v1994 = vpop.permute.xlu0 %1993
        %v1996 = vmul.f32 %v1948, %v1966
        %v1997 = vmul.f32 %v1949, %v1966
        %v1998 = vmul.f32 %v1950, %v1970
        %v1999 = vmul.f32 %v1951, %v1970
        %v2000 = vmul.f32 %v1952, %v1974
        %v2001 = vmul.f32 %v1953, %v1974
        %v2002 = vmul.f32 %v1954, %v1978
        %v2003 = vmul.f32 %v1955, %v1978
        %v2004 = vmul.f32 %v1956, %v1982
        %v2005 = vmul.f32 %v1957, %v1982
        %v2006 = vmul.f32 %v1958, %v1986
        %v2007 = vmul.f32 %v1959, %v1986
        %v2008 = vmul.f32 %v1960, %v1990
        %v2009 = vmul.f32 %v1961, %v1990
        %v2010 = vmul.f32 %v1962, %v1994
        %v2011 = vmul.f32 %v1963, %v1994
        %2012 = vset.pattern.permute.xlu0 6
        %2013 = vperm.xlu0 %2012, %v1604
        %v2014 = vpop.permute.xlu0 %2013
        %2016 = vset.pattern.permute.xlu0 6
        %2017 = vperm.xlu0 %2016, %v1605
        %v2018 = vpop.permute.xlu0 %2017
        %2020 = vset.pattern.permute.xlu0 6
        %2021 = vperm.xlu0 %2020, %v1606
        %v2022 = vpop.permute.xlu0 %2021
        %2024 = vset.pattern.permute.xlu0 6
        %2025 = vperm.xlu0 %2024, %v1607
        %v2026 = vpop.permute.xlu0 %2025
        %2028 = vset.pattern.permute.xlu0 6
        %2029 = vperm.xlu0 %2028, %v1608
        %v2030 = vpop.permute.xlu0 %2029
        %2032 = vset.pattern.permute.xlu0 6
        %2033 = vperm.xlu0 %2032, %v1609
        %v2034 = vpop.permute.xlu0 %2033
        %2036 = vset.pattern.permute.xlu0 6
        %2037 = vperm.xlu0 %2036, %v1610
        %v2038 = vpop.permute.xlu0 %2037
        %2040 = vset.pattern.permute.xlu0 6
        %2041 = vperm.xlu0 %2040, %v1611
        %v2042 = vpop.permute.xlu0 %2041
        %v2044 = vadd.f32 %v1996, %v2014
        %v2045 = vadd.f32 %v1997, %v2014
        %v2046 = vadd.f32 %v1998, %v2018
        %v2047 = vadd.f32 %v1999, %v2018
        %v2048 = vadd.f32 %v2000, %v2022
        %v2049 = vadd.f32 %v2001, %v2022
        %v2050 = vadd.f32 %v2002, %v2026
        %v2051 = vadd.f32 %v2003, %v2026
        %v2052 = vadd.f32 %v2004, %v2030
        %v2053 = vadd.f32 %v2005, %v2030
        %v2054 = vadd.f32 %v2006, %v2034
        %v2055 = vadd.f32 %v2007, %v2034
        %v2056 = vadd.f32 %v2008, %v2038
        %v2057 = vadd.f32 %v2009, %v2038
        %v2058 = vadd.f32 %v2010, %v2042
        %v2059 = vadd.f32 %v2011, %v2042
        %v2060 = vrsqrt.pop %v2044
        %v2061 = vmul.f32 %v2044, %v2060
        %vm2062 = vcmp.eq.f32.partialorder %v2044, inf
        %v2063 = vsel %vm2062, %v2044, %v2061
        %vm2064 = vcmp.eq.f32.partialorder %v2044, 0.0
        %v2065 = vand.u32 %v2044, 2147483648
        %v2066 = vsel %vm2064, %v2065, %v2063
        %v2067 = vrsqrt.pop %v2045
        %v2068 = vmul.f32 %v2045, %v2067
        %vm2069 = vcmp.eq.f32.partialorder %v2045, inf
        %v2070 = vsel %vm2069, %v2045, %v2068
        %vm2071 = vcmp.eq.f32.partialorder %v2045, 0.0
        %v2072 = vand.u32 %v2045, 2147483648
        %v2073 = vsel %vm2071, %v2072, %v2070
        %v2074 = vrsqrt.pop %v2046
        %v2075 = vmul.f32 %v2046, %v2074
        %vm2076 = vcmp.eq.f32.partialorder %v2046, inf
        %v2077 = vsel %vm2076, %v2046, %v2075
        %vm2078 = vcmp.eq.f32.partialorder %v2046, 0.0
        %v2079 = vand.u32 %v2046, 2147483648
        %v2080 = vsel %vm2078, %v2079, %v2077
        %v2081 = vrsqrt.pop %v2047
        %v2082 = vmul.f32 %v2047, %v2081
        %vm2083 = vcmp.eq.f32.partialorder %v2047, inf
        %v2084 = vsel %vm2083, %v2047, %v2082
        %vm2085 = vcmp.eq.f32.partialorder %v2047, 0.0
        %v2086 = vand.u32 %v2047, 2147483648
        %v2087 = vsel %vm2085, %v2086, %v2084
        %v2088 = vrsqrt.pop %v2048
        %v2089 = vmul.f32 %v2048, %v2088
        %vm2090 = vcmp.eq.f32.partialorder %v2048, inf
        %v2091 = vsel %vm2090, %v2048, %v2089
        %vm2092 = vcmp.eq.f32.partialorder %v2048, 0.0
        %v2093 = vand.u32 %v2048, 2147483648
        %v2094 = vsel %vm2092, %v2093, %v2091
        %v2095 = vrsqrt.pop %v2049
        %v2096 = vmul.f32 %v2049, %v2095
        %vm2097 = vcmp.eq.f32.partialorder %v2049, inf
        %v2098 = vsel %vm2097, %v2049, %v2096
        %vm2099 = vcmp.eq.f32.partialorder %v2049, 0.0
        %v2100 = vand.u32 %v2049, 2147483648
        %v2101 = vsel %vm2099, %v2100, %v2098
        %v2102 = vrsqrt.pop %v2050
        %v2103 = vmul.f32 %v2050, %v2102
        %vm2104 = vcmp.eq.f32.partialorder %v2050, inf
        %v2105 = vsel %vm2104, %v2050, %v2103
        %vm2106 = vcmp.eq.f32.partialorder %v2050, 0.0
        %v2107 = vand.u32 %v2050, 2147483648
        %v2108 = vsel %vm2106, %v2107, %v2105
        %v2109 = vrsqrt.pop %v2051
        %v2110 = vmul.f32 %v2051, %v2109
        %vm2111 = vcmp.eq.f32.partialorder %v2051, inf
        %v2112 = vsel %vm2111, %v2051, %v2110
        %vm2113 = vcmp.eq.f32.partialorder %v2051, 0.0
        %v2114 = vand.u32 %v2051, 2147483648
        %v2115 = vsel %vm2113, %v2114, %v2112
        %v2116 = vrsqrt.pop %v2052
        %v2117 = vmul.f32 %v2052, %v2116
        %vm2118 = vcmp.eq.f32.partialorder %v2052, inf
        %v2119 = vsel %vm2118, %v2052, %v2117
        %vm2120 = vcmp.eq.f32.partialorder %v2052, 0.0
        %v2121 = vand.u32 %v2052, 2147483648
        %v2122 = vsel %vm2120, %v2121, %v2119
        %v2123 = vrsqrt.pop %v2053
        %v2124 = vmul.f32 %v2053, %v2123
        %vm2125 = vcmp.eq.f32.partialorder %v2053, inf
        %v2126 = vsel %vm2125, %v2053, %v2124
        %vm2127 = vcmp.eq.f32.partialorder %v2053, 0.0
        %v2128 = vand.u32 %v2053, 2147483648
        %v2129 = vsel %vm2127, %v2128, %v2126
        %v2130 = vrsqrt.pop %v2054
        %v2131 = vmul.f32 %v2054, %v2130
        %vm2132 = vcmp.eq.f32.partialorder %v2054, inf
        %v2133 = vsel %vm2132, %v2054, %v2131
        %vm2134 = vcmp.eq.f32.partialorder %v2054, 0.0
        %v2135 = vand.u32 %v2054, 2147483648
        %v2136 = vsel %vm2134, %v2135, %v2133
        %v2137 = vrsqrt.pop %v2055
        %v2138 = vmul.f32 %v2055, %v2137
        %vm2139 = vcmp.eq.f32.partialorder %v2055, inf
        %v2140 = vsel %vm2139, %v2055, %v2138
        %vm2141 = vcmp.eq.f32.partialorder %v2055, 0.0
        %v2142 = vand.u32 %v2055, 2147483648
        %v2143 = vsel %vm2141, %v2142, %v2140
        %v2144 = vrsqrt.pop %v2056
        %v2145 = vmul.f32 %v2056, %v2144
        %vm2146 = vcmp.eq.f32.partialorder %v2056, inf
        %v2147 = vsel %vm2146, %v2056, %v2145
        %vm2148 = vcmp.eq.f32.partialorder %v2056, 0.0
        %v2149 = vand.u32 %v2056, 2147483648
        %v2150 = vsel %vm2148, %v2149, %v2147
        %v2151 = vrsqrt.pop %v2057
        %v2152 = vmul.f32 %v2057, %v2151
        %vm2153 = vcmp.eq.f32.partialorder %v2057, inf
        %v2154 = vsel %vm2153, %v2057, %v2152
        %vm2155 = vcmp.eq.f32.partialorder %v2057, 0.0
        %v2156 = vand.u32 %v2057, 2147483648
        %v2157 = vsel %vm2155, %v2156, %v2154
        %v2158 = vrsqrt.pop %v2058
        %v2159 = vmul.f32 %v2058, %v2158
        %vm2160 = vcmp.eq.f32.partialorder %v2058, inf
        %v2161 = vsel %vm2160, %v2058, %v2159
        %vm2162 = vcmp.eq.f32.partialorder %v2058, 0.0
        %v2163 = vand.u32 %v2058, 2147483648
        %v2164 = vsel %vm2162, %v2163, %v2161
        %v2165 = vrsqrt.pop %v2059
        %v2166 = vmul.f32 %v2059, %v2165
        %vm2167 = vcmp.eq.f32.partialorder %v2059, inf
        %v2168 = vsel %vm2167, %v2059, %v2166
        %vm2169 = vcmp.eq.f32.partialorder %v2059, 0.0
        %v2170 = vand.u32 %v2059, 2147483648
        %v2171 = vsel %vm2169, %v2170, %v2168
        %2173 = vset.pattern.permute.xlu0 0
        %2174 = vperm.xlu0 %2173, %v1380
        %v2175 = vpop.permute.xlu0 %2174
        %2178 = vset.pattern.permute.xlu0 0
        %2179 = vperm.xlu0 %2178, %v1381
        %v2180 = vpop.permute.xlu0 %2179
        %2183 = vset.pattern.permute.xlu0 0
        %2184 = vperm.xlu0 %2183, %v1382
        %v2185 = vpop.permute.xlu0 %2184
        %2188 = vset.pattern.permute.xlu0 0
        %2189 = vperm.xlu0 %2188, %v1383
        %v2190 = vpop.permute.xlu0 %2189
        %2193 = vset.pattern.permute.xlu0 0
        %2194 = vperm.xlu0 %2193, %v1384
        %v2195 = vpop.permute.xlu0 %2194
        %2198 = vset.pattern.permute.xlu0 0
        %2199 = vperm.xlu0 %2198, %v1385
        %v2200 = vpop.permute.xlu0 %2199
        %2203 = vset.pattern.permute.xlu0 0
        %2204 = vperm.xlu0 %2203, %v1386
        %v2205 = vpop.permute.xlu0 %2204
        %2208 = vset.pattern.permute.xlu0 0
        %2209 = vperm.xlu0 %2208, %v1387
        %v2210 = vpop.permute.xlu0 %2209
        %v2212 = vmul.f32 %v2175, %v2066
        %v2213 = vmul.f32 %v2175, %v2073
        %v2214 = vmul.f32 %v2180, %v2080
        %v2215 = vmul.f32 %v2180, %v2087
        %v2216 = vmul.f32 %v2185, %v2094
        %v2217 = vmul.f32 %v2185, %v2101
        %v2218 = vmul.f32 %v2190, %v2108
        %v2219 = vmul.f32 %v2190, %v2115
        %v2220 = vmul.f32 %v2195, %v2122
        %v2221 = vmul.f32 %v2195, %v2129
        %v2222 = vmul.f32 %v2200, %v2136
        %v2223 = vmul.f32 %v2200, %v2143
        %v2224 = vmul.f32 %v2205, %v2150
        %v2225 = vmul.f32 %v2205, %v2157
        %v2226 = vmul.f32 %v2210, %v2164
        %v2227 = vmul.f32 %v2210, %v2171
        %v2228 = vmul.f32 %v1732, %v1732
        %v2229 = vmul.f32 %v1733, %v1733
        %v2230 = vmul.f32 %v1734, %v1734
        %v2231 = vmul.f32 %v1735, %v1735
        %v2232 = vmul.f32 %v1736, %v1736
        %v2233 = vmul.f32 %v1737, %v1737
        %v2234 = vmul.f32 %v1738, %v1738
        %v2235 = vmul.f32 %v1739, %v1739
        %v2236 = vmul.f32 %v1740, %v1740
        %v2237 = vmul.f32 %v1741, %v1741
        %v2238 = vmul.f32 %v1742, %v1742
        %v2239 = vmul.f32 %v1743, %v1743
        %v2240 = vmul.f32 %v1744, %v1744
        %v2241 = vmul.f32 %v1745, %v1745
        %v2242 = vmul.f32 %v1746, %v1746
        %v2243 = vmul.f32 %v1747, %v1747
        %v2244 = vadd.f32 %v1932, %v2212
        %v2245 = vadd.f32 %v1933, %v2213
        %v2246 = vadd.f32 %v1934, %v2214
        %v2247 = vadd.f32 %v1935, %v2215
        %v2248 = vadd.f32 %v1936, %v2216
        %v2249 = vadd.f32 %v1937, %v2217
        %v2250 = vadd.f32 %v1938, %v2218
        %v2251 = vadd.f32 %v1939, %v2219
        %v2252 = vadd.f32 %v1940, %v2220
        %v2253 = vadd.f32 %v1941, %v2221
        %v2254 = vadd.f32 %v1942, %v2222
        %v2255 = vadd.f32 %v1943, %v2223
        %v2256 = vadd.f32 %v1944, %v2224
        %v2257 = vadd.f32 %v1945, %v2225
        %v2258 = vadd.f32 %v1946, %v2226
        %v2259 = vadd.f32 %v1947, %v2227
        %v2260 = vmul.f32 %v2228, %v2244
        %v2261 = vmul.f32 %v2229, %v2245
        %v2262 = vmul.f32 %v2230, %v2246
        %v2263 = vmul.f32 %v2231, %v2247
        %v2264 = vmul.f32 %v2232, %v2248
        %v2265 = vmul.f32 %v2233, %v2249
        %v2266 = vmul.f32 %v2234, %v2250
        %v2267 = vmul.f32 %v2235, %v2251
        %v2268 = vmul.f32 %v2236, %v2252
        %v2269 = vmul.f32 %v2237, %v2253
        %v2270 = vmul.f32 %v2238, %v2254
        %v2271 = vmul.f32 %v2239, %v2255
        %v2272 = vmul.f32 %v2240, %v2256
        %v2273 = vmul.f32 %v2241, %v2257
        %v2274 = vmul.f32 %v2242, %v2258
        %v2275 = vmul.f32 %v2243, %v2259
        %v2276 = vrcp.pop %v2260
        %v2277 = vrcp.pop %v2261
        %v2278 = vrcp.pop %v2262
        %v2279 = vrcp.pop %v2263
        %v2280 = vrcp.pop %v2264
        %v2281 = vrcp.pop %v2265
        %v2282 = vrcp.pop %v2266
        %v2283 = vrcp.pop %v2267
        %v2284 = vrcp.pop %v2268
        %v2285 = vrcp.pop %v2269
        %v2286 = vrcp.pop %v2270
        %v2287 = vrcp.pop %v2271
        %v2288 = vrcp.pop %v2272
        %v2289 = vrcp.pop %v2273
        %v2290 = vrcp.pop %v2274
        %v2291 = vrcp.pop %v2275
        %v2292 = vmul.f32 %v2260, %v2276
        %v2293 = vmul.f32 %v2261, %v2277
        %v2294 = vmul.f32 %v2262, %v2278
        %v2295 = vmul.f32 %v2263, %v2279
        %v2296 = vmul.f32 %v2264, %v2280
        %v2297 = vmul.f32 %v2265, %v2281
        %v2298 = vmul.f32 %v2266, %v2282
        %v2299 = vmul.f32 %v2267, %v2283
        %v2300 = vmul.f32 %v2268, %v2284
        %v2301 = vmul.f32 %v2269, %v2285
        %v2302 = vmul.f32 %v2270, %v2286
        %v2303 = vmul.f32 %v2271, %v2287
        %v2304 = vmul.f32 %v2272, %v2288
        %v2305 = vmul.f32 %v2273, %v2289
        %v2306 = vmul.f32 %v2274, %v2290
        %v2307 = vmul.f32 %v2275, %v2291
        %v2308 = vsub.f32 2.0, %v2292
        %v2309 = vsub.f32 2.0, %v2293
        %v2310 = vsub.f32 2.0, %v2294
        %v2311 = vsub.f32 2.0, %v2295
        %v2312 = vsub.f32 2.0, %v2296
        %v2313 = vsub.f32 2.0, %v2297
        %v2314 = vsub.f32 2.0, %v2298
        %v2315 = vsub.f32 2.0, %v2299
        %v2316 = vsub.f32 2.0, %v2300
        %v2317 = vsub.f32 2.0, %v2301
        %v2318 = vsub.f32 2.0, %v2302
        %v2319 = vsub.f32 2.0, %v2303
        %v2320 = vsub.f32 2.0, %v2304
        %v2321 = vsub.f32 2.0, %v2305
        %v2322 = vsub.f32 2.0, %v2306
        %v2323 = vsub.f32 2.0, %v2307
        %v2324 = vmul.f32 %v2276, %v2308
        %v2325 = vmul.f32 %v2277, %v2309
        %v2326 = vmul.f32 %v2278, %v2310
        %v2327 = vmul.f32 %v2279, %v2311
        %v2328 = vmul.f32 %v2280, %v2312
        %v2329 = vmul.f32 %v2281, %v2313
        %v2330 = vmul.f32 %v2282, %v2314
        %v2331 = vmul.f32 %v2283, %v2315
        %v2332 = vmul.f32 %v2284, %v2316
        %v2333 = vmul.f32 %v2285, %v2317
        %v2334 = vmul.f32 %v2286, %v2318
        %v2335 = vmul.f32 %v2287, %v2319
        %v2336 = vmul.f32 %v2288, %v2320
        %v2337 = vmul.f32 %v2289, %v2321
        %v2338 = vmul.f32 %v2290, %v2322
        %v2339 = vmul.f32 %v2291, %v2323
        %2341 = vset.pattern.permute.xlu0 6
        %2342 = vperm.xlu0 %2341, %v1620
        %v2343 = vpop.permute.xlu0 %2342
        %2346 = vset.pattern.permute.xlu0 6
        %2347 = vperm.xlu0 %2346, %v1621
        %v2348 = vpop.permute.xlu0 %2347
        %2351 = vset.pattern.permute.xlu0 6
        %2352 = vperm.xlu0 %2351, %v1622
        %v2353 = vpop.permute.xlu0 %2352
        %2356 = vset.pattern.permute.xlu0 6
        %2357 = vperm.xlu0 %2356, %v1623
        %v2358 = vpop.permute.xlu0 %2357
        %2361 = vset.pattern.permute.xlu0 6
        %2362 = vperm.xlu0 %2361, %v1624
        %v2363 = vpop.permute.xlu0 %2362
        %2366 = vset.pattern.permute.xlu0 6
        %2367 = vperm.xlu0 %2366, %v1625
        %v2368 = vpop.permute.xlu0 %2367
        %2371 = vset.pattern.permute.xlu0 6
        %2372 = vperm.xlu0 %2371, %v1626
        %v2373 = vpop.permute.xlu0 %2372
        %2376 = vset.pattern.permute.xlu0 6
        %2377 = vperm.xlu0 %2376, %v1627
        %v2378 = vpop.permute.xlu0 %2377
        %v2380 = vmul.f32 %v2343, %v2324
        %v2381 = vmul.f32 %v2343, %v2325
        %v2382 = vmul.f32 %v2348, %v2326
        %v2383 = vmul.f32 %v2348, %v2327
        %v2384 = vmul.f32 %v2353, %v2328
        %v2385 = vmul.f32 %v2353, %v2329
        %v2386 = vmul.f32 %v2358, %v2330
        %v2387 = vmul.f32 %v2358, %v2331
        %v2388 = vmul.f32 %v2363, %v2332
        %v2389 = vmul.f32 %v2363, %v2333
        %v2390 = vmul.f32 %v2368, %v2334
        %v2391 = vmul.f32 %v2368, %v2335
        %v2392 = vmul.f32 %v2373, %v2336
        %v2393 = vmul.f32 %v2373, %v2337
        %v2394 = vmul.f32 %v2378, %v2338
        %v2395 = vmul.f32 %v2378, %v2339
        %v2396 = vsub.f32 1.0, %v1564
        %v2397 = vsub.f32 1.0, %v1565
        %v2398 = vsub.f32 1.0, %v1566
        %v2399 = vsub.f32 1.0, %v1567
        %v2400 = vsub.f32 1.0, %v1568
        %v2401 = vsub.f32 1.0, %v1569
        %v2402 = vsub.f32 1.0, %v1570
        %v2403 = vsub.f32 1.0, %v1571
        %v2404 = vsub.f32 1.0, %v1572
        %v2405 = vsub.f32 1.0, %v1573
        %v2406 = vsub.f32 1.0, %v1574
        %v2407 = vsub.f32 1.0, %v1575
        %v2408 = vsub.f32 1.0, %v1576
        %v2409 = vsub.f32 1.0, %v1577
        %v2410 = vsub.f32 1.0, %v1578
        %v2411 = vsub.f32 1.0, %v1579
        %v2412 = vmul.f32 %v2396, %v2396
        %v2413 = vmul.f32 %v2397, %v2397
        %v2414 = vmul.f32 %v2398, %v2398
        %v2415 = vmul.f32 %v2399, %v2399
        %v2416 = vmul.f32 %v2400, %v2400
        %v2417 = vmul.f32 %v2401, %v2401
        %v2418 = vmul.f32 %v2402, %v2402
        %v2419 = vmul.f32 %v2403, %v2403
        %v2420 = vmul.f32 %v2404, %v2404
        %v2421 = vmul.f32 %v2405, %v2405
        %v2422 = vmul.f32 %v2406, %v2406
        %v2423 = vmul.f32 %v2407, %v2407
        %v2424 = vmul.f32 %v2408, %v2408
        %v2425 = vmul.f32 %v2409, %v2409
        %v2426 = vmul.f32 %v2410, %v2410
        %v2427 = vmul.f32 %v2411, %v2411
        %v2428 = vmul.f32 %v2412, %v2412
        %v2429 = vmul.f32 %v2413, %v2413
        %v2430 = vmul.f32 %v2414, %v2414
        %v2431 = vmul.f32 %v2415, %v2415
        %v2432 = vmul.f32 %v2416, %v2416
        %v2433 = vmul.f32 %v2417, %v2417
        %v2434 = vmul.f32 %v2418, %v2418
        %v2435 = vmul.f32 %v2419, %v2419
        %v2436 = vmul.f32 %v2420, %v2420
        %v2437 = vmul.f32 %v2421, %v2421
        %v2438 = vmul.f32 %v2422, %v2422
        %v2439 = vmul.f32 %v2423, %v2423
        %v2440 = vmul.f32 %v2424, %v2424
        %v2441 = vmul.f32 %v2425, %v2425
        %v2442 = vmul.f32 %v2426, %v2426
        %v2443 = vmul.f32 %v2427, %v2427
        %v2444 = vmul.f32 %v2428, %v2396
        %v2445 = vmul.f32 %v2429, %v2397
        %v2446 = vmul.f32 %v2430, %v2398
        %v2447 = vmul.f32 %v2431, %v2399
        %v2448 = vmul.f32 %v2432, %v2400
        %v2449 = vmul.f32 %v2433, %v2401
        %v2450 = vmul.f32 %v2434, %v2402
        %v2451 = vmul.f32 %v2435, %v2403
        %v2452 = vmul.f32 %v2436, %v2404
        %v2453 = vmul.f32 %v2437, %v2405
        %v2454 = vmul.f32 %v2438, %v2406
        %v2455 = vmul.f32 %v2439, %v2407
        %v2456 = vmul.f32 %v2440, %v2408
        %v2457 = vmul.f32 %v2441, %v2409
        %v2458 = vmul.f32 %v2442, %v2410
        %v2459 = vmul.f32 %v2443, %v2411
        %v2460 = vsub.f32 1.0, %v2444
        %v2461 = vsub.f32 1.0, %v2445
        %v2462 = vsub.f32 1.0, %v2446
        %v2463 = vsub.f32 1.0, %v2447
        %v2464 = vsub.f32 1.0, %v2448
        %v2465 = vsub.f32 1.0, %v2449
        %v2466 = vsub.f32 1.0, %v2450
        %v2467 = vsub.f32 1.0, %v2451
        %v2468 = vsub.f32 1.0, %v2452
        %v2469 = vsub.f32 1.0, %v2453
        %v2470 = vsub.f32 1.0, %v2454
        %v2471 = vsub.f32 1.0, %v2455
        %v2472 = vsub.f32 1.0, %v2456
        %v2473 = vsub.f32 1.0, %v2457
        %v2474 = vsub.f32 1.0, %v2458
        %v2475 = vsub.f32 1.0, %v2459
        %v2476 = vmul.f32 %v2444, %v2380
        %v2477 = vmul.f32 %v2445, %v2381
        %v2478 = vmul.f32 %v2446, %v2382
        %v2479 = vmul.f32 %v2447, %v2383
        %v2480 = vmul.f32 %v2448, %v2384
        %v2481 = vmul.f32 %v2449, %v2385
        %v2482 = vmul.f32 %v2450, %v2386
        %v2483 = vmul.f32 %v2451, %v2387
        %v2484 = vmul.f32 %v2452, %v2388
        %v2485 = vmul.f32 %v2453, %v2389
        %v2486 = vmul.f32 %v2454, %v2390
        %v2487 = vmul.f32 %v2455, %v2391
        %v2488 = vmul.f32 %v2456, %v2392
        %v2489 = vmul.f32 %v2457, %v2393
        %v2490 = vmul.f32 %v2458, %v2394
        %v2491 = vmul.f32 %v2459, %v2395
        %v2492 = vsub.f32 1.0, %v324
        %v2493 = vsub.f32 1.0, %v325
        %v2494 = vsub.f32 1.0, %v326
        %v2495 = vsub.f32 1.0, %v327
        %v2496 = vsub.f32 1.0, %v328
        %v2497 = vsub.f32 1.0, %v329
        %v2498 = vsub.f32 1.0, %v330
        %v2499 = vsub.f32 1.0, %v331
        %2508 = vrot.lane.b32.xlu0 %v2492, 3
        %v2509 = vpop.permute.xlu0 %2508
        %2510 = vrot.lane.b32.xlu0 %v2493, 3
        %v2511 = vpop.permute.xlu0 %2510
        %2512 = vrot.lane.b32.xlu0 %v2494, 3
        %v2513 = vpop.permute.xlu0 %2512
        %2514 = vrot.lane.b32.xlu0 %v2495, 3
        %v2515 = vpop.permute.xlu0 %2514
        %2516 = vrot.lane.b32.xlu0 %v2496, 3
        %v2517 = vpop.permute.xlu0 %2516
        %2518 = vrot.lane.b32.xlu0 %v2497, 3
        %v2519 = vpop.permute.xlu0 %2518
        %2520 = vrot.lane.b32.xlu0 %v2498, 3
        %v2521 = vpop.permute.xlu0 %2520
        %2522 = vrot.lane.b32.xlu0 %v2499, 3
        %v2523 = vpop.permute.xlu0 %2522
        %v2532 = vmul.f32 %v324, %v2509
        %v2533 = vmul.f32 %v325, %v2511
        %v2534 = vmul.f32 %v326, %v2513
        %v2535 = vmul.f32 %v327, %v2515
        %v2536 = vmul.f32 %v328, %v2517
        %v2537 = vmul.f32 %v329, %v2519
        %v2538 = vmul.f32 %v330, %v2521
        %v2539 = vmul.f32 %v331, %v2523
        %2541 = vset.pattern.permute.xlu0 7
        %2542 = vperm.xlu0 %2541, %v324
        %v2543 = vpop.permute.xlu0 %2542
        %2546 = vset.pattern.permute.xlu0 7
        %2547 = vperm.xlu0 %2546, %v325
        %v2548 = vpop.permute.xlu0 %2547
        %2551 = vset.pattern.permute.xlu0 7
        %2552 = vperm.xlu0 %2551, %v326
        %v2553 = vpop.permute.xlu0 %2552
        %2556 = vset.pattern.permute.xlu0 7
        %2557 = vperm.xlu0 %2556, %v327
        %v2558 = vpop.permute.xlu0 %2557
        %2561 = vset.pattern.permute.xlu0 7
        %2562 = vperm.xlu0 %2561, %v328
        %v2563 = vpop.permute.xlu0 %2562
        %2566 = vset.pattern.permute.xlu0 7
        %2567 = vperm.xlu0 %2566, %v329
        %v2568 = vpop.permute.xlu0 %2567
        %2571 = vset.pattern.permute.xlu0 7
        %2572 = vperm.xlu0 %2571, %v330
        %v2573 = vpop.permute.xlu0 %2572
        %2576 = vset.pattern.permute.xlu0 7
        %2577 = vperm.xlu0 %2576, %v331
        %v2578 = vpop.permute.xlu0 %2577
        %v2580 = vmul.f32 %v2543, %v2380
        %v2581 = vmul.f32 %v2543, %v2381
        %v2582 = vmul.f32 %v2548, %v2382
        %v2583 = vmul.f32 %v2548, %v2383
        %v2584 = vmul.f32 %v2553, %v2384
        %v2585 = vmul.f32 %v2553, %v2385
        %v2586 = vmul.f32 %v2558, %v2386
        %v2587 = vmul.f32 %v2558, %v2387
        %v2588 = vmul.f32 %v2563, %v2388
        %v2589 = vmul.f32 %v2563, %v2389
        %v2590 = vmul.f32 %v2568, %v2390
        %v2591 = vmul.f32 %v2568, %v2391
        %v2592 = vmul.f32 %v2573, %v2392
        %v2593 = vmul.f32 %v2573, %v2393
        %v2594 = vmul.f32 %v2578, %v2394
        %v2595 = vmul.f32 %v2578, %v2395
        %2596 = vset.pattern.permute.xlu0 7
        %2597 = vperm.xlu0 %2596, %v2492
        %v2598 = vpop.permute.xlu0 %2597
        %2600 = vset.pattern.permute.xlu0 7
        %2601 = vperm.xlu0 %2600, %v2493
        %v2602 = vpop.permute.xlu0 %2601
        %2604 = vset.pattern.permute.xlu0 7
        %2605 = vperm.xlu0 %2604, %v2494
        %v2606 = vpop.permute.xlu0 %2605
        %2608 = vset.pattern.permute.xlu0 7
        %2609 = vperm.xlu0 %2608, %v2495
        %v2610 = vpop.permute.xlu0 %2609
        %2612 = vset.pattern.permute.xlu0 7
        %2613 = vperm.xlu0 %2612, %v2496
        %v2614 = vpop.permute.xlu0 %2613
        %2616 = vset.pattern.permute.xlu0 7
        %2617 = vperm.xlu0 %2616, %v2497
        %v2618 = vpop.permute.xlu0 %2617
        %2620 = vset.pattern.permute.xlu0 7
        %2621 = vperm.xlu0 %2620, %v2498
        %v2622 = vpop.permute.xlu0 %2621
        %2624 = vset.pattern.permute.xlu0 7
        %2625 = vperm.xlu0 %2624, %v2499
        %v2626 = vpop.permute.xlu0 %2625
        %v2628 = vmul.f32 %v2598, %v2476
        %v2629 = vmul.f32 %v2598, %v2477
        %v2630 = vmul.f32 %v2602, %v2478
        %v2631 = vmul.f32 %v2602, %v2479
        %v2632 = vmul.f32 %v2606, %v2480
        %v2633 = vmul.f32 %v2606, %v2481
        %v2634 = vmul.f32 %v2610, %v2482
        %v2635 = vmul.f32 %v2610, %v2483
        %v2636 = vmul.f32 %v2614, %v2484
        %v2637 = vmul.f32 %v2614, %v2485
        %v2638 = vmul.f32 %v2618, %v2486
        %v2639 = vmul.f32 %v2618, %v2487
        %v2640 = vmul.f32 %v2622, %v2488
        %v2641 = vmul.f32 %v2622, %v2489
        %v2642 = vmul.f32 %v2626, %v2490
        %v2643 = vmul.f32 %v2626, %v2491
        %v2644 = vadd.f32 %v2580, %v2628
        %v2645 = vadd.f32 %v2581, %v2629
        %v2646 = vadd.f32 %v2582, %v2630
        %v2647 = vadd.f32 %v2583, %v2631
        %v2648 = vadd.f32 %v2584, %v2632
        %v2649 = vadd.f32 %v2585, %v2633
        %v2650 = vadd.f32 %v2586, %v2634
        %v2651 = vadd.f32 %v2587, %v2635
        %v2652 = vadd.f32 %v2588, %v2636
        %v2653 = vadd.f32 %v2589, %v2637
        %v2654 = vadd.f32 %v2590, %v2638
        %v2655 = vadd.f32 %v2591, %v2639
        %v2656 = vadd.f32 %v2592, %v2640
        %v2657 = vadd.f32 %v2593, %v2641
        %v2658 = vadd.f32 %v2594, %v2642
        %v2659 = vadd.f32 %v2595, %v2643
        %2660 = vst [vmem:[%s261] sm:$0xff] %v2644
        %2661 = vst [vmem:[%s261 + $0x8] sm:$0xff] %v2645
        %2662 = vst [vmem:[%s261 + $0x10] sm:$0xff] %v2646
        %2663 = vst [vmem:[%s261 + $0x18] sm:$0xff] %v2647
        %2664 = vst [vmem:[%s261 + $0x20] sm:$0xff] %v2648
        %2665 = vst [vmem:[%s261 + $0x28] sm:$0xff] %v2649
        %2666 = vst [vmem:[%s261 + $0x30] sm:$0xff] %v2650
        %2667 = vst [vmem:[%s261 + $0x38] sm:$0xff] %v2651
        %2668 = vst [vmem:[%s261 + $0x40] sm:$0xff] %v2652
        %2669 = vst [vmem:[%s261 + $0x48] sm:$0xff] %v2653
        %2670 = vst [vmem:[%s261 + $0x50] sm:$0xff] %v2654
        %2671 = vst [vmem:[%s261 + $0x58] sm:$0xff] %v2655
        %2672 = vst [vmem:[%s261 + $0x60] sm:$0xff] %v2656
        %2673 = vst [vmem:[%s261 + $0x68] sm:$0xff] %v2657
        %2674 = vst [vmem:[%s261 + $0x70] sm:$0xff] %v2658
        %2675 = vst [vmem:[%s261 + $0x78] sm:$0xff] %v2659
        %2677 = vset.pattern.permute.xlu0 10
        %2678 = vperm.xlu0 %2677, %v2532
        %v2679 = vpop.permute.xlu0 %2678
        %2682 = vset.pattern.permute.xlu0 10
        %2683 = vperm.xlu0 %2682, %v2533
        %v2684 = vpop.permute.xlu0 %2683
        %2687 = vset.pattern.permute.xlu0 10
        %2688 = vperm.xlu0 %2687, %v2534
        %v2689 = vpop.permute.xlu0 %2688
        %2692 = vset.pattern.permute.xlu0 10
        %2693 = vperm.xlu0 %2692, %v2535
        %v2694 = vpop.permute.xlu0 %2693
        %2697 = vset.pattern.permute.xlu0 10
        %2698 = vperm.xlu0 %2697, %v2536
        %v2699 = vpop.permute.xlu0 %2698
        %2702 = vset.pattern.permute.xlu0 10
        %2703 = vperm.xlu0 %2702, %v2537
        %v2704 = vpop.permute.xlu0 %2703
        %2707 = vset.pattern.permute.xlu0 10
        %2708 = vperm.xlu0 %2707, %v2538
        %v2709 = vpop.permute.xlu0 %2708
        %2712 = vset.pattern.permute.xlu0 10
        %2713 = vperm.xlu0 %2712, %v2539
        %v2714 = vpop.permute.xlu0 %2713
        %v2716 = vmul.f32 %v2679, %v2460
        %v2717 = vmul.f32 %v2679, %v2461
        %v2718 = vmul.f32 %v2684, %v2462
        %v2719 = vmul.f32 %v2684, %v2463
        %v2720 = vmul.f32 %v2689, %v2464
        %v2721 = vmul.f32 %v2689, %v2465
        %v2722 = vmul.f32 %v2694, %v2466
        %v2723 = vmul.f32 %v2694, %v2467
        %v2724 = vmul.f32 %v2699, %v2468
        %v2725 = vmul.f32 %v2699, %v2469
        %v2726 = vmul.f32 %v2704, %v2470
        %v2727 = vmul.f32 %v2704, %v2471
        %v2728 = vmul.f32 %v2709, %v2472
        %v2729 = vmul.f32 %v2709, %v2473
        %v2730 = vmul.f32 %v2714, %v2474
        %v2731 = vmul.f32 %v2714, %v2475
        %2732 = vst [vmem:[%s254] sm:$0xff] %v2716
        %2733 = vst [vmem:[%s254 + $0x8] sm:$0xff] %v2717
        %2734 = vst [vmem:[%s254 + $0x10] sm:$0xff] %v2718
        %2735 = vst [vmem:[%s254 + $0x18] sm:$0xff] %v2719
        %2736 = vst [vmem:[%s254 + $0x20] sm:$0xff] %v2720
        %2737 = vst [vmem:[%s254 + $0x28] sm:$0xff] %v2721
        %2738 = vst [vmem:[%s254 + $0x30] sm:$0xff] %v2722
        %2739 = vst [vmem:[%s254 + $0x38] sm:$0xff] %v2723
        %2740 = vst [vmem:[%s254 + $0x40] sm:$0xff] %v2724
        %2741 = vst [vmem:[%s254 + $0x48] sm:$0xff] %v2725
        %2742 = vst [vmem:[%s254 + $0x50] sm:$0xff] %v2726
        %2743 = vst [vmem:[%s254 + $0x58] sm:$0xff] %v2727
        %2744 = vst [vmem:[%s254 + $0x60] sm:$0xff] %v2728
        %2745 = vst [vmem:[%s254 + $0x68] sm:$0xff] %v2729
        %2746 = vst [vmem:[%s254 + $0x70] sm:$0xff] %v2730
        %2747 = vst [vmem:[%s254 + $0x78] sm:$0xff] %v2731
        %2748 = vset.pattern.permute.xlu0 8
        %2749 = vperm.xlu0 %2748, %v324
        %v2750 = vpop.permute.xlu0 %2749
        %2752 = vset.pattern.permute.xlu0 8
        %2753 = vperm.xlu0 %2752, %v325
        %v2754 = vpop.permute.xlu0 %2753
        %2756 = vset.pattern.permute.xlu0 8
        %2757 = vperm.xlu0 %2756, %v326
        %v2758 = vpop.permute.xlu0 %2757
        %2760 = vset.pattern.permute.xlu0 8
        %2761 = vperm.xlu0 %2760, %v327
        %v2762 = vpop.permute.xlu0 %2761
        %2764 = vset.pattern.permute.xlu0 8
        %2765 = vperm.xlu0 %2764, %v328
        %v2766 = vpop.permute.xlu0 %2765
        %2768 = vset.pattern.permute.xlu0 8
        %2769 = vperm.xlu0 %2768, %v329
        %v2770 = vpop.permute.xlu0 %2769
        %2772 = vset.pattern.permute.xlu0 8
        %2773 = vperm.xlu0 %2772, %v330
        %v2774 = vpop.permute.xlu0 %2773
        %2776 = vset.pattern.permute.xlu0 8
        %2777 = vperm.xlu0 %2776, %v331
        %v2778 = vpop.permute.xlu0 %2777
        %v2780 = vmul.f32 %v2750, %v2380
        %v2781 = vmul.f32 %v2750, %v2381
        %v2782 = vmul.f32 %v2754, %v2382
        %v2783 = vmul.f32 %v2754, %v2383
        %v2784 = vmul.f32 %v2758, %v2384
        %v2785 = vmul.f32 %v2758, %v2385
        %v2786 = vmul.f32 %v2762, %v2386
        %v2787 = vmul.f32 %v2762, %v2387
        %v2788 = vmul.f32 %v2766, %v2388
        %v2789 = vmul.f32 %v2766, %v2389
        %v2790 = vmul.f32 %v2770, %v2390
        %v2791 = vmul.f32 %v2770, %v2391
        %v2792 = vmul.f32 %v2774, %v2392
        %v2793 = vmul.f32 %v2774, %v2393
        %v2794 = vmul.f32 %v2778, %v2394
        %v2795 = vmul.f32 %v2778, %v2395
        %2796 = vset.pattern.permute.xlu0 8
        %2797 = vperm.xlu0 %2796, %v2492
        %v2798 = vpop.permute.xlu0 %2797
        %2800 = vset.pattern.permute.xlu0 8
        %2801 = vperm.xlu0 %2800, %v2493
        %v2802 = vpop.permute.xlu0 %2801
        %2804 = vset.pattern.permute.xlu0 8
        %2805 = vperm.xlu0 %2804, %v2494
        %v2806 = vpop.permute.xlu0 %2805
        %2808 = vset.pattern.permute.xlu0 8
        %2809 = vperm.xlu0 %2808, %v2495
        %v2810 = vpop.permute.xlu0 %2809
        %2812 = vset.pattern.permute.xlu0 8
        %2813 = vperm.xlu0 %2812, %v2496
        %v2814 = vpop.permute.xlu0 %2813
        %2816 = vset.pattern.permute.xlu0 8
        %2817 = vperm.xlu0 %2816, %v2497
        %v2818 = vpop.permute.xlu0 %2817
        %2820 = vset.pattern.permute.xlu0 8
        %2821 = vperm.xlu0 %2820, %v2498
        %v2822 = vpop.permute.xlu0 %2821
        %2824 = vset.pattern.permute.xlu0 8
        %2825 = vperm.xlu0 %2824, %v2499
        %v2826 = vpop.permute.xlu0 %2825
        %v2828 = vmul.f32 %v2798, %v2476
        %v2829 = vmul.f32 %v2798, %v2477
        %v2830 = vmul.f32 %v2802, %v2478
        %v2831 = vmul.f32 %v2802, %v2479
        %v2832 = vmul.f32 %v2806, %v2480
        %v2833 = vmul.f32 %v2806, %v2481
        %v2834 = vmul.f32 %v2810, %v2482
        %v2835 = vmul.f32 %v2810, %v2483
        %v2836 = vmul.f32 %v2814, %v2484
        %v2837 = vmul.f32 %v2814, %v2485
        %v2838 = vmul.f32 %v2818, %v2486
        %v2839 = vmul.f32 %v2818, %v2487
        %v2840 = vmul.f32 %v2822, %v2488
        %v2841 = vmul.f32 %v2822, %v2489
        %v2842 = vmul.f32 %v2826, %v2490
        %v2843 = vmul.f32 %v2826, %v2491
        %v2844 = vadd.f32 %v2780, %v2828
        %v2845 = vadd.f32 %v2781, %v2829
        %v2846 = vadd.f32 %v2782, %v2830
        %v2847 = vadd.f32 %v2783, %v2831
        %v2848 = vadd.f32 %v2784, %v2832
        %v2849 = vadd.f32 %v2785, %v2833
        %v2850 = vadd.f32 %v2786, %v2834
        %v2851 = vadd.f32 %v2787, %v2835
        %v2852 = vadd.f32 %v2788, %v2836
        %v2853 = vadd.f32 %v2789, %v2837
        %v2854 = vadd.f32 %v2790, %v2838
        %v2855 = vadd.f32 %v2791, %v2839
        %v2856 = vadd.f32 %v2792, %v2840
        %v2857 = vadd.f32 %v2793, %v2841
        %v2858 = vadd.f32 %v2794, %v2842
        %v2859 = vadd.f32 %v2795, %v2843
        %s2860 = scalar_lea.vmem %s261, 128 [#allocation6]
        %2861 = vst [vmem:[%s2860] sm:$0xff] %v2844
        %2862 = vst [vmem:[%s2860 + $0x8] sm:$0xff] %v2845
        %2863 = vst [vmem:[%s2860 + $0x10] sm:$0xff] %v2846
        %2864 = vst [vmem:[%s2860 + $0x18] sm:$0xff] %v2847
        %2865 = vst [vmem:[%s2860 + $0x20] sm:$0xff] %v2848
        %2866 = vst [vmem:[%s2860 + $0x28] sm:$0xff] %v2849
        %2867 = vst [vmem:[%s2860 + $0x30] sm:$0xff] %v2850
        %2868 = vst [vmem:[%s2860 + $0x38] sm:$0xff] %v2851
        %2869 = vst [vmem:[%s2860 + $0x40] sm:$0xff] %v2852
        %2870 = vst [vmem:[%s2860 + $0x48] sm:$0xff] %v2853
        %2871 = vst [vmem:[%s2860 + $0x50] sm:$0xff] %v2854
        %2872 = vst [vmem:[%s2860 + $0x58] sm:$0xff] %v2855
        %2873 = vst [vmem:[%s2860 + $0x60] sm:$0xff] %v2856
        %2874 = vst [vmem:[%s2860 + $0x68] sm:$0xff] %v2857
        %2875 = vst [vmem:[%s2860 + $0x70] sm:$0xff] %v2858
        %2876 = vst [vmem:[%s2860 + $0x78] sm:$0xff] %v2859
        %2877 = vset.pattern.permute.xlu0 11
        %2878 = vperm.xlu0 %2877, %v2532
        %v2879 = vpop.permute.xlu0 %2878
        %2881 = vset.pattern.permute.xlu0 11
        %2882 = vperm.xlu0 %2881, %v2533
        %v2883 = vpop.permute.xlu0 %2882
        %2885 = vset.pattern.permute.xlu0 11
        %2886 = vperm.xlu0 %2885, %v2534
        %v2887 = vpop.permute.xlu0 %2886
        %2889 = vset.pattern.permute.xlu0 11
        %2890 = vperm.xlu0 %2889, %v2535
        %v2891 = vpop.permute.xlu0 %2890
        %2893 = vset.pattern.permute.xlu0 11
        %2894 = vperm.xlu0 %2893, %v2536
        %v2895 = vpop.permute.xlu0 %2894
        %2897 = vset.pattern.permute.xlu0 11
        %2898 = vperm.xlu0 %2897, %v2537
        %v2899 = vpop.permute.xlu0 %2898
        %2901 = vset.pattern.permute.xlu0 11
        %2902 = vperm.xlu0 %2901, %v2538
        %v2903 = vpop.permute.xlu0 %2902
        %2905 = vset.pattern.permute.xlu0 11
        %2906 = vperm.xlu0 %2905, %v2539
        %v2907 = vpop.permute.xlu0 %2906
        %v2909 = vmul.f32 %v2879, %v2460
        %v2910 = vmul.f32 %v2879, %v2461
        %v2911 = vmul.f32 %v2883, %v2462
        %v2912 = vmul.f32 %v2883, %v2463
        %v2913 = vmul.f32 %v2887, %v2464
        %v2914 = vmul.f32 %v2887, %v2465
        %v2915 = vmul.f32 %v2891, %v2466
        %v2916 = vmul.f32 %v2891, %v2467
        %v2917 = vmul.f32 %v2895, %v2468
        %v2918 = vmul.f32 %v2895, %v2469
        %v2919 = vmul.f32 %v2899, %v2470
        %v2920 = vmul.f32 %v2899, %v2471
        %v2921 = vmul.f32 %v2903, %v2472
        %v2922 = vmul.f32 %v2903, %v2473
        %v2923 = vmul.f32 %v2907, %v2474
        %v2924 = vmul.f32 %v2907, %v2475
        %s2925 = scalar_lea.vmem %s254, 128 [#allocation5]
        %2926 = vst [vmem:[%s2925] sm:$0xff] %v2909
        %2927 = vst [vmem:[%s2925 + $0x8] sm:$0xff] %v2910
        %2928 = vst [vmem:[%s2925 + $0x10] sm:$0xff] %v2911
        %2929 = vst [vmem:[%s2925 + $0x18] sm:$0xff] %v2912
        %2930 = vst [vmem:[%s2925 + $0x20] sm:$0xff] %v2913
        %2931 = vst [vmem:[%s2925 + $0x28] sm:$0xff] %v2914
        %2932 = vst [vmem:[%s2925 + $0x30] sm:$0xff] %v2915
        %2933 = vst [vmem:[%s2925 + $0x38] sm:$0xff] %v2916
        %2934 = vst [vmem:[%s2925 + $0x40] sm:$0xff] %v2917
        %2935 = vst [vmem:[%s2925 + $0x48] sm:$0xff] %v2918
        %2936 = vst [vmem:[%s2925 + $0x50] sm:$0xff] %v2919
        %2937 = vst [vmem:[%s2925 + $0x58] sm:$0xff] %v2920
        %2938 = vst [vmem:[%s2925 + $0x60] sm:$0xff] %v2921
        %2939 = vst [vmem:[%s2925 + $0x68] sm:$0xff] %v2922
        %2940 = vst [vmem:[%s2925 + $0x70] sm:$0xff] %v2923
        %2941 = vst [vmem:[%s2925 + $0x78] sm:$0xff] %v2924
        %2942 = vset.pattern.permute.xlu0 9
        %2943 = vperm.xlu0 %2942, %v324
        %v2944 = vpop.permute.xlu0 %2943
        %2946 = vset.pattern.permute.xlu0 9
        %2947 = vperm.xlu0 %2946, %v325
        %v2948 = vpop.permute.xlu0 %2947
        %2950 = vset.pattern.permute.xlu0 9
        %2951 = vperm.xlu0 %2950, %v326
        %v2952 = vpop.permute.xlu0 %2951
        %2954 = vset.pattern.permute.xlu0 9
        %2955 = vperm.xlu0 %2954, %v327
        %v2956 = vpop.permute.xlu0 %2955
        %2958 = vset.pattern.permute.xlu0 9
        %2959 = vperm.xlu0 %2958, %v328
        %v2960 = vpop.permute.xlu0 %2959
        %2962 = vset.pattern.permute.xlu0 9
        %2963 = vperm.xlu0 %2962, %v329
        %v2964 = vpop.permute.xlu0 %2963
        %2966 = vset.pattern.permute.xlu0 9
        %2967 = vperm.xlu0 %2966, %v330
        %v2968 = vpop.permute.xlu0 %2967
        %2970 = vset.pattern.permute.xlu0 9
        %2971 = vperm.xlu0 %2970, %v331
        %v2972 = vpop.permute.xlu0 %2971
        %v2974 = vmul.f32 %v2944, %v2380
        %v2975 = vmul.f32 %v2944, %v2381
        %v2976 = vmul.f32 %v2948, %v2382
        %v2977 = vmul.f32 %v2948, %v2383
        %v2978 = vmul.f32 %v2952, %v2384
        %v2979 = vmul.f32 %v2952, %v2385
        %v2980 = vmul.f32 %v2956, %v2386
        %v2981 = vmul.f32 %v2956, %v2387
        %v2982 = vmul.f32 %v2960, %v2388
        %v2983 = vmul.f32 %v2960, %v2389
        %v2984 = vmul.f32 %v2964, %v2390
        %v2985 = vmul.f32 %v2964, %v2391
        %v2986 = vmul.f32 %v2968, %v2392
        %v2987 = vmul.f32 %v2968, %v2393
        %v2988 = vmul.f32 %v2972, %v2394
        %v2989 = vmul.f32 %v2972, %v2395
        %2990 = vset.pattern.permute.xlu0 9
        %2991 = vperm.xlu0 %2990, %v2492
        %v2992 = vpop.permute.xlu0 %2991
        %2994 = vset.pattern.permute.xlu0 9
        %2995 = vperm.xlu0 %2994, %v2493
        %v2996 = vpop.permute.xlu0 %2995
        %2998 = vset.pattern.permute.xlu0 9
        %2999 = vperm.xlu0 %2998, %v2494
        %v3000 = vpop.permute.xlu0 %2999
        %3002 = vset.pattern.permute.xlu0 9
        %3003 = vperm.xlu0 %3002, %v2495
        %v3004 = vpop.permute.xlu0 %3003
        %3006 = vset.pattern.permute.xlu0 9
        %3007 = vperm.xlu0 %3006, %v2496
        %v3008 = vpop.permute.xlu0 %3007
        %3010 = vset.pattern.permute.xlu0 9
        %3011 = vperm.xlu0 %3010, %v2497
        %v3012 = vpop.permute.xlu0 %3011
        %3014 = vset.pattern.permute.xlu0 9
        %3015 = vperm.xlu0 %3014, %v2498
        %v3016 = vpop.permute.xlu0 %3015
        %3018 = vset.pattern.permute.xlu0 9
        %3019 = vperm.xlu0 %3018, %v2499
        %v3020 = vpop.permute.xlu0 %3019
        %v3022 = vmul.f32 %v2992, %v2476
        %v3023 = vmul.f32 %v2992, %v2477
        %v3024 = vmul.f32 %v2996, %v2478
        %v3025 = vmul.f32 %v2996, %v2479
        %v3026 = vmul.f32 %v3000, %v2480
        %v3027 = vmul.f32 %v3000, %v2481
        %v3028 = vmul.f32 %v3004, %v2482
        %v3029 = vmul.f32 %v3004, %v2483
        %v3030 = vmul.f32 %v3008, %v2484
        %v3031 = vmul.f32 %v3008, %v2485
        %v3032 = vmul.f32 %v3012, %v2486
        %v3033 = vmul.f32 %v3012, %v2487
        %v3034 = vmul.f32 %v3016, %v2488
        %v3035 = vmul.f32 %v3016, %v2489
        %v3036 = vmul.f32 %v3020, %v2490
        %v3037 = vmul.f32 %v3020, %v2491
        %v3038 = vadd.f32 %v2974, %v3022
        %v3039 = vadd.f32 %v2975, %v3023
        %v3040 = vadd.f32 %v2976, %v3024
        %v3041 = vadd.f32 %v2977, %v3025
        %v3042 = vadd.f32 %v2978, %v3026
        %v3043 = vadd.f32 %v2979, %v3027
        %v3044 = vadd.f32 %v2980, %v3028
        %v3045 = vadd.f32 %v2981, %v3029
        %v3046 = vadd.f32 %v2982, %v3030
        %v3047 = vadd.f32 %v2983, %v3031
        %v3048 = vadd.f32 %v2984, %v3032
        %v3049 = vadd.f32 %v2985, %v3033
        %v3050 = vadd.f32 %v2986, %v3034
        %v3051 = vadd.f32 %v2987, %v3035
        %v3052 = vadd.f32 %v2988, %v3036
        %v3053 = vadd.f32 %v2989, %v3037
        %s3054 = scalar_lea.vmem %s261, 256 [#allocation6]
        %3055 = vst [vmem:[%s3054] sm:$0xff] %v3038
        %3056 = vst [vmem:[%s3054 + $0x8] sm:$0xff] %v3039
        %3057 = vst [vmem:[%s3054 + $0x10] sm:$0xff] %v3040
        %3058 = vst [vmem:[%s3054 + $0x18] sm:$0xff] %v3041
        %3059 = vst [vmem:[%s3054 + $0x20] sm:$0xff] %v3042
        %3060 = vst [vmem:[%s3054 + $0x28] sm:$0xff] %v3043
        %3061 = vst [vmem:[%s3054 + $0x30] sm:$0xff] %v3044
        %3062 = vst [vmem:[%s3054 + $0x38] sm:$0xff] %v3045
        %3063 = vst [vmem:[%s3054 + $0x40] sm:$0xff] %v3046
        %3064 = vst [vmem:[%s3054 + $0x48] sm:$0xff] %v3047
        %3065 = vst [vmem:[%s3054 + $0x50] sm:$0xff] %v3048
        %3066 = vst [vmem:[%s3054 + $0x58] sm:$0xff] %v3049
        %3067 = vst [vmem:[%s3054 + $0x60] sm:$0xff] %v3050
        %3068 = vst [vmem:[%s3054 + $0x68] sm:$0xff] %v3051
        %3069 = vst [vmem:[%s3054 + $0x70] sm:$0xff] %v3052
        %3070 = vst [vmem:[%s3054 + $0x78] sm:$0xff] %v3053
        %3071 = vset.pattern.permute.xlu0 12
        %3072 = vperm.xlu0 %3071, %v2532
        %v3073 = vpop.permute.xlu0 %3072
        %3075 = vset.pattern.permute.xlu0 12
        %3076 = vperm.xlu0 %3075, %v2533
        %v3077 = vpop.permute.xlu0 %3076
        %3079 = vset.pattern.permute.xlu0 12
        %3080 = vperm.xlu0 %3079, %v2534
        %v3081 = vpop.permute.xlu0 %3080
        %3083 = vset.pattern.permute.xlu0 12
        %3084 = vperm.xlu0 %3083, %v2535
        %v3085 = vpop.permute.xlu0 %3084
        %3087 = vset.pattern.permute.xlu0 12
        %3088 = vperm.xlu0 %3087, %v2536
        %v3089 = vpop.permute.xlu0 %3088
        %3091 = vset.pattern.permute.xlu0 12
        %3092 = vperm.xlu0 %3091, %v2537
        %v3093 = vpop.permute.xlu0 %3092
        %3095 = vset.pattern.permute.xlu0 12
        %3096 = vperm.xlu0 %3095, %v2538
        %v3097 = vpop.permute.xlu0 %3096
        %3099 = vset.pattern.permute.xlu0 12
        %3100 = vperm.xlu0 %3099, %v2539
        %v3101 = vpop.permute.xlu0 %3100
        %v3103 = vmul.f32 %v3073, %v2460
        %v3104 = vmul.f32 %v3073, %v2461
        %v3105 = vmul.f32 %v3077, %v2462
        %v3106 = vmul.f32 %v3077, %v2463
        %v3107 = vmul.f32 %v3081, %v2464
        %v3108 = vmul.f32 %v3081, %v2465
        %v3109 = vmul.f32 %v3085, %v2466
        %v3110 = vmul.f32 %v3085, %v2467
        %v3111 = vmul.f32 %v3089, %v2468
        %v3112 = vmul.f32 %v3089, %v2469
        %v3113 = vmul.f32 %v3093, %v2470
        %v3114 = vmul.f32 %v3093, %v2471
        %v3115 = vmul.f32 %v3097, %v2472
        %v3116 = vmul.f32 %v3097, %v2473
        %v3117 = vmul.f32 %v3101, %v2474
        %v3118 = vmul.f32 %v3101, %v2475
        %s3119 = scalar_lea.vmem %s254, 256 [#allocation5]
        %3120 = vst [vmem:[%s3119] sm:$0xff] %v3103
        %3121 = vst [vmem:[%s3119 + $0x8] sm:$0xff] %v3104
        %3122 = vst [vmem:[%s3119 + $0x10] sm:$0xff] %v3105
        %3123 = vst [vmem:[%s3119 + $0x18] sm:$0xff] %v3106
        %3124 = vst [vmem:[%s3119 + $0x20] sm:$0xff] %v3107
        %3125 = vst [vmem:[%s3119 + $0x28] sm:$0xff] %v3108
        %3126 = vst [vmem:[%s3119 + $0x30] sm:$0xff] %v3109
        %3127 = vst [vmem:[%s3119 + $0x38] sm:$0xff] %v3110
        %3128 = vst [vmem:[%s3119 + $0x40] sm:$0xff] %v3111
        %3129 = vst [vmem:[%s3119 + $0x48] sm:$0xff] %v3112
        %3130 = vst [vmem:[%s3119 + $0x50] sm:$0xff] %v3113
        %3131 = vst [vmem:[%s3119 + $0x58] sm:$0xff] %v3114
        %3132 = vst [vmem:[%s3119 + $0x60] sm:$0xff] %v3115
        %3133 = vst [vmem:[%s3119 + $0x68] sm:$0xff] %v3116
        %3134 = vst [vmem:[%s3119 + $0x70] sm:$0xff] %v3117
        %3135 = vst [vmem:[%s3119 + $0x78] sm:$0xff] %v3118
        %s3136 = sand.u32 %s100, 1
        %s3137 = scalar_lea.sflag [#allocation4], %s3136
        %s3138 = sand.u32 %s100, 1
        %s3139 = smul.addr %s3138, 384
        %s3140 = scalar_lea.vmem [#allocation5], %s3139
        %s3141 = sand.u32 %s128, 1
        %s3142 = scalar_lea.sflag [#allocation7], %s3141
        %s3143 = sand.u32 %s128, 1
        %s3144 = smul.addr %s3143, 384
        %s3145 = scalar_lea.vmem [#allocation6], %s3144
        // Predicated region
        $region33: #{tpu_custom_call.1} parent=27 // pred_check
          %p3146 = pneg %p110
        $region34: #{tpu_custom_call.1} parent=27 // pred_check_branch
          %3148 = sbr.rel (%p3146) target = $region36
        $region35: #{tpu_custom_call.1} parent=27 // pred_region
          #allocation11 [shape = 'u32[6]{0}', space=smem, size = 0x18, scoped, tag = 'DMA stride descriptor']
          %s3149 = smul.u32 8, %s28
          %s3150 = smul.u32 2, %s29
          %s3152 = ssub.s32 6144, 6144
          %3153 = vsyncadd %s3137, %s3152
          %s3154 = smul.addr %s3149, 2
          %s3155 = sadd.s32 %s3150, %s3154
          %s3156 = smul.addr %s3155, 128
          %s3157 = scalar_lea.hbm %s2, %s3156
          %s3159 = sshll.u32 1, 14
          %s3160 = sxor.u32 4294967295, %s3159
          %s3163 = sshll.u32 7, 18
          %s3164 = sxor.u32 4294967295, %s3163
          %s3165 = sand.u32 0, %s3164
          %s3167 = sor.u32 %s3165, 0
          %s3169 = sshll.u32 3, 24
          %s3170 = sxor.u32 4294967295, %s3169
          %s3171 = sand.u32 %s3167, %s3170
          %s3173 = sor.u32 %s3171, 0
          %s3174 = sshll.u32 %s3140, 4
          %s3175 = int_to_ptr.vmem [resolvable:$true] %s3174
          %3181 = sst [smem:[#allocation11]] 2048
          %s3182 = scalar_lea.smem [#allocation11], 1
          %3183 = sst [smem:[%s3182]] 16384
          %s3184 = scalar_lea.smem [#allocation11], 2
          %3185 = sst [smem:[%s3184]] 8
          %s3186 = scalar_lea.smem [#allocation11], 3
          %3187 = sst [smem:[%s3186]] 256
          %s3188 = scalar_lea.smem [#allocation11], 4
          %3189 = sst [smem:[%s3188]] 256
          %s3190 = scalar_lea.smem [#allocation11], 5
          %3191 = sst [smem:[%s3190]] 16
          %3193 = dma.general %s3175, 6144, %s3157, %s3137, [#allocation10], [#allocation11], %s3173, 0
        $region36: #{tpu_custom_call.1} parent=27 // pred_fallthru
          _
        // Predicated region
        $region37: #{tpu_custom_call.1} parent=27 // pred_check
          %p3194 = pneg %p138
        $region38: #{tpu_custom_call.1} parent=27 // pred_check_branch
          %3196 = sbr.rel (%p3194) target = $region40
        $region39: #{tpu_custom_call.1} parent=27 // pred_region
          #allocation13 [shape = 'u32[6]{0}', space=smem, size = 0x18, scoped, tag = 'DMA stride descriptor']
          %s3197 = smul.u32 8, %s28
          %s3198 = smul.u32 2, %s29
          %s3200 = ssub.s32 6144, 6144
          %3201 = vsyncadd %s3142, %s3200
          %s3202 = smul.addr %s3197, 2
          %s3203 = sadd.s32 %s3198, %s3202
          %s3204 = smul.addr %s3203, 128
          %s3205 = scalar_lea.hbm %s3, %s3204
          %s3207 = sshll.u32 1, 14
          %s3208 = sxor.u32 4294967295, %s3207
          %s3211 = sshll.u32 7, 18
          %s3212 = sxor.u32 4294967295, %s3211
          %s3213 = sand.u32 0, %s3212
          %s3215 = sor.u32 %s3213, 0
          %s3217 = sshll.u32 3, 24
          %s3218 = sxor.u32 4294967295, %s3217
          %s3219 = sand.u32 %s3215, %s3218
          %s3221 = sor.u32 %s3219, 0
          %s3222 = sshll.u32 %s3145, 4
          %s3223 = int_to_ptr.vmem [resolvable:$true] %s3222
          %3229 = sst [smem:[#allocation13]] 2048
          %s3230 = scalar_lea.smem [#allocation13], 1
          %3231 = sst [smem:[%s3230]] 16384
          %s3232 = scalar_lea.smem [#allocation13], 2
          %3233 = sst [smem:[%s3232]] 8
          %s3234 = scalar_lea.smem [#allocation13], 3
          %3235 = sst [smem:[%s3234]] 256
          %s3236 = scalar_lea.smem [#allocation13], 4
          %3237 = sst [smem:[%s3236]] 256
          %s3238 = scalar_lea.smem [#allocation13], 5
          %3239 = sst [smem:[%s3238]] 16
          %3241 = dma.general %s3223, 6144, %s3205, %s3142, [#allocation12], [#allocation13], %s3221, 0
        $region40: #{tpu_custom_call.1} parent=27 // pred_fallthru
          _
      $region28: #{tpu_custom_call.1} parent=5 // pred_fallthru
        _
      %p3242 = scmp.le.s32.totalorder 2, %s19
      // Predicated region
      $region41: #{tpu_custom_call.1} parent=5 // pred_check
        %p3243 = pneg %p3242
      $region42: #{tpu_custom_call.1} parent=5 // pred_check_branch
        %3245 = sbr.rel (%p3243) target = $region44
      $region43: #{tpu_custom_call.1} parent=5 // pred_region
        %s3246 = ssub.s32 %s19, 2
        // Predicated region
        $region45: #{tpu_custom_call.1} parent=43 // pred_check
          %p3247 = pneg %p116
        $region46: #{tpu_custom_call.1} parent=43 // pred_check_branch
          %3249 = sbr.rel (%p3247) target = $region48
        $region47: #{tpu_custom_call.1} parent=43 // pred_region
          %s3250 = sand.u32 %s101, 1
          %s3251 = scalar_lea.sflag [#allocation4], %s3250
          %s3252 = sand.u32 %s101, 1
          %s3253 = smul.addr %s3252, 384
          %s3254 = scalar_lea.vmem [#allocation5], %s3253
          %3255 = dma.done %s3251, 6144
        $region48: #{tpu_custom_call.1} parent=43 // pred_fallthru
          _
        // Predicated region
        $region49: #{tpu_custom_call.1} parent=43 // pred_check
          %p3256 = pneg %p144
        $region50: #{tpu_custom_call.1} parent=43 // pred_check_branch
          %3258 = sbr.rel (%p3256) target = $region52
        $region51: #{tpu_custom_call.1} parent=43 // pred_region
          %s3259 = sand.u32 %s129, 1
          %s3260 = scalar_lea.sflag [#allocation7], %s3259
          %s3261 = sand.u32 %s129, 1
          %s3262 = smul.addr %s3261, 384
          %s3263 = scalar_lea.vmem [#allocation6], %s3262
          %3264 = dma.done %s3260, 6144
        $region52: #{tpu_custom_call.1} parent=43 // pred_fallthru
          _
      $region44: #{tpu_custom_call.1} parent=5 // pred_fallthru
        _
    $region6: #{tpu_custom_call.1} parent=1 // loop_footer
      %s23 = sadd.s32 1, %s19
    $region7: #{tpu_custom_call.1} parent=1 // loop_footer_branch
      %18 = sbr.rel target = $region3
    $region8: #{tpu_custom_call.1} parent=1 // loop_exit
      _
    %3265 = vsyncpa [#allocation3], 1
    %s3266 = scalar_lea.sflag [#allocation3], 1
    %3267 = vsyncpa %s3266, 1
    %3268 = vsyncpa [#allocation4], 1
    %s3269 = scalar_lea.sflag [#allocation4], 1
    %3270 = vsyncpa %s3269, 1
    %3271 = vsyncpa [#allocation7], 1
    %s3272 = scalar_lea.sflag [#allocation7], 1
    %3273 = vsyncpa %s3272, 1

</llo_original>
